<compile_context>
chip_gen: v5e
topology: v5e:2x2
jax: 0.10.0
libtpu: 0.0.40
codegen_flags: <defaults>
</compile_context>

<pallas_src>
import random

import jax
import jax.numpy as jnp
import numpy as np
from jax import lax
from jax.experimental import pallas as pl
from jax.experimental.pallas import tpu as pltpu


def _round_up(x, m):
    return ((x + m - 1) // m) * m


# ----------------------------------------------------------------------------
# Pure-JAX GRU cell (PyTorch nn.GRU gate order [r, z, n]) -- reference only.
# ----------------------------------------------------------------------------
def _gru_cell(x, h, w_ih, w_hh, b_ih, b_hh):
    H = h.shape[-1]
    gi = jnp.dot(x, w_ih, preferred_element_type=jnp.float32) + b_ih
    gh = jnp.dot(h, w_hh, preferred_element_type=jnp.float32) + b_hh
    r = jax.nn.sigmoid(gi[:, 0 * H:1 * H] + gh[:, 0 * H:1 * H])
    z = jax.nn.sigmoid(gi[:, 1 * H:2 * H] + gh[:, 1 * H:2 * H])
    n = jnp.tanh(gi[:, 2 * H:3 * H] + r * gh[:, 2 * H:3 * H])
    return (1.0 - z) * n + z * h


def _softmax_last(x):
    """Softmax over the last dim; reciprocal keeps the divide off the VALU."""
    m = jnp.max(x, axis=-1, keepdims=True)
    e = jnp.exp(x - m)
    return e * pl.reciprocal(jnp.sum(e, axis=-1, keepdims=True), approx=False)


# ----------------------------------------------------------------------------
# Fused forward kernel: encoder GRU over the whole context + all decoder steps
# in a single invocation per batch tile. All state (h, decoder one-hot, the
# per-timestep one-hot context rows) stays on-core; all weights stay resident
# in VMEM; the only per-token HBM traffic is the int32 event id (4 B).
# ----------------------------------------------------------------------------
def _make_deepcase_kernel(seq, bb, V, H, A, O, steps):
    H3 = 3 * H

    def kernel(teach_ref,                    # SMEM (steps,) int32 (scalar prefetch)
               x_ref,                        # (bb, seq) int32 event ids
               wih_e_ref, bih_e_ref, whh_e_ref, bhh_e_ref,
               wie_d_ref, bih_d_ref, whh_d_ref, bhh_d_ref,
               wattn_ref, battn_ref, wout_ref, bout_ref,
               yoh_ref,                      # (steps, bb, V) teacher one-hots
               conf_ref):                    # (steps, bb, O) output
        f32 = jnp.float32

        x = x_ref[...]                                         # (bb, seq) int32
        iota_v = lax.broadcasted_iota(jnp.int32, (bb, V), 1)   # hoisted
        iota_o = lax.broadcasted_iota(jnp.int32, (bb, O), 1)   # hoisted (review)

        # Per-timestep one-hot context rows, built once from the int32 ids.
        # Reused by the encoder input projection AND every decoder step.
        oh = [(x[:, t:t + 1] == iota_v).astype(f32) for t in range(seq)]

        # ---------------- encoder GRU over the context ----------------
        w_ih_e = wih_e_ref[...]
        b_ih_e = bih_e_ref[...]
        w_hh_e = whh_e_ref[...]
        b_hh_e = bhh_e_ref[...]

        h = jnp.zeros((bb, H), f32)
        for t in range(seq):
            # one-hot row gather via a (bb,V)@(V,3H) matmul (V = one MXU tile)
            gi = jnp.dot(oh[t], w_ih_e, preferred_element_type=f32) + b_ih_e
            gh = jnp.dot(h, w_hh_e, preferred_element_type=f32) + b_hh_e
            r = jax.nn.sigmoid(gi[:, 0:H] + gh[:, 0:H])
            z = jax.nn.sigmoid(gi[:, H:2 * H] + gh[:, H:2 * H])
            n = jnp.tanh(gi[:, 2 * H:H3] + r * gh[:, 2 * H:H3])
            h = (1.0 - z) * n + z * h

        # ---------------- fused decoder steps ----------------
        w_ie = wie_d_ref[...]          # (V, 3H) = embedding @ W_ih_dec (folded)
        b_ih_d = bih_d_ref[...]
        w_hh_d = whh_d_ref[...]
        b_hh_d = bhh_d_ref[...]
        w_attn = wattn_ref[...]
        b_attn = battn_ref[...]
        w_out = wout_ref[...]
        b_out = bout_ref[...]

        dec_oh = (iota_v == 0).astype(f32)     # decoder_input = zeros

        for step in range(steps):
            # GRU step: the embedding lookup is folded into W_ie, so gi is a
            # single (bb,V)@(V,3H) matmul -- no per-step embedding matmul, no
            # block-diagonal 2x-FLOP weight, no lane concatenate.
            gi = jnp.dot(dec_oh, w_ie, preferred_element_type=f32) + b_ih_d
            gh = jnp.dot(h, w_hh_d, preferred_element_type=f32) + b_hh_d
            r = jax.nn.sigmoid(gi[:, 0:H] + gh[:, 0:H])
            z = jax.nn.sigmoid(gi[:, H:2 * H] + gh[:, H:2 * H])
            n = jnp.tanh(gi[:, 2 * H:H3] + r * gh[:, 2 * H:H3])
            h = (1.0 - z) * n + z * h

            # attention over the context positions (A == seq)
            a = _softmax_last(
                jnp.dot(h, w_attn, preferred_element_type=f32) + b_attn)

            # bmm(attention, onehot(X)) == sum_t a[:, t] * onehot(X[t]):
            # a sparse (bb, V) context, then one (bb,V)@(V,O) matmul.
            ctx = a[:, 0:1] * oh[0]
            for t in range(1, seq):
                ctx = ctx + a[:, t:t + 1] * oh[t]
            logits = jnp.dot(ctx, w_out, preferred_element_type=f32) + b_out
            prob = _softmax_last(logits)
            conf_ref[step] = prob

            if step + 1 < steps:
                # Greedy argmax feedback (first index on ties == argmax).
                m = jnp.max(prob, axis=-1, keepdims=True)
                idx = jnp.min(jnp.where(prob >= m, iota_o, O), axis=-1,
                              keepdims=True)                       # (bb, 1)
                arg_oh = (iota_v == idx).astype(f32)
                # Teacher-forcing decision is runtime data (SMEM scalar), so
                # one compiled artifact covers every host RNG draw pattern.
                use_teacher = teach_ref[step] > 0
                dec_oh = jnp.where(use_teacher, yoh_ref[step], arg_oh)

    return kernel


def _deepcase_pallas(teach, x_bm, w_ih_e, b_ih_e, w_hh_e, b_hh_e,
                     w_ie, b_ih_d, w_hh_d, b_hh_d, w_attn, b_attn,
                     w_out, b_out, y_oh, *, steps, bb):
    Bp, seq = x_bm.shape
    V, H3 = w_ih_e.shape
    H = H3 // 3
    A = w_attn.shape[1]
    O = w_out.shape[1]
    grid = (Bp // bb,)

    kernel = _make_deepcase_kernel(seq, bb, V, H, A, O, steps)
    return pl.pallas_call(
        kernel,
        out_shape=jax.ShapeDtypeStruct((steps, Bp, O), jnp.float32),
        grid_spec=pltpu.PrefetchScalarGridSpec(
            num_scalar_prefetch=1,                      # teacher flags -> SMEM
            grid=grid,
            in_specs=[
                pl.BlockSpec((bb, seq), lambda i, tf: (i, 0)),          # X ids
                pl.BlockSpec((V, H3), lambda i, tf: (0, 0)),            # w_ih_enc
                pl.BlockSpec((1, H3), lambda i, tf: (0, 0)),            # b_ih_enc
                pl.BlockSpec((H, H3), lambda i, tf: (0, 0)),            # w_hh_enc
                pl.BlockSpec((1, H3), lambda i, tf: (0, 0)),            # b_hh_enc
                pl.BlockSpec((V, H3), lambda i, tf: (0, 0)),            # w_ie_dec
                pl.BlockSpec((1, H3), lambda i, tf: (0, 0)),            # b_ih_dec
                pl.BlockSpec((H, H3), lambda i, tf: (0, 0)),            # w_hh_dec
                pl.BlockSpec((1, H3), lambda i, tf: (0, 0)),            # b_hh_dec
                pl.BlockSpec((H, A), lambda i, tf: (0, 0)),             # w_attn
                pl.BlockSpec((1, A), lambda i, tf: (0, 0)),             # b_attn
                pl.BlockSpec((V, O), lambda i, tf: (0, 0)),             # w_out
                pl.BlockSpec((1, O), lambda i, tf: (0, 0)),             # b_out
                pl.BlockSpec((steps, bb, V), lambda i, tf: (0, i, 0)),  # y 1-hot
            ],
            out_specs=pl.BlockSpec((steps, bb, O), lambda i, tf: (0, i, 0)),
        ),
        compiler_params=pltpu.CompilerParams(
            dimension_semantics=("parallel",)),
    )(teach, x_bm, w_ih_e, b_ih_e, w_hh_e, b_hh_e, w_ie, b_ih_d, w_hh_d,
      b_hh_d, w_attn, b_attn, w_out, b_out, y_oh)


# ----------------------------------------------------------------------------
# Parameters (deterministic, shapes per DeepCase.__init__). No non-array leaves
# so the params pytree is jit-safe.
# ----------------------------------------------------------------------------
def init_params(key, input_size, output_size, hidden_size, max_length):
    V, O, H, A = input_size, output_size, hidden_size, max_length
    ks = jax.random.split(key, 13)
    u = lambda k, shape, s: jax.random.uniform(k, shape, jnp.float32, -s, s)
    s = 1.0 / np.sqrt(H)
    sv = 1.0 / np.sqrt(V)
    return {
        "embedding": u(ks[0], (V, H), 1.0),          # nn.Embedding(V, H)
        # encoder GRU (input = one-hot V)
        "w_ih_enc": u(ks[1], (V, 3 * H), s),
        "w_hh_enc": u(ks[2], (H, 3 * H), s),
        "b_ih_enc": u(ks[3], (1, 3 * H), s),
        "b_hh_enc": u(ks[4], (1, 3 * H), s),
        # decoder-attention GRU (input = embedding dim H, hidden = H)
        "w_ih_dec": u(ks[5], (H, 3 * H), s),
        "w_hh_dec": u(ks[6], (H, 3 * H), s),
        "b_ih_dec": u(ks[7], (1, 3 * H), s),
        "b_hh_dec": u(ks[8], (1, 3 * H), s),
        # attn Linear(H -> max_length)
        "w_attn": u(ks[9], (H, A), s),
        "b_attn": u(ks[10], (1, A), s),
        # event decoder Linear(V -> O)
        "w_out": u(ks[11], (V, O), sv),
        "b_out": u(ks[12], (1, O), sv),
    }


def validate_events(X, input_size):
    """Range check, kept OFF the hot path so the forward stays jittable."""
    x_max = int(np.max(np.asarray(X)))
    if x_max >= input_size:
        raise ValueError(
            "Expected {} different input events, but received input event '{}'"
            " not in expected range 0-{}.".format(input_size, x_max,
                                                  input_size - 1))


# ----------------------------------------------------------------------------
# Jitted forward implementation (teacher flags are runtime data).
# ----------------------------------------------------------------------------
def _forward_impl(params, X, y_ids, teach, steps):
    V, H = params["embedding"].shape
    O = params["w_out"].shape[1]
    seq_len, batch = X.shape

    # Batch tiling: fill MXU rows first (pad to a multiple of 8, one big tile
    # up to 512 rows); only split into "parallel" grid tiles (>=256 rows each)
    # once the batch is large enough that a second tile is also full.
    Bp8 = _round_up(batch, 8)
    if Bp8 <= 512:
        bb, Bp = Bp8, Bp8
    else:
        bb = 256
        Bp = _round_up(Bp8, bb)

    x_bm = jnp.pad(jnp.transpose(X).astype(jnp.int32),
                   ((0, Bp - batch), (0, 0)))                   # (Bp, seq)
    y_oh = jax.nn.one_hot(jnp.transpose(y_ids), V, dtype=jnp.float32)
    y_oh = jnp.pad(y_oh, ((0, 0), (0, Bp - batch), (0, 0)))     # (steps, Bp, V)

    # Fold the embedding lookup into the decoder GRU input weights:
    #   onehot(id) @ (embedding @ W_ih_dec) == embedding[id] @ W_ih_dec.
    w_ie = jnp.dot(params["embedding"], params["w_ih_dec"],
                   preferred_element_type=jnp.float32)          # (V, 3H)

    conf = _deepcase_pallas(
        teach.astype(jnp.int32), x_bm,
        params["w_ih_enc"], params["b_ih_enc"],
        params["w_hh_enc"], params["b_hh_enc"],
        w_ie, params["b_ih_dec"], params["w_hh_dec"], params["b_hh_dec"],
        params["w_attn"], params["b_attn"],
        params["w_out"], params["b_out"], y_oh,
        steps=steps, bb=bb)                                     # (steps, Bp, O)

    logit = jnp.transpose(conf[:, :batch, :], (1, 0, 2))        # (batch, steps, O)
    if steps == 1:
        logit = logit[:, 0, :]                                  # torch.squeeze(dim=1)
    return logit


_deepcase_forward_jit = jax.jit(_forward_impl, static_argnames=("steps",))


def deepcase_forward(params, X, y=None, steps=1, teach_ratio=0.5):
    """DeepCase forward. X: (seq_len, batch) int32 event ids."""
    A = params["w_attn"].shape[1]
    seq_len, batch = X.shape
    if A != seq_len:
        raise ValueError(
            "attention_size (max_length=%d) must equal the context length %d"
            % (A, seq_len))
    # NOTE: event-id range validation lives in validate_events() (outside the
    # hot path) so there is no per-call device->host sync here.

    # Host-side teacher-forcing draws happen PER CALL (wrapper is not jitted),
    # matching the module's random.random(); the draws reach the kernel as a
    # runtime SMEM array, so there is one compiled artifact per (steps, shape).
    flags = [1 if (y is not None and random.random() <= teach_ratio) else 0
             for _ in range(steps)]
    if y is not None:
        y_ids = jnp.asarray(y).astype(jnp.int32).reshape(batch, -1)[:, :steps]
    else:
        y_ids = jnp.zeros((batch, steps), jnp.int32)
    teach = jnp.asarray(np.asarray(flags, dtype=np.int32))
    return _deepcase_forward_jit(params, X, y_ids, teach, steps=steps)


# ----------------------------------------------------------------------------
# Pure-JAX reference (no Pallas, original one-hot formulation).
# ----------------------------------------------------------------------------
def deepcase_forward_ref(params, X, y_ids=None, teach_flags=None, steps=1):
    V, H = params["embedding"].shape
    seq_len, batch = X.shape
    xoh_sb = jax.nn.one_hot(X, V, dtype=jnp.float32)            # (seq, batch, V)
    xoh_bs = jnp.transpose(xoh_sb, (1, 0, 2))                   # (batch, seq, V)

    h = jnp.zeros((batch, H), jnp.float32)
    for t in range(seq_len):
        h = _gru_cell(xoh_sb[t], h, params["w_ih_enc"], params["w_hh_enc"],
                      params["b_ih_enc"], params["b_hh_enc"])

    decoder_input = jnp.zeros((batch,), dtype=jnp.int32)
    confidence = []
    for step in range(steps):
        emb = jnp.take(params["embedding"], decoder_input, axis=0)
        h = _gru_cell(emb, h, params["w_ih_dec"], params["w_hh_dec"],
                      params["b_ih_dec"], params["b_hh_dec"])
        a = jax.nn.softmax(jnp.dot(h, params["w_attn"]) + params["b_attn"],
                           axis=-1)
        ctx = jnp.einsum("ba,bav->bv", a, xoh_bs)
        prob = jax.nn.softmax(jnp.dot(ctx, params["w_out"]) + params["b_out"],
                              axis=-1)
        confidence.append(prob)
        if teach_flags is not None and teach_flags[step]:
            decoder_input = y_ids[:, step].astype(jnp.int32)
        else:
            decoder_input = jnp.argmax(prob, axis=1).astype(jnp.int32)

    logit = jnp.stack(confidence, axis=1)
    if logit.shape[1] == 1:
        logit = jnp.squeeze(logit, axis=1)
    return logit


if __name__ == "__main__":
    # Small config consistent with the module: hidden_size=128 (module default,
    # lane-aligned gates), 32 events, context length == max_length = 8.
    input_size = 32
    output_size = 32
    hidden_size = 128
    max_length = 8
    batch = 16

    key = jax.random.PRNGKey(0)
    k_params, k_x, k_y, k_x2 = jax.random.split(key, 4)
    params = init_params(k_params, input_size, output_size, hidden_size,
                         max_length)

    # X layout: (seq_len, batch) int32 event IDs.
    X = jax.random.randint(k_x, (max_length, batch), 0, input_size,
                           dtype=jnp.int32)
    validate_events(X, input_size)       # off the hot path (no sync in forward)

    # steps=1 (module default): output (batch, O)
    out1 = jax.block_until_ready(deepcase_forward(params, X, steps=1))
    ref1 = deepcase_forward_ref(params, X, steps=1)
    np.testing.assert_allclose(np.asarray(out1), np.asarray(ref1),
                               rtol=1e-4, atol=1e-5)
    assert out1.shape == (batch, output_size)

    # steps=3: fused decoder loop with in-kernel argmax feedback.
    out3 = jax.block_until_ready(deepcase_forward(params, X, steps=3))
    ref3 = deepcase_forward_ref(params, X, steps=3)
    np.testing.assert_allclose(np.asarray(out3), np.asarray(ref3),
                               rtol=1e-4, atol=1e-5)
    assert out3.shape == (batch, 3, output_size)

    # Teacher-forcing select path (runtime SMEM flags): call the jitted impl
    # directly with a fixed flag pattern (reuses the steps=3 compiled kernel).
    y_ids = jax.random.randint(k_y, (batch, 3), 0, input_size, dtype=jnp.int32)
    flags = jnp.array([1, 0, 1], dtype=jnp.int32)
    out_tf = jax.block_until_ready(
        _deepcase_forward_jit(params, X, y_ids, flags, steps=3))
    ref_tf = deepcase_forward_ref(params, X, y_ids=y_ids, teach_flags=(1, 0, 1),
                                  steps=3)
    np.testing.assert_allclose(np.asarray(out_tf), np.asarray(ref_tf),
                               rtol=1e-4, atol=1e-5)

    # Non-multiple-of-8 batch exercises the padding path.
    Xp = jax.random.randint(k_x2, (max_length, 13), 0, input_size,
                            dtype=jnp.int32)
    validate_events(Xp, input_size)
    outp = jax.block_until_ready(deepcase_forward(params, Xp, steps=1))
    refp = deepcase_forward_ref(params, Xp, steps=1)
    np.testing.assert_allclose(np.asarray(outp), np.asarray(refp),
                               rtol=1e-4, atol=1e-5)

    print("KERNEL_OK")
</pallas_src>

<mosaic_0001>
module attributes {stable_mosaic.version = 11 : i64} {
  func.func @kernel(%arg0: i32, %arg1: memref<1xi32, #tpu.memory_space<smem>>, %arg2: memref<16x8xi32, #tpu.memory_space<vmem>>, %arg3: memref<32x384xf32, #tpu.memory_space<vmem>>, %arg4: memref<1x384xf32, #tpu.memory_space<vmem>>, %arg5: memref<128x384xf32, #tpu.memory_space<vmem>>, %arg6: memref<1x384xf32, #tpu.memory_space<vmem>>, %arg7: memref<32x384xf32, #tpu.memory_space<vmem>>, %arg8: memref<1x384xf32, #tpu.memory_space<vmem>>, %arg9: memref<128x384xf32, #tpu.memory_space<vmem>>, %arg10: memref<1x384xf32, #tpu.memory_space<vmem>>, %arg11: memref<128x8xf32, #tpu.memory_space<vmem>>, %arg12: memref<1x8xf32, #tpu.memory_space<vmem>>, %arg13: memref<32x32xf32, #tpu.memory_space<vmem>>, %arg14: memref<1x32xf32, #tpu.memory_space<vmem>>, %arg15: memref<1x16x32xf32, #tpu.memory_space<vmem>>, %arg16: memref<1x16x32xf32, #tpu.memory_space<vmem>>) attributes {dimension_semantics = [#tpu.dimension_semantics<parallel>], iteration_bounds = array<i64: 1>, scalar_prefetch = 1 : i64, scratch_operands = 0 : i64, tpu.core_type = #tpu.core_type<tc>, window_params = [{transform_indices = @transform_0, window_bounds = array<i64: 16, 8>}, {pipeline_mode = #tpu.pipeline_mode<synchronous>, transform_indices = @transform_1, window_bounds = array<i64: 32, 384>}, {pipeline_mode = #tpu.pipeline_mode<synchronous>, transform_indices = @transform_2, window_bounds = array<i64: 1, 384>}, {pipeline_mode = #tpu.pipeline_mode<synchronous>, transform_indices = @transform_3, window_bounds = array<i64: 128, 384>}, {pipeline_mode = #tpu.pipeline_mode<synchronous>, transform_indices = @transform_4, window_bounds = array<i64: 1, 384>}, {pipeline_mode = #tpu.pipeline_mode<synchronous>, transform_indices = @transform_5, window_bounds = array<i64: 32, 384>}, {pipeline_mode = #tpu.pipeline_mode<synchronous>, transform_indices = @transform_6, window_bounds = array<i64: 1, 384>}, {pipeline_mode = #tpu.pipeline_mode<synchronous>, transform_indices = @transform_7, window_bounds = array<i64: 128, 384>}, {pipeline_mode = #tpu.pipeline_mode<synchronous>, transform_indices = @transform_8, window_bounds = array<i64: 1, 384>}, {pipeline_mode = #tpu.pipeline_mode<synchronous>, transform_indices = @transform_9, window_bounds = array<i64: 128, 8>}, {pipeline_mode = #tpu.pipeline_mode<synchronous>, transform_indices = @transform_10, window_bounds = array<i64: 1, 8>}, {pipeline_mode = #tpu.pipeline_mode<synchronous>, transform_indices = @transform_11, window_bounds = array<i64: 32, 32>}, {pipeline_mode = #tpu.pipeline_mode<synchronous>, transform_indices = @transform_12, window_bounds = array<i64: 1, 32>}, {transform_indices = @transform_13, window_bounds = array<i64: 1, 16, 32>}, {transform_indices = @transform_14, window_bounds = array<i64: 1, 16, 32>}]} {
    %c0 = arith.constant 0 : index
    %c0_0 = arith.constant 0 : index
    %0 = vector.load %arg2[%c0, %c0_0] : memref<16x8xi32, #tpu.memory_space<vmem>>, vector<16x8xi32>
    %1 = tpu.iota {dimensions = array<i32: 1>} : vector<16x32xi32>
    %2 = vector.extract_strided_slice %0 {offsets = [0, 0], sizes = [16, 1], strides = [1, 1]} : vector<16x8xi32> to vector<16x1xi32>
    %3 = vector.broadcast %2 : vector<16x1xi32> to vector<16x32xi32>
    %4 = arith.cmpi eq, %3, %1 : vector<16x32xi32>
    %5 = arith.extui %4 : vector<16x32xi1> to vector<16x32xi32>
    %6 = arith.sitofp %5 : vector<16x32xi32> to vector<16x32xf32>
    %7 = vector.extract_strided_slice %0 {offsets = [0, 1], sizes = [16, 1], strides = [1, 1]} : vector<16x8xi32> to vector<16x1xi32>
    %8 = vector.broadcast %7 : vector<16x1xi32> to vector<16x32xi32>
    %9 = arith.cmpi eq, %8, %1 : vector<16x32xi32>
    %10 = arith.extui %9 : vector<16x32xi1> to vector<16x32xi32>
    %11 = arith.sitofp %10 : vector<16x32xi32> to vector<16x32xf32>
    %12 = vector.extract_strided_slice %0 {offsets = [0, 2], sizes = [16, 1], strides = [1, 1]} : vector<16x8xi32> to vector<16x1xi32>
    %13 = vector.broadcast %12 : vector<16x1xi32> to vector<16x32xi32>
    %14 = arith.cmpi eq, %13, %1 : vector<16x32xi32>
    %15 = arith.extui %14 : vector<16x32xi1> to vector<16x32xi32>
    %16 = arith.sitofp %15 : vector<16x32xi32> to vector<16x32xf32>
    %17 = vector.extract_strided_slice %0 {offsets = [0, 3], sizes = [16, 1], strides = [1, 1]} : vector<16x8xi32> to vector<16x1xi32>
    %18 = vector.broadcast %17 : vector<16x1xi32> to vector<16x32xi32>
    %19 = arith.cmpi eq, %18, %1 : vector<16x32xi32>
    %20 = arith.extui %19 : vector<16x32xi1> to vector<16x32xi32>
    %21 = arith.sitofp %20 : vector<16x32xi32> to vector<16x32xf32>
    %22 = vector.extract_strided_slice %0 {offsets = [0, 4], sizes = [16, 1], strides = [1, 1]} : vector<16x8xi32> to vector<16x1xi32>
    %23 = vector.broadcast %22 : vector<16x1xi32> to vector<16x32xi32>
    %24 = arith.cmpi eq, %23, %1 : vector<16x32xi32>
    %25 = arith.extui %24 : vector<16x32xi1> to vector<16x32xi32>
    %26 = arith.sitofp %25 : vector<16x32xi32> to vector<16x32xf32>
    %27 = vector.extract_strided_slice %0 {offsets = [0, 5], sizes = [16, 1], strides = [1, 1]} : vector<16x8xi32> to vector<16x1xi32>
    %28 = vector.broadcast %27 : vector<16x1xi32> to vector<16x32xi32>
    %29 = arith.cmpi eq, %28, %1 : vector<16x32xi32>
    %30 = arith.extui %29 : vector<16x32xi1> to vector<16x32xi32>
    %31 = arith.sitofp %30 : vector<16x32xi32> to vector<16x32xf32>
    %32 = vector.extract_strided_slice %0 {offsets = [0, 6], sizes = [16, 1], strides = [1, 1]} : vector<16x8xi32> to vector<16x1xi32>
    %33 = vector.broadcast %32 : vector<16x1xi32> to vector<16x32xi32>
    %34 = arith.cmpi eq, %33, %1 : vector<16x32xi32>
    %35 = arith.extui %34 : vector<16x32xi1> to vector<16x32xi32>
    %36 = arith.sitofp %35 : vector<16x32xi32> to vector<16x32xf32>
    %37 = vector.extract_strided_slice %0 {offsets = [0, 7], sizes = [16, 1], strides = [1, 1]} : vector<16x8xi32> to vector<16x1xi32>
    %38 = vector.broadcast %37 : vector<16x1xi32> to vector<16x32xi32>
    %39 = arith.cmpi eq, %38, %1 : vector<16x32xi32>
    %40 = arith.extui %39 : vector<16x32xi1> to vector<16x32xi32>
    %41 = arith.sitofp %40 : vector<16x32xi32> to vector<16x32xf32>
    %c0_1 = arith.constant 0 : index
    %c0_2 = arith.constant 0 : index
    %42 = vector.load %arg3[%c0_1, %c0_2] : memref<32x384xf32, #tpu.memory_space<vmem>>, vector<32x384xf32>
    %c0_3 = arith.constant 0 : index
    %c0_4 = arith.constant 0 : index
    %43 = vector.load %arg4[%c0_3, %c0_4] : memref<1x384xf32, #tpu.memory_space<vmem>>, vector<1x384xf32>
    %c0_5 = arith.constant 0 : index
    %c0_6 = arith.constant 0 : index
    %44 = vector.load %arg5[%c0_5, %c0_6] : memref<128x384xf32, #tpu.memory_space<vmem>>, vector<128x384xf32>
    %c0_7 = arith.constant 0 : index
    %c0_8 = arith.constant 0 : index
    %45 = vector.load %arg6[%c0_7, %c0_8] : memref<1x384xf32, #tpu.memory_space<vmem>>, vector<1x384xf32>
    %cst = arith.constant 0.000000e+00 : f32
    %46 = vector.broadcast %cst : f32 to vector<16x128xf32>
    %cst_9 = arith.constant dense<0.000000e+00> : vector<16x384xf32>
    %47 = tpu.matmul %6, %42, %cst_9 {dimension_numbers = #tpu.dot_dimension_numbers<[1], [0], [0], [1], [0, 0, 1, 1], [], []>} : vector<16x32xf32>, vector<32x384xf32>, vector<16x384xf32> -> vector<16x384xf32>
    %48 = vector.broadcast %43 : vector<1x384xf32> to vector<16x384xf32>
    %49 = arith.addf %47, %48 : vector<16x384xf32>
    %cst_10 = arith.constant dense<0.000000e+00> : vector<16x384xf32>
    %50 = tpu.matmul %46, %44, %cst_10 {dimension_numbers = #tpu.dot_dimension_numbers<[1], [0], [0], [1], [0, 0, 1, 1], [], []>} : vector<16x128xf32>, vector<128x384xf32>, vector<16x384xf32> -> vector<16x384xf32>
    %51 = vector.broadcast %45 : vector<1x384xf32> to vector<16x384xf32>
    %52 = arith.addf %50, %51 : vector<16x384xf32>
    %53 = vector.extract_strided_slice %49 {offsets = [0, 0], sizes = [16, 128], strides = [1, 1]} : vector<16x384xf32> to vector<16x128xf32>
    %54 = vector.extract_strided_slice %52 {offsets = [0, 0], sizes = [16, 128], strides = [1, 1]} : vector<16x384xf32> to vector<16x128xf32>
    %55 = arith.addf %53, %54 : vector<16x128xf32>
    %56 = arith.negf %55 : vector<16x128xf32>
    %57 = math.exp %56 : vector<16x128xf32>
    %cst_11 = arith.constant 1.000000e+00 : f32
    %58 = vector.broadcast %cst_11 : f32 to vector<16x128xf32>
    %59 = arith.addf %58, %57 : vector<16x128xf32>
    %60 = arith.divf %58, %59 : vector<16x128xf32>
    %61 = vector.extract_strided_slice %49 {offsets = [0, 128], sizes = [16, 128], strides = [1, 1]} : vector<16x384xf32> to vector<16x128xf32>
    %62 = vector.extract_strided_slice %52 {offsets = [0, 128], sizes = [16, 128], strides = [1, 1]} : vector<16x384xf32> to vector<16x128xf32>
    %63 = arith.addf %61, %62 : vector<16x128xf32>
    %64 = arith.negf %63 : vector<16x128xf32>
    %65 = math.exp %64 : vector<16x128xf32>
    %cst_12 = arith.constant 1.000000e+00 : f32
    %66 = vector.broadcast %cst_12 : f32 to vector<16x128xf32>
    %67 = arith.addf %66, %65 : vector<16x128xf32>
    %68 = arith.divf %66, %67 : vector<16x128xf32>
    %69 = vector.extract_strided_slice %49 {offsets = [0, 256], sizes = [16, 128], strides = [1, 1]} : vector<16x384xf32> to vector<16x128xf32>
    %70 = vector.extract_strided_slice %52 {offsets = [0, 256], sizes = [16, 128], strides = [1, 1]} : vector<16x384xf32> to vector<16x128xf32>
    %71 = arith.mulf %60, %70 : vector<16x128xf32>
    %72 = arith.addf %69, %71 : vector<16x128xf32>
    %73 = math.tanh %72 : vector<16x128xf32>
    %cst_13 = arith.constant 1.000000e+00 : f32
    %74 = vector.broadcast %cst_13 : f32 to vector<16x128xf32>
    %75 = arith.subf %74, %68 : vector<16x128xf32>
    %76 = arith.mulf %75, %73 : vector<16x128xf32>
    %77 = arith.mulf %68, %46 : vector<16x128xf32>
    %78 = arith.addf %76, %77 : vector<16x128xf32>
    %cst_14 = arith.constant dense<0.000000e+00> : vector<16x384xf32>
    %79 = tpu.matmul %11, %42, %cst_14 {dimension_numbers = #tpu.dot_dimension_numbers<[1], [0], [0], [1], [0, 0, 1, 1], [], []>} : vector<16x32xf32>, vector<32x384xf32>, vector<16x384xf32> -> vector<16x384xf32>
    %80 = vector.broadcast %43 : vector<1x384xf32> to vector<16x384xf32>
    %81 = arith.addf %79, %80 : vector<16x384xf32>
    %cst_15 = arith.constant dense<0.000000e+00> : vector<16x384xf32>
    %82 = tpu.matmul %78, %44, %cst_15 {dimension_numbers = #tpu.dot_dimension_numbers<[1], [0], [0], [1], [0, 0, 1, 1], [], []>} : vector<16x128xf32>, vector<128x384xf32>, vector<16x384xf32> -> vector<16x384xf32>
    %83 = vector.broadcast %45 : vector<1x384xf32> to vector<16x384xf32>
    %84 = arith.addf %82, %83 : vector<16x384xf32>
    %85 = vector.extract_strided_slice %81 {offsets = [0, 0], sizes = [16, 128], strides = [1, 1]} : vector<16x384xf32> to vector<16x128xf32>
    %86 = vector.extract_strided_slice %84 {offsets = [0, 0], sizes = [16, 128], strides = [1, 1]} : vector<16x384xf32> to vector<16x128xf32>
    %87 = arith.addf %85, %86 : vector<16x128xf32>
    %88 = arith.negf %87 : vector<16x128xf32>
    %89 = math.exp %88 : vector<16x128xf32>
    %cst_16 = arith.constant 1.000000e+00 : f32
    %90 = vector.broadcast %cst_16 : f32 to vector<16x128xf32>
    %91 = arith.addf %90, %89 : vector<16x128xf32>
    %92 = arith.divf %90, %91 : vector<16x128xf32>
    %93 = vector.extract_strided_slice %81 {offsets = [0, 128], sizes = [16, 128], strides = [1, 1]} : vector<16x384xf32> to vector<16x128xf32>
    %94 = vector.extract_strided_slice %84 {offsets = [0, 128], sizes = [16, 128], strides = [1, 1]} : vector<16x384xf32> to vector<16x128xf32>
    %95 = arith.addf %93, %94 : vector<16x128xf32>
    %96 = arith.negf %95 : vector<16x128xf32>
    %97 = math.exp %96 : vector<16x128xf32>
    %cst_17 = arith.constant 1.000000e+00 : f32
    %98 = vector.broadcast %cst_17 : f32 to vector<16x128xf32>
    %99 = arith.addf %98, %97 : vector<16x128xf32>
    %100 = arith.divf %98, %99 : vector<16x128xf32>
    %101 = vector.extract_strided_slice %81 {offsets = [0, 256], sizes = [16, 128], strides = [1, 1]} : vector<16x384xf32> to vector<16x128xf32>
    %102 = vector.extract_strided_slice %84 {offsets = [0, 256], sizes = [16, 128], strides = [1, 1]} : vector<16x384xf32> to vector<16x128xf32>
    %103 = arith.mulf %92, %102 : vector<16x128xf32>
    %104 = arith.addf %101, %103 : vector<16x128xf32>
    %105 = math.tanh %104 : vector<16x128xf32>
    %cst_18 = arith.constant 1.000000e+00 : f32
    %106 = vector.broadcast %cst_18 : f32 to vector<16x128xf32>
    %107 = arith.subf %106, %100 : vector<16x128xf32>
    %108 = arith.mulf %107, %105 : vector<16x128xf32>
    %109 = arith.mulf %100, %78 : vector<16x128xf32>
    %110 = arith.addf %108, %109 : vector<16x128xf32>
    %cst_19 = arith.constant dense<0.000000e+00> : vector<16x384xf32>
    %111 = tpu.matmul %16, %42, %cst_19 {dimension_numbers = #tpu.dot_dimension_numbers<[1], [0], [0], [1], [0, 0, 1, 1], [], []>} : vector<16x32xf32>, vector<32x384xf32>, vector<16x384xf32> -> vector<16x384xf32>
    %112 = vector.broadcast %43 : vector<1x384xf32> to vector<16x384xf32>
    %113 = arith.addf %111, %112 : vector<16x384xf32>
    %cst_20 = arith.constant dense<0.000000e+00> : vector<16x384xf32>
    %114 = tpu.matmul %110, %44, %cst_20 {dimension_numbers = #tpu.dot_dimension_numbers<[1], [0], [0], [1], [0, 0, 1, 1], [], []>} : vector<16x128xf32>, vector<128x384xf32>, vector<16x384xf32> -> vector<16x384xf32>
    %115 = vector.broadcast %45 : vector<1x384xf32> to vector<16x384xf32>
    %116 = arith.addf %114, %115 : vector<16x384xf32>
    %117 = vector.extract_strided_slice %113 {offsets = [0, 0], sizes = [16, 128], strides = [1, 1]} : vector<16x384xf32> to vector<16x128xf32>
    %118 = vector.extract_strided_slice %116 {offsets = [0, 0], sizes = [16, 128], strides = [1, 1]} : vector<16x384xf32> to vector<16x128xf32>
    %119 = arith.addf %117, %118 : vector<16x128xf32>
    %120 = arith.negf %119 : vector<16x128xf32>
    %121 = math.exp %120 : vector<16x128xf32>
    %cst_21 = arith.constant 1.000000e+00 : f32
    %122 = vector.broadcast %cst_21 : f32 to vector<16x128xf32>
    %123 = arith.addf %122, %121 : vector<16x128xf32>
    %124 = arith.divf %122, %123 : vector<16x128xf32>
    %125 = vector.extract_strided_slice %113 {offsets = [0, 128], sizes = [16, 128], strides = [1, 1]} : vector<16x384xf32> to vector<16x128xf32>
    %126 = vector.extract_strided_slice %116 {offsets = [0, 128], sizes = [16, 128], strides = [1, 1]} : vector<16x384xf32> to vector<16x128xf32>
    %127 = arith.addf %125, %126 : vector<16x128xf32>
    %128 = arith.negf %127 : vector<16x128xf32>
    %129 = math.exp %128 : vector<16x128xf32>
    %cst_22 = arith.constant 1.000000e+00 : f32
    %130 = vector.broadcast %cst_22 : f32 to vector<16x128xf32>
    %131 = arith.addf %130, %129 : vector<16x128xf32>
    %132 = arith.divf %130, %131 : vector<16x128xf32>
    %133 = vector.extract_strided_slice %113 {offsets = [0, 256], sizes = [16, 128], strides = [1, 1]} : vector<16x384xf32> to vector<16x128xf32>
    %134 = vector.extract_strided_slice %116 {offsets = [0, 256], sizes = [16, 128], strides = [1, 1]} : vector<16x384xf32> to vector<16x128xf32>
    %135 = arith.mulf %124, %134 : vector<16x128xf32>
    %136 = arith.addf %133, %135 : vector<16x128xf32>
    %137 = math.tanh %136 : vector<16x128xf32>
    %cst_23 = arith.constant 1.000000e+00 : f32
    %138 = vector.broadcast %cst_23 : f32 to vector<16x128xf32>
    %139 = arith.subf %138, %132 : vector<16x128xf32>
    %140 = arith.mulf %139, %137 : vector<16x128xf32>
    %141 = arith.mulf %132, %110 : vector<16x128xf32>
    %142 = arith.addf %140, %141 : vector<16x128xf32>
    %cst_24 = arith.constant dense<0.000000e+00> : vector<16x384xf32>
    %143 = tpu.matmul %21, %42, %cst_24 {dimension_numbers = #tpu.dot_dimension_numbers<[1], [0], [0], [1], [0, 0, 1, 1], [], []>} : vector<16x32xf32>, vector<32x384xf32>, vector<16x384xf32> -> vector<16x384xf32>
    %144 = vector.broadcast %43 : vector<1x384xf32> to vector<16x384xf32>
    %145 = arith.addf %143, %144 : vector<16x384xf32>
    %cst_25 = arith.constant dense<0.000000e+00> : vector<16x384xf32>
    %146 = tpu.matmul %142, %44, %cst_25 {dimension_numbers = #tpu.dot_dimension_numbers<[1], [0], [0], [1], [0, 0, 1, 1], [], []>} : vector<16x128xf32>, vector<128x384xf32>, vector<16x384xf32> -> vector<16x384xf32>
    %147 = vector.broadcast %45 : vector<1x384xf32> to vector<16x384xf32>
    %148 = arith.addf %146, %147 : vector<16x384xf32>
    %149 = vector.extract_strided_slice %145 {offsets = [0, 0], sizes = [16, 128], strides = [1, 1]} : vector<16x384xf32> to vector<16x128xf32>
    %150 = vector.extract_strided_slice %148 {offsets = [0, 0], sizes = [16, 128], strides = [1, 1]} : vector<16x384xf32> to vector<16x128xf32>
    %151 = arith.addf %149, %150 : vector<16x128xf32>
    %152 = arith.negf %151 : vector<16x128xf32>
    %153 = math.exp %152 : vector<16x128xf32>
    %cst_26 = arith.constant 1.000000e+00 : f32
    %154 = vector.broadcast %cst_26 : f32 to vector<16x128xf32>
    %155 = arith.addf %154, %153 : vector<16x128xf32>
    %156 = arith.divf %154, %155 : vector<16x128xf32>
    %157 = vector.extract_strided_slice %145 {offsets = [0, 128], sizes = [16, 128], strides = [1, 1]} : vector<16x384xf32> to vector<16x128xf32>
    %158 = vector.extract_strided_slice %148 {offsets = [0, 128], sizes = [16, 128], strides = [1, 1]} : vector<16x384xf32> to vector<16x128xf32>
    %159 = arith.addf %157, %158 : vector<16x128xf32>
    %160 = arith.negf %159 : vector<16x128xf32>
    %161 = math.exp %160 : vector<16x128xf32>
    %cst_27 = arith.constant 1.000000e+00 : f32
    %162 = vector.broadcast %cst_27 : f32 to vector<16x128xf32>
    %163 = arith.addf %162, %161 : vector<16x128xf32>
    %164 = arith.divf %162, %163 : vector<16x128xf32>
    %165 = vector.extract_strided_slice %145 {offsets = [0, 256], sizes = [16, 128], strides = [1, 1]} : vector<16x384xf32> to vector<16x128xf32>
    %166 = vector.extract_strided_slice %148 {offsets = [0, 256], sizes = [16, 128], strides = [1, 1]} : vector<16x384xf32> to vector<16x128xf32>
    %167 = arith.mulf %156, %166 : vector<16x128xf32>
    %168 = arith.addf %165, %167 : vector<16x128xf32>
    %169 = math.tanh %168 : vector<16x128xf32>
    %cst_28 = arith.constant 1.000000e+00 : f32
    %170 = vector.broadcast %cst_28 : f32 to vector<16x128xf32>
    %171 = arith.subf %170, %164 : vector<16x128xf32>
    %172 = arith.mulf %171, %169 : vector<16x128xf32>
    %173 = arith.mulf %164, %142 : vector<16x128xf32>
    %174 = arith.addf %172, %173 : vector<16x128xf32>
    %cst_29 = arith.constant dense<0.000000e+00> : vector<16x384xf32>
    %175 = tpu.matmul %26, %42, %cst_29 {dimension_numbers = #tpu.dot_dimension_numbers<[1], [0], [0], [1], [0, 0, 1, 1], [], []>} : vector<16x32xf32>, vector<32x384xf32>, vector<16x384xf32> -> vector<16x384xf32>
    %176 = vector.broadcast %43 : vector<1x384xf32> to vector<16x384xf32>
    %177 = arith.addf %175, %176 : vector<16x384xf32>
    %cst_30 = arith.constant dense<0.000000e+00> : vector<16x384xf32>
    %178 = tpu.matmul %174, %44, %cst_30 {dimension_numbers = #tpu.dot_dimension_numbers<[1], [0], [0], [1], [0, 0, 1, 1], [], []>} : vector<16x128xf32>, vector<128x384xf32>, vector<16x384xf32> -> vector<16x384xf32>
    %179 = vector.broadcast %45 : vector<1x384xf32> to vector<16x384xf32>
    %180 = arith.addf %178, %179 : vector<16x384xf32>
    %181 = vector.extract_strided_slice %177 {offsets = [0, 0], sizes = [16, 128], strides = [1, 1]} : vector<16x384xf32> to vector<16x128xf32>
    %182 = vector.extract_strided_slice %180 {offsets = [0, 0], sizes = [16, 128], strides = [1, 1]} : vector<16x384xf32> to vector<16x128xf32>
    %183 = arith.addf %181, %182 : vector<16x128xf32>
    %184 = arith.negf %183 : vector<16x128xf32>
    %185 = math.exp %184 : vector<16x128xf32>
    %cst_31 = arith.constant 1.000000e+00 : f32
    %186 = vector.broadcast %cst_31 : f32 to vector<16x128xf32>
    %187 = arith.addf %186, %185 : vector<16x128xf32>
    %188 = arith.divf %186, %187 : vector<16x128xf32>
    %189 = vector.extract_strided_slice %177 {offsets = [0, 128], sizes = [16, 128], strides = [1, 1]} : vector<16x384xf32> to vector<16x128xf32>
    %190 = vector.extract_strided_slice %180 {offsets = [0, 128], sizes = [16, 128], strides = [1, 1]} : vector<16x384xf32> to vector<16x128xf32>
    %191 = arith.addf %189, %190 : vector<16x128xf32>
    %192 = arith.negf %191 : vector<16x128xf32>
    %193 = math.exp %192 : vector<16x128xf32>
    %cst_32 = arith.constant 1.000000e+00 : f32
    %194 = vector.broadcast %cst_32 : f32 to vector<16x128xf32>
    %195 = arith.addf %194, %193 : vector<16x128xf32>
    %196 = arith.divf %194, %195 : vector<16x128xf32>
    %197 = vector.extract_strided_slice %177 {offsets = [0, 256], sizes = [16, 128], strides = [1, 1]} : vector<16x384xf32> to vector<16x128xf32>
    %198 = vector.extract_strided_slice %180 {offsets = [0, 256], sizes = [16, 128], strides = [1, 1]} : vector<16x384xf32> to vector<16x128xf32>
    %199 = arith.mulf %188, %198 : vector<16x128xf32>
    %200 = arith.addf %197, %199 : vector<16x128xf32>
    %201 = math.tanh %200 : vector<16x128xf32>
    %cst_33 = arith.constant 1.000000e+00 : f32
    %202 = vector.broadcast %cst_33 : f32 to vector<16x128xf32>
    %203 = arith.subf %202, %196 : vector<16x128xf32>
    %204 = arith.mulf %203, %201 : vector<16x128xf32>
    %205 = arith.mulf %196, %174 : vector<16x128xf32>
    %206 = arith.addf %204, %205 : vector<16x128xf32>
    %cst_34 = arith.constant dense<0.000000e+00> : vector<16x384xf32>
    %207 = tpu.matmul %31, %42, %cst_34 {dimension_numbers = #tpu.dot_dimension_numbers<[1], [0], [0], [1], [0, 0, 1, 1], [], []>} : vector<16x32xf32>, vector<32x384xf32>, vector<16x384xf32> -> vector<16x384xf32>
    %208 = vector.broadcast %43 : vector<1x384xf32> to vector<16x384xf32>
    %209 = arith.addf %207, %208 : vector<16x384xf32>
    %cst_35 = arith.constant dense<0.000000e+00> : vector<16x384xf32>
    %210 = tpu.matmul %206, %44, %cst_35 {dimension_numbers = #tpu.dot_dimension_numbers<[1], [0], [0], [1], [0, 0, 1, 1], [], []>} : vector<16x128xf32>, vector<128x384xf32>, vector<16x384xf32> -> vector<16x384xf32>
    %211 = vector.broadcast %45 : vector<1x384xf32> to vector<16x384xf32>
    %212 = arith.addf %210, %211 : vector<16x384xf32>
    %213 = vector.extract_strided_slice %209 {offsets = [0, 0], sizes = [16, 128], strides = [1, 1]} : vector<16x384xf32> to vector<16x128xf32>
    %214 = vector.extract_strided_slice %212 {offsets = [0, 0], sizes = [16, 128], strides = [1, 1]} : vector<16x384xf32> to vector<16x128xf32>
    %215 = arith.addf %213, %214 : vector<16x128xf32>
    %216 = arith.negf %215 : vector<16x128xf32>
    %217 = math.exp %216 : vector<16x128xf32>
    %cst_36 = arith.constant 1.000000e+00 : f32
    %218 = vector.broadcast %cst_36 : f32 to vector<16x128xf32>
    %219 = arith.addf %218, %217 : vector<16x128xf32>
    %220 = arith.divf %218, %219 : vector<16x128xf32>
    %221 = vector.extract_strided_slice %209 {offsets = [0, 128], sizes = [16, 128], strides = [1, 1]} : vector<16x384xf32> to vector<16x128xf32>
    %222 = vector.extract_strided_slice %212 {offsets = [0, 128], sizes = [16, 128], strides = [1, 1]} : vector<16x384xf32> to vector<16x128xf32>
    %223 = arith.addf %221, %222 : vector<16x128xf32>
    %224 = arith.negf %223 : vector<16x128xf32>
    %225 = math.exp %224 : vector<16x128xf32>
    %cst_37 = arith.constant 1.000000e+00 : f32
    %226 = vector.broadcast %cst_37 : f32 to vector<16x128xf32>
    %227 = arith.addf %226, %225 : vector<16x128xf32>
    %228 = arith.divf %226, %227 : vector<16x128xf32>
    %229 = vector.extract_strided_slice %209 {offsets = [0, 256], sizes = [16, 128], strides = [1, 1]} : vector<16x384xf32> to vector<16x128xf32>
    %230 = vector.extract_strided_slice %212 {offsets = [0, 256], sizes = [16, 128], strides = [1, 1]} : vector<16x384xf32> to vector<16x128xf32>
    %231 = arith.mulf %220, %230 : vector<16x128xf32>
    %232 = arith.addf %229, %231 : vector<16x128xf32>
    %233 = math.tanh %232 : vector<16x128xf32>
    %cst_38 = arith.constant 1.000000e+00 : f32
    %234 = vector.broadcast %cst_38 : f32 to vector<16x128xf32>
    %235 = arith.subf %234, %228 : vector<16x128xf32>
    %236 = arith.mulf %235, %233 : vector<16x128xf32>
    %237 = arith.mulf %228, %206 : vector<16x128xf32>
    %238 = arith.addf %236, %237 : vector<16x128xf32>
    %cst_39 = arith.constant dense<0.000000e+00> : vector<16x384xf32>
    %239 = tpu.matmul %36, %42, %cst_39 {dimension_numbers = #tpu.dot_dimension_numbers<[1], [0], [0], [1], [0, 0, 1, 1], [], []>} : vector<16x32xf32>, vector<32x384xf32>, vector<16x384xf32> -> vector<16x384xf32>
    %240 = vector.broadcast %43 : vector<1x384xf32> to vector<16x384xf32>
    %241 = arith.addf %239, %240 : vector<16x384xf32>
    %cst_40 = arith.constant dense<0.000000e+00> : vector<16x384xf32>
    %242 = tpu.matmul %238, %44, %cst_40 {dimension_numbers = #tpu.dot_dimension_numbers<[1], [0], [0], [1], [0, 0, 1, 1], [], []>} : vector<16x128xf32>, vector<128x384xf32>, vector<16x384xf32> -> vector<16x384xf32>
    %243 = vector.broadcast %45 : vector<1x384xf32> to vector<16x384xf32>
    %244 = arith.addf %242, %243 : vector<16x384xf32>
    %245 = vector.extract_strided_slice %241 {offsets = [0, 0], sizes = [16, 128], strides = [1, 1]} : vector<16x384xf32> to vector<16x128xf32>
    %246 = vector.extract_strided_slice %244 {offsets = [0, 0], sizes = [16, 128], strides = [1, 1]} : vector<16x384xf32> to vector<16x128xf32>
    %247 = arith.addf %245, %246 : vector<16x128xf32>
    %248 = arith.negf %247 : vector<16x128xf32>
    %249 = math.exp %248 : vector<16x128xf32>
    %cst_41 = arith.constant 1.000000e+00 : f32
    %250 = vector.broadcast %cst_41 : f32 to vector<16x128xf32>
    %251 = arith.addf %250, %249 : vector<16x128xf32>
    %252 = arith.divf %250, %251 : vector<16x128xf32>
    %253 = vector.extract_strided_slice %241 {offsets = [0, 128], sizes = [16, 128], strides = [1, 1]} : vector<16x384xf32> to vector<16x128xf32>
    %254 = vector.extract_strided_slice %244 {offsets = [0, 128], sizes = [16, 128], strides = [1, 1]} : vector<16x384xf32> to vector<16x128xf32>
    %255 = arith.addf %253, %254 : vector<16x128xf32>
    %256 = arith.negf %255 : vector<16x128xf32>
    %257 = math.exp %256 : vector<16x128xf32>
    %cst_42 = arith.constant 1.000000e+00 : f32
    %258 = vector.broadcast %cst_42 : f32 to vector<16x128xf32>
    %259 = arith.addf %258, %257 : vector<16x128xf32>
    %260 = arith.divf %258, %259 : vector<16x128xf32>
    %261 = vector.extract_strided_slice %241 {offsets = [0, 256], sizes = [16, 128], strides = [1, 1]} : vector<16x384xf32> to vector<16x128xf32>
    %262 = vector.extract_strided_slice %244 {offsets = [0, 256], sizes = [16, 128], strides = [1, 1]} : vector<16x384xf32> to vector<16x128xf32>
    %263 = arith.mulf %252, %262 : vector<16x128xf32>
    %264 = arith.addf %261, %263 : vector<16x128xf32>
    %265 = math.tanh %264 : vector<16x128xf32>
    %cst_43 = arith.constant 1.000000e+00 : f32
    %266 = vector.broadcast %cst_43 : f32 to vector<16x128xf32>
    %267 = arith.subf %266, %260 : vector<16x128xf32>
    %268 = arith.mulf %267, %265 : vector<16x128xf32>
    %269 = arith.mulf %260, %238 : vector<16x128xf32>
    %270 = arith.addf %268, %269 : vector<16x128xf32>
    %cst_44 = arith.constant dense<0.000000e+00> : vector<16x384xf32>
    %271 = tpu.matmul %41, %42, %cst_44 {dimension_numbers = #tpu.dot_dimension_numbers<[1], [0], [0], [1], [0, 0, 1, 1], [], []>} : vector<16x32xf32>, vector<32x384xf32>, vector<16x384xf32> -> vector<16x384xf32>
    %272 = vector.broadcast %43 : vector<1x384xf32> to vector<16x384xf32>
    %273 = arith.addf %271, %272 : vector<16x384xf32>
    %cst_45 = arith.constant dense<0.000000e+00> : vector<16x384xf32>
    %274 = tpu.matmul %270, %44, %cst_45 {dimension_numbers = #tpu.dot_dimension_numbers<[1], [0], [0], [1], [0, 0, 1, 1], [], []>} : vector<16x128xf32>, vector<128x384xf32>, vector<16x384xf32> -> vector<16x384xf32>
    %275 = vector.broadcast %45 : vector<1x384xf32> to vector<16x384xf32>
    %276 = arith.addf %274, %275 : vector<16x384xf32>
    %277 = vector.extract_strided_slice %273 {offsets = [0, 0], sizes = [16, 128], strides = [1, 1]} : vector<16x384xf32> to vector<16x128xf32>
    %278 = vector.extract_strided_slice %276 {offsets = [0, 0], sizes = [16, 128], strides = [1, 1]} : vector<16x384xf32> to vector<16x128xf32>
    %279 = arith.addf %277, %278 : vector<16x128xf32>
    %280 = arith.negf %279 : vector<16x128xf32>
    %281 = math.exp %280 : vector<16x128xf32>
    %cst_46 = arith.constant 1.000000e+00 : f32
    %282 = vector.broadcast %cst_46 : f32 to vector<16x128xf32>
    %283 = arith.addf %282, %281 : vector<16x128xf32>
    %284 = arith.divf %282, %283 : vector<16x128xf32>
    %285 = vector.extract_strided_slice %273 {offsets = [0, 128], sizes = [16, 128], strides = [1, 1]} : vector<16x384xf32> to vector<16x128xf32>
    %286 = vector.extract_strided_slice %276 {offsets = [0, 128], sizes = [16, 128], strides = [1, 1]} : vector<16x384xf32> to vector<16x128xf32>
    %287 = arith.addf %285, %286 : vector<16x128xf32>
    %288 = arith.negf %287 : vector<16x128xf32>
    %289 = math.exp %288 : vector<16x128xf32>
    %cst_47 = arith.constant 1.000000e+00 : f32
    %290 = vector.broadcast %cst_47 : f32 to vector<16x128xf32>
    %291 = arith.addf %290, %289 : vector<16x128xf32>
    %292 = arith.divf %290, %291 : vector<16x128xf32>
    %293 = vector.extract_strided_slice %273 {offsets = [0, 256], sizes = [16, 128], strides = [1, 1]} : vector<16x384xf32> to vector<16x128xf32>
    %294 = vector.extract_strided_slice %276 {offsets = [0, 256], sizes = [16, 128], strides = [1, 1]} : vector<16x384xf32> to vector<16x128xf32>
    %295 = arith.mulf %284, %294 : vector<16x128xf32>
    %296 = arith.addf %293, %295 : vector<16x128xf32>
    %297 = math.tanh %296 : vector<16x128xf32>
    %cst_48 = arith.constant 1.000000e+00 : f32
    %298 = vector.broadcast %cst_48 : f32 to vector<16x128xf32>
    %299 = arith.subf %298, %292 : vector<16x128xf32>
    %300 = arith.mulf %299, %297 : vector<16x128xf32>
    %301 = arith.mulf %292, %270 : vector<16x128xf32>
    %302 = arith.addf %300, %301 : vector<16x128xf32>
    %c0_49 = arith.constant 0 : index
    %c0_50 = arith.constant 0 : index
    %303 = vector.load %arg7[%c0_49, %c0_50] : memref<32x384xf32, #tpu.memory_space<vmem>>, vector<32x384xf32>
    %c0_51 = arith.constant 0 : index
    %c0_52 = arith.constant 0 : index
    %304 = vector.load %arg8[%c0_51, %c0_52] : memref<1x384xf32, #tpu.memory_space<vmem>>, vector<1x384xf32>
    %c0_53 = arith.constant 0 : index
    %c0_54 = arith.constant 0 : index
    %305 = vector.load %arg9[%c0_53, %c0_54] : memref<128x384xf32, #tpu.memory_space<vmem>>, vector<128x384xf32>
    %c0_55 = arith.constant 0 : index
    %c0_56 = arith.constant 0 : index
    %306 = vector.load %arg10[%c0_55, %c0_56] : memref<1x384xf32, #tpu.memory_space<vmem>>, vector<1x384xf32>
    %c0_57 = arith.constant 0 : index
    %c0_58 = arith.constant 0 : index
    %307 = vector.load %arg11[%c0_57, %c0_58] : memref<128x8xf32, #tpu.memory_space<vmem>>, vector<128x8xf32>
    %c0_59 = arith.constant 0 : index
    %c0_60 = arith.constant 0 : index
    %308 = vector.load %arg12[%c0_59, %c0_60] : memref<1x8xf32, #tpu.memory_space<vmem>>, vector<1x8xf32>
    %c0_61 = arith.constant 0 : index
    %c0_62 = arith.constant 0 : index
    %309 = vector.load %arg13[%c0_61, %c0_62] : memref<32x32xf32, #tpu.memory_space<vmem>>, vector<32x32xf32>
    %c0_63 = arith.constant 0 : index
    %c0_64 = arith.constant 0 : index
    %310 = vector.load %arg14[%c0_63, %c0_64] : memref<1x32xf32, #tpu.memory_space<vmem>>, vector<1x32xf32>
    %c0_i32 = arith.constant 0 : i32
    %311 = vector.broadcast %c0_i32 : i32 to vector<16x32xi32>
    %312 = arith.cmpi eq, %1, %311 : vector<16x32xi32>
    %313 = arith.extui %312 : vector<16x32xi1> to vector<16x32xi32>
    %314 = arith.sitofp %313 : vector<16x32xi32> to vector<16x32xf32>
    %cst_65 = arith.constant dense<0.000000e+00> : vector<16x384xf32>
    %315 = tpu.matmul %314, %303, %cst_65 {dimension_numbers = #tpu.dot_dimension_numbers<[1], [0], [0], [1], [0, 0, 1, 1], [], []>} : vector<16x32xf32>, vector<32x384xf32>, vector<16x384xf32> -> vector<16x384xf32>
    %316 = vector.broadcast %304 : vector<1x384xf32> to vector<16x384xf32>
    %317 = arith.addf %315, %316 : vector<16x384xf32>
    %cst_66 = arith.constant dense<0.000000e+00> : vector<16x384xf32>
    %318 = tpu.matmul %302, %305, %cst_66 {dimension_numbers = #tpu.dot_dimension_numbers<[1], [0], [0], [1], [0, 0, 1, 1], [], []>} : vector<16x128xf32>, vector<128x384xf32>, vector<16x384xf32> -> vector<16x384xf32>
    %319 = vector.broadcast %306 : vector<1x384xf32> to vector<16x384xf32>
    %320 = arith.addf %318, %319 : vector<16x384xf32>
    %321 = vector.extract_strided_slice %317 {offsets = [0, 0], sizes = [16, 128], strides = [1, 1]} : vector<16x384xf32> to vector<16x128xf32>
    %322 = vector.extract_strided_slice %320 {offsets = [0, 0], sizes = [16, 128], strides = [1, 1]} : vector<16x384xf32> to vector<16x128xf32>
    %323 = arith.addf %321, %322 : vector<16x128xf32>
    %324 = arith.negf %323 : vector<16x128xf32>
    %325 = math.exp %324 : vector<16x128xf32>
    %cst_67 = arith.constant 1.000000e+00 : f32
    %326 = vector.broadcast %cst_67 : f32 to vector<16x128xf32>
    %327 = arith.addf %326, %325 : vector<16x128xf32>
    %328 = arith.divf %326, %327 : vector<16x128xf32>
    %329 = vector.extract_strided_slice %317 {offsets = [0, 128], sizes = [16, 128], strides = [1, 1]} : vector<16x384xf32> to vector<16x128xf32>
    %330 = vector.extract_strided_slice %320 {offsets = [0, 128], sizes = [16, 128], strides = [1, 1]} : vector<16x384xf32> to vector<16x128xf32>
    %331 = arith.addf %329, %330 : vector<16x128xf32>
    %332 = arith.negf %331 : vector<16x128xf32>
    %333 = math.exp %332 : vector<16x128xf32>
    %cst_68 = arith.constant 1.000000e+00 : f32
    %334 = vector.broadcast %cst_68 : f32 to vector<16x128xf32>
    %335 = arith.addf %334, %333 : vector<16x128xf32>
    %336 = arith.divf %334, %335 : vector<16x128xf32>
    %337 = vector.extract_strided_slice %317 {offsets = [0, 256], sizes = [16, 128], strides = [1, 1]} : vector<16x384xf32> to vector<16x128xf32>
    %338 = vector.extract_strided_slice %320 {offsets = [0, 256], sizes = [16, 128], strides = [1, 1]} : vector<16x384xf32> to vector<16x128xf32>
    %339 = arith.mulf %328, %338 : vector<16x128xf32>
    %340 = arith.addf %337, %339 : vector<16x128xf32>
    %341 = math.tanh %340 : vector<16x128xf32>
    %cst_69 = arith.constant 1.000000e+00 : f32
    %342 = vector.broadcast %cst_69 : f32 to vector<16x128xf32>
    %343 = arith.subf %342, %336 : vector<16x128xf32>
    %344 = arith.mulf %343, %341 : vector<16x128xf32>
    %345 = arith.mulf %336, %302 : vector<16x128xf32>
    %346 = arith.addf %344, %345 : vector<16x128xf32>
    %cst_70 = arith.constant dense<0.000000e+00> : vector<16x8xf32>
    %347 = tpu.matmul %346, %307, %cst_70 {dimension_numbers = #tpu.dot_dimension_numbers<[1], [0], [0], [1], [0, 0, 1, 1], [], []>} : vector<16x128xf32>, vector<128x8xf32>, vector<16x8xf32> -> vector<16x8xf32>
    %348 = vector.broadcast %308 : vector<1x8xf32> to vector<16x8xf32>
    %349 = arith.addf %347, %348 : vector<16x8xf32>
    %cst_71 = arith.constant dense<0xFF800000> : vector<16xf32>
    %350 = vector.multi_reduction <maximumf>, %349, %cst_71 [1] : vector<16x8xf32> to vector<16xf32>
    %351 = vector.shape_cast %350 : vector<16xf32> to vector<16x1xf32>
    %352 = vector.broadcast %351 : vector<16x1xf32> to vector<16x8xf32>
    %353 = arith.subf %349, %352 : vector<16x8xf32>
    %354 = math.exp %353 : vector<16x8xf32>
    %cst_72 = arith.constant dense<0.000000e+00> : vector<16xf32>
    %355 = vector.multi_reduction <add>, %354, %cst_72 [1] : vector<16x8xf32> to vector<16xf32>
    %356 = vector.shape_cast %355 : vector<16xf32> to vector<16x1xf32>
    %357 = tpu.reciprocal %356 : vector<16x1xf32> -> vector<16x1xf32>
    %358 = vector.broadcast %357 : vector<16x1xf32> to vector<16x8xf32>
    %359 = arith.mulf %354, %358 : vector<16x8xf32>
    %360 = vector.extract_strided_slice %359 {offsets = [0, 0], sizes = [16, 1], strides = [1, 1]} : vector<16x8xf32> to vector<16x1xf32>
    %361 = vector.broadcast %360 : vector<16x1xf32> to vector<16x32xf32>
    %362 = arith.mulf %361, %6 : vector<16x32xf32>
    %363 = vector.extract_strided_slice %359 {offsets = [0, 1], sizes = [16, 1], strides = [1, 1]} : vector<16x8xf32> to vector<16x1xf32>
    %364 = vector.broadcast %363 : vector<16x1xf32> to vector<16x32xf32>
    %365 = arith.mulf %364, %11 : vector<16x32xf32>
    %366 = arith.addf %362, %365 : vector<16x32xf32>
    %367 = vector.extract_strided_slice %359 {offsets = [0, 2], sizes = [16, 1], strides = [1, 1]} : vector<16x8xf32> to vector<16x1xf32>
    %368 = vector.broadcast %367 : vector<16x1xf32> to vector<16x32xf32>
    %369 = arith.mulf %368, %16 : vector<16x32xf32>
    %370 = arith.addf %366, %369 : vector<16x32xf32>
    %371 = vector.extract_strided_slice %359 {offsets = [0, 3], sizes = [16, 1], strides = [1, 1]} : vector<16x8xf32> to vector<16x1xf32>
    %372 = vector.broadcast %371 : vector<16x1xf32> to vector<16x32xf32>
    %373 = arith.mulf %372, %21 : vector<16x32xf32>
    %374 = arith.addf %370, %373 : vector<16x32xf32>
    %375 = vector.extract_strided_slice %359 {offsets = [0, 4], sizes = [16, 1], strides = [1, 1]} : vector<16x8xf32> to vector<16x1xf32>
    %376 = vector.broadcast %375 : vector<16x1xf32> to vector<16x32xf32>
    %377 = arith.mulf %376, %26 : vector<16x32xf32>
    %378 = arith.addf %374, %377 : vector<16x32xf32>
    %379 = vector.extract_strided_slice %359 {offsets = [0, 5], sizes = [16, 1], strides = [1, 1]} : vector<16x8xf32> to vector<16x1xf32>
    %380 = vector.broadcast %379 : vector<16x1xf32> to vector<16x32xf32>
    %381 = arith.mulf %380, %31 : vector<16x32xf32>
    %382 = arith.addf %378, %381 : vector<16x32xf32>
    %383 = vector.extract_strided_slice %359 {offsets = [0, 6], sizes = [16, 1], strides = [1, 1]} : vector<16x8xf32> to vector<16x1xf32>
    %384 = vector.broadcast %383 : vector<16x1xf32> to vector<16x32xf32>
    %385 = arith.mulf %384, %36 : vector<16x32xf32>
    %386 = arith.addf %382, %385 : vector<16x32xf32>
    %387 = vector.extract_strided_slice %359 {offsets = [0, 7], sizes = [16, 1], strides = [1, 1]} : vector<16x8xf32> to vector<16x1xf32>
    %388 = vector.broadcast %387 : vector<16x1xf32> to vector<16x32xf32>
    %389 = arith.mulf %388, %41 : vector<16x32xf32>
    %390 = arith.addf %386, %389 : vector<16x32xf32>
    %cst_73 = arith.constant dense<0.000000e+00> : vector<16x32xf32>
    %391 = tpu.matmul %390, %309, %cst_73 {dimension_numbers = #tpu.dot_dimension_numbers<[1], [0], [0], [1], [0, 0, 1, 1], [], []>} : vector<16x32xf32>, vector<32x32xf32>, vector<16x32xf32> -> vector<16x32xf32>
    %392 = vector.broadcast %310 : vector<1x32xf32> to vector<16x32xf32>
    %393 = arith.addf %391, %392 : vector<16x32xf32>
    %cst_74 = arith.constant dense<0xFF800000> : vector<16xf32>
    %394 = vector.multi_reduction <maximumf>, %393, %cst_74 [1] : vector<16x32xf32> to vector<16xf32>
    %395 = vector.shape_cast %394 : vector<16xf32> to vector<16x1xf32>
    %396 = vector.broadcast %395 : vector<16x1xf32> to vector<16x32xf32>
    %397 = arith.subf %393, %396 : vector<16x32xf32>
    %398 = math.exp %397 : vector<16x32xf32>
    %cst_75 = arith.constant dense<0.000000e+00> : vector<16xf32>
    %399 = vector.multi_reduction <add>, %398, %cst_75 [1] : vector<16x32xf32> to vector<16xf32>
    %400 = vector.shape_cast %399 : vector<16xf32> to vector<16x1xf32>
    %401 = tpu.reciprocal %400 : vector<16x1xf32> -> vector<16x1xf32>
    %402 = vector.broadcast %401 : vector<16x1xf32> to vector<16x32xf32>
    %403 = arith.mulf %398, %402 : vector<16x32xf32>
    %c0_76 = arith.constant 0 : index
    %c0_77 = arith.constant 0 : index
    %c0_78 = arith.constant 0 : index
    %404 = vector.load %arg16[%c0_76, %c0_77, %c0_78] : memref<1x16x32xf32, #tpu.memory_space<vmem>>, vector<1x16x32xf32>
    %405 = vector.shape_cast %404 : vector<1x16x32xf32> to vector<16x32xf32>
    %406 = vector.shape_cast %403 : vector<16x32xf32> to vector<1x16x32xf32>
    tpu.vector_store %arg16[%c0_76, %c0_77, %c0_78], %406 {strides = array<i32>} : memref<1x16x32xf32, #tpu.memory_space<vmem>>, vector<1x16x32xf32>,
    return
  }
  func.func @transform_0(%arg0: i32, %arg1: memref<1xi32, #tpu.memory_space<smem>>) -> (i32, i32) {
    %c0_i32 = arith.constant 0 : i32
    %c0_i32_0 = arith.constant 0 : i32
    return %arg0, %c0_i32 : i32, i32
  }
  func.func @transform_1(%arg0: i32, %arg1: memref<1xi32, #tpu.memory_space<smem>>) -> (i32, i32) {
    %c0_i32 = arith.constant 0 : i32
    %c0_i32_0 = arith.constant 0 : i32
    %c0_i32_1 = arith.constant 0 : i32
    return %c0_i32, %c0_i32_0 : i32, i32
  }
  func.func @transform_2(%arg0: i32, %arg1: memref<1xi32, #tpu.memory_space<smem>>) -> (i32, i32) {
    %c0_i32 = arith.constant 0 : i32
    %c0_i32_0 = arith.constant 0 : i32
    %c0_i32_1 = arith.constant 0 : i32
    return %c0_i32, %c0_i32_0 : i32, i32
  }
  func.func @transform_3(%arg0: i32, %arg1: memref<1xi32, #tpu.memory_space<smem>>) -> (i32, i32) {
    %c0_i32 = arith.constant 0 : i32
    %c0_i32_0 = arith.constant 0 : i32
    %c0_i32_1 = arith.constant 0 : i32
    return %c0_i32, %c0_i32_0 : i32, i32
  }
  func.func @transform_4(%arg0: i32, %arg1: memref<1xi32, #tpu.memory_space<smem>>) -> (i32, i32) {
    %c0_i32 = arith.constant 0 : i32
    %c0_i32_0 = arith.constant 0 : i32
    %c0_i32_1 = arith.constant 0 : i32
    return %c0_i32, %c0_i32_0 : i32, i32
  }
  func.func @transform_5(%arg0: i32, %arg1: memref<1xi32, #tpu.memory_space<smem>>) -> (i32, i32) {
    %c0_i32 = arith.constant 0 : i32
    %c0_i32_0 = arith.constant 0 : i32
    %c0_i32_1 = arith.constant 0 : i32
    return %c0_i32, %c0_i32_0 : i32, i32
  }
  func.func @transform_6(%arg0: i32, %arg1: memref<1xi32, #tpu.memory_space<smem>>) -> (i32, i32) {
    %c0_i32 = arith.constant 0 : i32
    %c0_i32_0 = arith.constant 0 : i32
    %c0_i32_1 = arith.constant 0 : i32
    return %c0_i32, %c0_i32_0 : i32, i32
  }
  func.func @transform_7(%arg0: i32, %arg1: memref<1xi32, #tpu.memory_space<smem>>) -> (i32, i32) {
    %c0_i32 = arith.constant 0 : i32
    %c0_i32_0 = arith.constant 0 : i32
    %c0_i32_1 = arith.constant 0 : i32
    return %c0_i32, %c0_i32_0 : i32, i32
  }
  func.func @transform_8(%arg0: i32, %arg1: memref<1xi32, #tpu.memory_space<smem>>) -> (i32, i32) {
    %c0_i32 = arith.constant 0 : i32
    %c0_i32_0 = arith.constant 0 : i32
    %c0_i32_1 = arith.constant 0 : i32
    return %c0_i32, %c0_i32_0 : i32, i32
  }
  func.func @transform_9(%arg0: i32, %arg1: memref<1xi32, #tpu.memory_space<smem>>) -> (i32, i32) {
    %c0_i32 = arith.constant 0 : i32
    %c0_i32_0 = arith.constant 0 : i32
    %c0_i32_1 = arith.constant 0 : i32
    return %c0_i32, %c0_i32_0 : i32, i32
  }
  func.func @transform_10(%arg0: i32, %arg1: memref<1xi32, #tpu.memory_space<smem>>) -> (i32, i32) {
    %c0_i32 = arith.constant 0 : i32
    %c0_i32_0 = arith.constant 0 : i32
    %c0_i32_1 = arith.constant 0 : i32
    return %c0_i32, %c0_i32_0 : i32, i32
  }
  func.func @transform_11(%arg0: i32, %arg1: memref<1xi32, #tpu.memory_space<smem>>) -> (i32, i32) {
    %c0_i32 = arith.constant 0 : i32
    %c0_i32_0 = arith.constant 0 : i32
    %c0_i32_1 = arith.constant 0 : i32
    return %c0_i32, %c0_i32_0 : i32, i32
  }
  func.func @transform_12(%arg0: i32, %arg1: memref<1xi32, #tpu.memory_space<smem>>) -> (i32, i32) {
    %c0_i32 = arith.constant 0 : i32
    %c0_i32_0 = arith.constant 0 : i32
    %c0_i32_1 = arith.constant 0 : i32
    return %c0_i32, %c0_i32_0 : i32, i32
  }
  func.func @transform_13(%arg0: i32, %arg1: memref<1xi32, #tpu.memory_space<smem>>) -> (i32, i32, i32) {
    %c0_i32 = arith.constant 0 : i32
    %c0_i32_0 = arith.constant 0 : i32
    %c0_i32_1 = arith.constant 0 : i32
    return %c0_i32, %arg0, %c0_i32_0 : i32, i32, i32
  }
  func.func @transform_14(%arg0: i32, %arg1: memref<1xi32, #tpu.memory_space<smem>>) -> (i32, i32, i32) {
    %c0_i32 = arith.constant 0 : i32
    %c0_i32_0 = arith.constant 0 : i32
    %c0_i32_1 = arith.constant 0 : i32
    return %c0_i32, %arg0, %c0_i32_0 : i32, i32, i32
  }
}

</mosaic_0001>

<llo_original>
// kernel: _forward_impl.1
$region0: #{_forward_impl.1}
  #allocation0 [shape = 'u32[]', space=smem, size = 0x4, offset = 0x4, fixed_abs, tag = 'smem constant byte address 0x4 - core index']
  #allocation1 [shape = 'u32[72,128]{1,0:T(1,128)}', space=vmem, size = 0x9000, scoped, tag = 'internal scratch']
  #allocation2 [shape = 's32[1]{0}', space=sflag, size = 0x4, scoped, tag = 'scoped memory for _forward_impl.1']
  #allocation3 [shape = 's32[1]{0:T(128)S(6)}', space=smem, size = 0x200, scoped, tag = 'prefetched SMEM operand 0']
  %s0 = inlined_call_operand.<no memory space> [shape: s32[1], index: 0, kind: input, shape index: {}]
  %s1 = inlined_call_operand.vmem [shape: s32[16,8], index: 1, kind: input, shape index: {}]
  %s2 = inlined_call_operand.vmem [shape: f32[32,384], index: 2, kind: input, shape index: {}]
  %s3 = inlined_call_operand.vmem [shape: f32[1,384], index: 3, kind: input, shape index: {}]
  %s4 = inlined_call_operand.vmem [shape: f32[128,384], index: 4, kind: input, shape index: {}]
  %s5 = inlined_call_operand.vmem [shape: f32[1,384], index: 5, kind: input, shape index: {}]
  %s6 = inlined_call_operand.vmem [shape: f32[32,384], index: 6, kind: input, shape index: {}]
  %s7 = inlined_call_operand.vmem [shape: f32[1,384], index: 7, kind: input, shape index: {}]
  %s8 = inlined_call_operand.hbm [shape: f32[128,384], index: 8, kind: input, shape index: {}]
  %s9 = inlined_call_operand.vmem [shape: f32[1,384], index: 9, kind: input, shape index: {}]
  %s10 = inlined_call_operand.vmem [shape: f32[128,8], index: 10, kind: input, shape index: {}]
  %s11 = inlined_call_operand.vmem [shape: f32[1,8], index: 11, kind: input, shape index: {}]
  %s12 = inlined_call_operand.vmem [shape: f32[32,32], index: 12, kind: input, shape index: {}]
  %s13 = inlined_call_operand.vmem [shape: f32[1,32], index: 13, kind: input, shape index: {}]
  %s14 = inlined_call_operand.vmem [shape: f32[1,16,32], index: 14, kind: input, shape index: {}]
  %s15 = inlined_call_operand.hbm [shape: f32[1,16,32], index: 15, kind: output, shape index: {}]
  %s16 = sld [smem:[#allocation0]]
  $region70: #{_forward_impl.1} parent=0
    _
  %s18 = ssub.s32 1, %s16
  %s19 = scalar_select 0, %s18, %s16
  %20 = sst [smem:[#allocation3]] %s0
  $region1: #{_forward_impl.1} parent=0
    #allocation4 [shape = 'u8[196608]{0}', space=vmem, size = 0x30000, scoped, tag = 'input window, operand 8, single buffered']
    #allocation5 [shape = 's32[1]{0}', space=sflag, size = 0x4, scoped, tag = 'scoped memory for _forward_impl.1']
    #allocation6 [shape = 's32[1]{0}', space=sflag, size = 0x4, scoped, tag = 'scoped memory for _forward_impl.1']
    #allocation7 [shape = 'u8[8192]{0}', space=vmem, size = 0x2000, scoped, tag = 'output window, operand 0, single buffered']
    %21 = vsyncpa [#allocation5], 0
    %22 = vsyncpa [#allocation6], 0
    // Predicated region
    $region2: #{_forward_impl.1} parent=1 // pred_check
      _
    $region3: #{_forward_impl.1} parent=1 // pred_check_branch
      %24 = sbr.rel (0) target = $region5
    $region4: #{_forward_impl.1} parent=1 // pred_region
      _
    $region5: #{_forward_impl.1} parent=1 // pred_fallthru
      _
    // Predicated region
    $region6: #{_forward_impl.1} parent=1 // pred_check
      _
    $region7: #{_forward_impl.1} parent=1 // pred_check_branch
      %26 = sbr.rel (0) target = $region9
    $region8: #{_forward_impl.1} parent=1 // pred_region
      _
    $region9: #{_forward_impl.1} parent=1 // pred_fallthru
      _
    // Predicated region
    $region10: #{_forward_impl.1} parent=1 // pred_check
      _
    $region11: #{_forward_impl.1} parent=1 // pred_check_branch
      %28 = sbr.rel (0) target = $region13
    $region12: #{_forward_impl.1} parent=1 // pred_region
      _
    $region13: #{_forward_impl.1} parent=1 // pred_fallthru
      _
    // Predicated region
    $region14: #{_forward_impl.1} parent=1 // pred_check
      _
    $region15: #{_forward_impl.1} parent=1 // pred_check_branch
      %30 = sbr.rel (0) target = $region17
    $region16: #{_forward_impl.1} parent=1 // pred_region
      _
    $region17: #{_forward_impl.1} parent=1 // pred_fallthru
      _
    // Predicated region
    $region18: #{_forward_impl.1} parent=1 // pred_check
      _
    $region19: #{_forward_impl.1} parent=1 // pred_check_branch
      %32 = sbr.rel (0) target = $region21
    $region20: #{_forward_impl.1} parent=1 // pred_region
      _
    $region21: #{_forward_impl.1} parent=1 // pred_fallthru
      _
    // Predicated region
    $region22: #{_forward_impl.1} parent=1 // pred_check
      _
    $region23: #{_forward_impl.1} parent=1 // pred_check_branch
      %34 = sbr.rel (0) target = $region25
    $region24: #{_forward_impl.1} parent=1 // pred_region
      _
    $region25: #{_forward_impl.1} parent=1 // pred_fallthru
      _
    // Predicated region
    $region26: #{_forward_impl.1} parent=1 // pred_check
      _
    $region27: #{_forward_impl.1} parent=1 // pred_check_branch
      %36 = sbr.rel (0) target = $region29
    $region28: #{_forward_impl.1} parent=1 // pred_region
      _
    $region29: #{_forward_impl.1} parent=1 // pred_fallthru
      _
    // Predicated region
    $region30: #{_forward_impl.1} parent=1 // pred_check
      _
    $region31: #{_forward_impl.1} parent=1 // pred_check_branch
      %38 = sbr.rel (0) target = $region33
    $region32: #{_forward_impl.1} parent=1 // pred_region
      %40 = vsyncadd [#allocation5], 0
      %s41 = sshll.u32 %s8, 4
      %s42 = int_to_ptr.hbm [resolvable:$true] %s41
      %s43 = sshll.u32 [#allocation4], 4
      %s44 = int_to_ptr.vmem [resolvable:$true] %s43
      %49 = dma.hbm_to_vmem [thread:$0]  %s42, 6144, %s44, [#allocation5], 384, 384, 24
    $region33: #{_forward_impl.1} parent=1 // pred_fallthru
      _
    // Predicated region
    $region34: #{_forward_impl.1} parent=1 // pred_check
      _
    $region35: #{_forward_impl.1} parent=1 // pred_check_branch
      %51 = sbr.rel (0) target = $region37
    $region36: #{_forward_impl.1} parent=1 // pred_region
      _
    $region37: #{_forward_impl.1} parent=1 // pred_fallthru
      _
    // Predicated region
    $region38: #{_forward_impl.1} parent=1 // pred_check
      _
    $region39: #{_forward_impl.1} parent=1 // pred_check_branch
      %53 = sbr.rel (0) target = $region41
    $region40: #{_forward_impl.1} parent=1 // pred_region
      _
    $region41: #{_forward_impl.1} parent=1 // pred_fallthru
      _
    // Predicated region
    $region42: #{_forward_impl.1} parent=1 // pred_check
      _
    $region43: #{_forward_impl.1} parent=1 // pred_check_branch
      %55 = sbr.rel (0) target = $region45
    $region44: #{_forward_impl.1} parent=1 // pred_region
      _
    $region45: #{_forward_impl.1} parent=1 // pred_fallthru
      _
    // Predicated region
    $region46: #{_forward_impl.1} parent=1 // pred_check
      _
    $region47: #{_forward_impl.1} parent=1 // pred_check_branch
      %57 = sbr.rel (0) target = $region49
    $region48: #{_forward_impl.1} parent=1 // pred_region
      _
    $region49: #{_forward_impl.1} parent=1 // pred_fallthru
      _
    // Predicated region
    $region50: #{_forward_impl.1} parent=1 // pred_check
      _
    $region51: #{_forward_impl.1} parent=1 // pred_check_branch
      %59 = sbr.rel (0) target = $region53
    $region52: #{_forward_impl.1} parent=1 // pred_region
      _
    $region53: #{_forward_impl.1} parent=1 // pred_fallthru
      _
    // Predicated region
    $region54: #{_forward_impl.1} parent=1 // pred_check
      _
    $region55: #{_forward_impl.1} parent=1 // pred_check_branch
      %61 = sbr.rel (0) target = $region57
    $region56: #{_forward_impl.1} parent=1 // pred_region
      _
    $region57: #{_forward_impl.1} parent=1 // pred_fallthru
      _
    // Predicated region
    $region58: #{_forward_impl.1} parent=1 // pred_check
      _
    $region59: #{_forward_impl.1} parent=1 // pred_check_branch
      %63 = sbr.rel (0) target = $region61
    $region60: #{_forward_impl.1} parent=1 // pred_region
      %65 = dma.done [#allocation5], 6144
    $region61: #{_forward_impl.1} parent=1 // pred_fallthru
      _
    %v66 = vld [vmem:[%s1] sm:$0xff]
    %v67 = vld [vmem:[%s1 + $0x8] sm:$0xff]
    %v68 = vlaneseq
    %v69 = vand.u32 %v68, 127
    %70 = vset.pattern.permute.xlu0 0
    %71 = vperm.xlu0 %70, %v66
    %v72 = vpop.permute.xlu0 %71
    %73 = vset.pattern.permute.xlu0 0
    %74 = vperm.xlu0 %73, %v67
    %v75 = vpop.permute.xlu0 %74
    %vm76 = vcmp.eq.s32.totalorder %v72, %v69
    %vm77 = vcmp.eq.s32.totalorder %v75, %v69
    %v78 = vsel %vm76, 1, 0
    %v79 = vsel %vm77, 1, 0
    %v80 = vcvt.s32.f32 %v78
    %v81 = vcvt.s32.f32 %v79
    %82 = vset.pattern.permute.xlu0 1
    %83 = vperm.xlu0 %82, %v66
    %v84 = vpop.permute.xlu0 %83
    %85 = vset.pattern.permute.xlu0 1
    %86 = vperm.xlu0 %85, %v67
    %v87 = vpop.permute.xlu0 %86
    %vm88 = vcmp.eq.s32.totalorder %v84, %v69
    %vm89 = vcmp.eq.s32.totalorder %v87, %v69
    %v90 = vsel %vm88, 1, 0
    %v91 = vsel %vm89, 1, 0
    %v92 = vcvt.s32.f32 %v90
    %v93 = vcvt.s32.f32 %v91
    %94 = vset.pattern.permute.xlu0 2
    %95 = vperm.xlu0 %94, %v66
    %v96 = vpop.permute.xlu0 %95
    %97 = vset.pattern.permute.xlu0 2
    %98 = vperm.xlu0 %97, %v67
    %v99 = vpop.permute.xlu0 %98
    %vm100 = vcmp.eq.s32.totalorder %v96, %v69
    %vm101 = vcmp.eq.s32.totalorder %v99, %v69
    %v102 = vsel %vm100, 1, 0
    %v103 = vsel %vm101, 1, 0
    %v104 = vcvt.s32.f32 %v102
    %v105 = vcvt.s32.f32 %v103
    %106 = vset.pattern.permute.xlu0 3
    %107 = vperm.xlu0 %106, %v66
    %v108 = vpop.permute.xlu0 %107
    %109 = vset.pattern.permute.xlu0 3
    %110 = vperm.xlu0 %109, %v67
    %v111 = vpop.permute.xlu0 %110
    %vm112 = vcmp.eq.s32.totalorder %v108, %v69
    %vm113 = vcmp.eq.s32.totalorder %v111, %v69
    %v114 = vsel %vm112, 1, 0
    %v115 = vsel %vm113, 1, 0
    %v116 = vcvt.s32.f32 %v114
    %v117 = vcvt.s32.f32 %v115
    %118 = vset.pattern.permute.xlu0 4
    %119 = vperm.xlu0 %118, %v66
    %v120 = vpop.permute.xlu0 %119
    %121 = vset.pattern.permute.xlu0 4
    %122 = vperm.xlu0 %121, %v67
    %v123 = vpop.permute.xlu0 %122
    %vm124 = vcmp.eq.s32.totalorder %v120, %v69
    %vm125 = vcmp.eq.s32.totalorder %v123, %v69
    %v126 = vsel %vm124, 1, 0
    %v127 = vsel %vm125, 1, 0
    %v128 = vcvt.s32.f32 %v126
    %v129 = vcvt.s32.f32 %v127
    %130 = vset.pattern.permute.xlu0 5
    %131 = vperm.xlu0 %130, %v66
    %v132 = vpop.permute.xlu0 %131
    %133 = vset.pattern.permute.xlu0 5
    %134 = vperm.xlu0 %133, %v67
    %v135 = vpop.permute.xlu0 %134
    %vm136 = vcmp.eq.s32.totalorder %v132, %v69
    %vm137 = vcmp.eq.s32.totalorder %v135, %v69
    %v138 = vsel %vm136, 1, 0
    %v139 = vsel %vm137, 1, 0
    %v140 = vcvt.s32.f32 %v138
    %v141 = vcvt.s32.f32 %v139
    %142 = vset.pattern.permute.xlu0 6
    %143 = vperm.xlu0 %142, %v66
    %v144 = vpop.permute.xlu0 %143
    %145 = vset.pattern.permute.xlu0 6
    %146 = vperm.xlu0 %145, %v67
    %v147 = vpop.permute.xlu0 %146
    %vm148 = vcmp.eq.s32.totalorder %v144, %v69
    %vm149 = vcmp.eq.s32.totalorder %v147, %v69
    %v150 = vsel %vm148, 1, 0
    %v151 = vsel %vm149, 1, 0
    %v152 = vcvt.s32.f32 %v150
    %v153 = vcvt.s32.f32 %v151
    %154 = vset.pattern.permute.xlu0 7
    %155 = vperm.xlu0 %154, %v66
    %v156 = vpop.permute.xlu0 %155
    %157 = vset.pattern.permute.xlu0 7
    %158 = vperm.xlu0 %157, %v67
    %v159 = vpop.permute.xlu0 %158
    %vm160 = vcmp.eq.s32.totalorder %v156, %v69
    %vm161 = vcmp.eq.s32.totalorder %v159, %v69
    %v162 = vsel %vm160, 1, 0
    %v163 = vsel %vm161, 1, 0
    %v164 = vcvt.s32.f32 %v162
    %v165 = vcvt.s32.f32 %v163
    %v166 = vld [vmem:[%s2] sm:$0xff]
    %v167 = vld [vmem:[%s2 + $0x8] sm:$0xff]
    %v168 = vld [vmem:[%s2 + $0x10] sm:$0xff]
    %v169 = vld [vmem:[%s2 + $0x18] sm:$0xff]
    %v170 = vld [vmem:[%s2 + $0x20] sm:$0xff]
    %v171 = vld [vmem:[%s2 + $0x28] sm:$0xff]
    %v172 = vld [vmem:[%s2 + $0x30] sm:$0xff]
    %v173 = vld [vmem:[%s2 + $0x38] sm:$0xff]
    %v174 = vld [vmem:[%s2 + $0x40] sm:$0xff]
    %v175 = vld [vmem:[%s2 + $0x48] sm:$0xff]
    %v176 = vld [vmem:[%s2 + $0x50] sm:$0xff]
    %v177 = vld [vmem:[%s2 + $0x58] sm:$0xff]
    %v178 = vld [vmem:[%s3] sm:$0x7]
    %v179 = vld [vmem:[%s4] sm:$0xff]
    %v180 = vld [vmem:[%s4 + $0x8] sm:$0xff]
    %v181 = vld [vmem:[%s4 + $0x10] sm:$0xff]
    %v182 = vld [vmem:[%s4 + $0x18] sm:$0xff]
    %v183 = vld [vmem:[%s4 + $0x20] sm:$0xff]
    %v184 = vld [vmem:[%s4 + $0x28] sm:$0xff]
    %v185 = vld [vmem:[%s4 + $0x30] sm:$0xff]
    %v186 = vld [vmem:[%s4 + $0x38] sm:$0xff]
    %v187 = vld [vmem:[%s4 + $0x40] sm:$0xff]
    %v188 = vld [vmem:[%s4 + $0x48] sm:$0xff]
    %v189 = vld [vmem:[%s4 + $0x50] sm:$0xff]
    %v190 = vld [vmem:[%s4 + $0x58] sm:$0xff]
    %v191 = vld [vmem:[%s4 + $0x60] sm:$0xff]
    %v192 = vld [vmem:[%s4 + $0x68] sm:$0xff]
    %v193 = vld [vmem:[%s4 + $0x70] sm:$0xff]
    %v194 = vld [vmem:[%s4 + $0x78] sm:$0xff]
    %v195 = vld [vmem:[%s4 + $0x80] sm:$0xff]
    %v196 = vld [vmem:[%s4 + $0x88] sm:$0xff]
    %v197 = vld [vmem:[%s4 + $0x90] sm:$0xff]
    %v198 = vld [vmem:[%s4 + $0x98] sm:$0xff]
    %v199 = vld [vmem:[%s4 + $0xa0] sm:$0xff]
    %v200 = vld [vmem:[%s4 + $0xa8] sm:$0xff]
    %v201 = vld [vmem:[%s4 + $0xb0] sm:$0xff]
    %v202 = vld [vmem:[%s4 + $0xb8] sm:$0xff]
    %v203 = vld [vmem:[%s4 + $0xc0] sm:$0xff]
    %v204 = vld [vmem:[%s4 + $0xc8] sm:$0xff]
    %v205 = vld [vmem:[%s4 + $0xd0] sm:$0xff]
    %v206 = vld [vmem:[%s4 + $0xd8] sm:$0xff]
    %v207 = vld [vmem:[%s4 + $0xe0] sm:$0xff]
    %v208 = vld [vmem:[%s4 + $0xe8] sm:$0xff]
    %v209 = vld [vmem:[%s4 + $0xf0] sm:$0xff]
    %v210 = vld [vmem:[%s4 + $0xf8] sm:$0xff]
    %v211 = vld [vmem:[%s4 + $0x100] sm:$0xff]
    %v212 = vld [vmem:[%s4 + $0x108] sm:$0xff]
    %v213 = vld [vmem:[%s4 + $0x110] sm:$0xff]
    %v214 = vld [vmem:[%s4 + $0x118] sm:$0xff]
    %v215 = vld [vmem:[%s4 + $0x120] sm:$0xff]
    %v216 = vld [vmem:[%s4 + $0x128] sm:$0xff]
    %v217 = vld [vmem:[%s4 + $0x130] sm:$0xff]
    %v218 = vld [vmem:[%s4 + $0x138] sm:$0xff]
    %v219 = vld [vmem:[%s4 + $0x140] sm:$0xff]
    %v220 = vld [vmem:[%s4 + $0x148] sm:$0xff]
    %v221 = vld [vmem:[%s4 + $0x150] sm:$0xff]
    %v222 = vld [vmem:[%s4 + $0x158] sm:$0xff]
    %v223 = vld [vmem:[%s4 + $0x160] sm:$0xff]
    %v224 = vld [vmem:[%s4 + $0x168] sm:$0xff]
    %v225 = vld [vmem:[%s4 + $0x170] sm:$0xff]
    %v226 = vld [vmem:[%s4 + $0x178] sm:$0xff]
    %v227 = vld [vmem:[%s5] sm:$0x7]
    %v229 = vperm.slane %v178, 0
    %v230 = vperm.slane %v178, 1
    %v231 = vperm.slane %v178, 2
    %vm235 = vcmask 261120
    %v237 = vsel %vm235, %v80, 0
    %v240 = vsel %vm235, %v81, 0
    %242 = vmatpush.msra.mxu0 0.0
    %243 = vmatpush.msra.mxu0 0.0
    %244 = vmatpush.msra.mxu0 0.0
    %245 = vmatpush.msra.mxu0 0.0
    %246 = vmatpush.msra.mxu0 0.0
    %247 = vmatpush.msra.mxu0 0.0
    %248 = vmatpush.msra.mxu0 0.0
    %249 = vmatpush.msra.mxu0 0.0
    %250 = vmatpush.msra.mxu0 0.0
    %251 = vmatpush.msra.mxu0 0.0
    %252 = vmatpush.msra.mxu0 0.0
    %253 = vmatpush.msra.mxu0 0.0
    %254 = vmatpush.msra.mxu0 %v175
    %255 = vmatpush.msra.mxu0 %v172
    %256 = vmatpush.msra.mxu0 %v169
    %257 = vmatpush.msra.mxu0 %v166
    %258 = vmatmul.f32.gmra.mxu0 %v237
    %v259 = vpop.f32.mrf.mxu0
    %v260 = vadd.f32 %v229, %v259
    %261 = vmatmul.f32.gmra.mxu0 %v240
    %v262 = vpop.f32.mrf.mxu0
    %v263 = vadd.f32 %v229, %v262
    %264 = vdwg.mxu0
    %265 = vmatpush.msra.mxu0 0.0
    %266 = vmatpush.msra.mxu0 0.0
    %267 = vmatpush.msra.mxu0 0.0
    %268 = vmatpush.msra.mxu0 0.0
    %269 = vmatpush.msra.mxu0 0.0
    %270 = vmatpush.msra.mxu0 0.0
    %271 = vmatpush.msra.mxu0 0.0
    %272 = vmatpush.msra.mxu0 0.0
    %273 = vmatpush.msra.mxu0 0.0
    %274 = vmatpush.msra.mxu0 0.0
    %275 = vmatpush.msra.mxu0 0.0
    %276 = vmatpush.msra.mxu0 0.0
    %277 = vmatpush.msra.mxu0 %v176
    %278 = vmatpush.msra.mxu0 %v173
    %279 = vmatpush.msra.mxu0 %v170
    %280 = vmatpush.msra.mxu0 %v167
    %281 = vmatmul.f32.gmra.mxu0 %v237
    %v282 = vpop.f32.mrf.mxu0
    %v283 = vadd.f32 %v230, %v282
    %284 = vmatmul.f32.gmra.mxu0 %v240
    %v285 = vpop.f32.mrf.mxu0
    %v286 = vadd.f32 %v230, %v285
    %287 = vdwg.mxu0
    %288 = vmatpush.msra.mxu0 0.0
    %289 = vmatpush.msra.mxu0 0.0
    %290 = vmatpush.msra.mxu0 0.0
    %291 = vmatpush.msra.mxu0 0.0
    %292 = vmatpush.msra.mxu0 0.0
    %293 = vmatpush.msra.mxu0 0.0
    %294 = vmatpush.msra.mxu0 0.0
    %295 = vmatpush.msra.mxu0 0.0
    %296 = vmatpush.msra.mxu0 0.0
    %297 = vmatpush.msra.mxu0 0.0
    %298 = vmatpush.msra.mxu0 0.0
    %299 = vmatpush.msra.mxu0 0.0
    %300 = vmatpush.msra.mxu0 %v177
    %301 = vmatpush.msra.mxu0 %v174
    %302 = vmatpush.msra.mxu0 %v171
    %303 = vmatpush.msra.mxu0 %v168
    %304 = vmatmul.f32.gmra.mxu0 %v237
    %v305 = vpop.f32.mrf.mxu0
    %v306 = vadd.f32 %v231, %v305
    %307 = vmatmul.f32.gmra.mxu0 %v240
    %v308 = vpop.f32.mrf.mxu0
    %v309 = vadd.f32 %v231, %v308
    %310 = vdwg.mxu0
    %v312 = vperm.slane %v227, 0
    %v313 = vperm.slane %v227, 1
    %v314 = vperm.slane %v227, 2
    %318 = vmatpush.msra.mxu0 %v224
    %319 = vmatpush.msra.mxu0 %v221
    %320 = vmatpush.msra.mxu0 %v218
    %321 = vmatpush.msra.mxu0 %v215
    %322 = vmatpush.msra.mxu0 %v212
    %323 = vmatpush.msra.mxu0 %v209
    %324 = vmatpush.msra.mxu0 %v206
    %325 = vmatpush.msra.mxu0 %v203
    %326 = vmatpush.msra.mxu0 %v200
    %327 = vmatpush.msra.mxu0 %v197
    %328 = vmatpush.msra.mxu0 %v194
    %329 = vmatpush.msra.mxu0 %v191
    %330 = vmatpush.msra.mxu0 %v188
    %331 = vmatpush.msra.mxu0 %v185
    %332 = vmatpush.msra.mxu0 %v182
    %333 = vmatpush.msra.mxu0 %v179
    %334 = vmatmul.f32.gmra.mxu0 0.0
    %v335 = vpop.f32.mrf.mxu0
    %v336 = vadd.f32 %v312, %v335
    %337 = vmatmul.f32.gmra.mxu0 0.0
    %v338 = vpop.f32.mrf.mxu0
    %v339 = vadd.f32 %v312, %v338
    %340 = vdwg.mxu0
    %341 = vmatpush.msra.mxu0 %v225
    %342 = vmatpush.msra.mxu0 %v222
    %343 = vmatpush.msra.mxu0 %v219
    %344 = vmatpush.msra.mxu0 %v216
    %345 = vmatpush.msra.mxu0 %v213
    %346 = vmatpush.msra.mxu0 %v210
    %347 = vmatpush.msra.mxu0 %v207
    %348 = vmatpush.msra.mxu0 %v204
    %349 = vmatpush.msra.mxu0 %v201
    %350 = vmatpush.msra.mxu0 %v198
    %351 = vmatpush.msra.mxu0 %v195
    %352 = vmatpush.msra.mxu0 %v192
    %353 = vmatpush.msra.mxu0 %v189
    %354 = vmatpush.msra.mxu0 %v186
    %355 = vmatpush.msra.mxu0 %v183
    %356 = vmatpush.msra.mxu0 %v180
    %357 = vmatmul.f32.gmra.mxu0 0.0
    %v358 = vpop.f32.mrf.mxu0
    %v359 = vadd.f32 %v313, %v358
    %360 = vmatmul.f32.gmra.mxu0 0.0
    %v361 = vpop.f32.mrf.mxu0
    %v362 = vadd.f32 %v313, %v361
    %363 = vdwg.mxu0
    %364 = vmatpush.msra.mxu0 %v226
    %365 = vmatpush.msra.mxu0 %v223
    %366 = vmatpush.msra.mxu0 %v220
    %367 = vmatpush.msra.mxu0 %v217
    %368 = vmatpush.msra.mxu0 %v214
    %369 = vmatpush.msra.mxu0 %v211
    %370 = vmatpush.msra.mxu0 %v208
    %371 = vmatpush.msra.mxu0 %v205
    %372 = vmatpush.msra.mxu0 %v202
    %373 = vmatpush.msra.mxu0 %v199
    %374 = vmatpush.msra.mxu0 %v196
    %375 = vmatpush.msra.mxu0 %v193
    %376 = vmatpush.msra.mxu0 %v190
    %377 = vmatpush.msra.mxu0 %v187
    %378 = vmatpush.msra.mxu0 %v184
    %379 = vmatpush.msra.mxu0 %v181
    %380 = vmatmul.f32.gmra.mxu0 0.0
    %v381 = vpop.f32.mrf.mxu0
    %v382 = vadd.f32 %v314, %v381
    %383 = vmatmul.f32.gmra.mxu0 0.0
    %v384 = vpop.f32.mrf.mxu0
    %v385 = vadd.f32 %v314, %v384
    %386 = vdwg.mxu0
    %v387 = vadd.f32 %v260, %v336
    %v388 = vadd.f32 %v263, %v339
    %v389 = vxor.u32 %v387, 2147483648
    %v390 = vxor.u32 %v388, 2147483648
    %v391 = vmul.f32 %v389, 1.442695
    %v392 = vpow.pop %v391
    %v393 = vmul.f32 %v390, 1.442695
    %v394 = vpow.pop %v393
    %v395 = vadd.f32 %v392, 1.0
    %v396 = vadd.f32 %v394, 1.0
    %v397 = vrcp.pop %v395
    %v398 = vmul.f32 %v395, %v397
    %v399 = vsub.f32 1.0, %v398
    %v400 = vmul.f32 %v397, %v399
    %v401 = vadd.f32 %v397, %v400
    %vm402 = vweird.f32 %v395
    %vm403 = vweird.f32 %v397
    %vm404 = vmor %vm402, %vm403
    %v405 = vsel %vm404, %v397, %v401
    %v406 = vand.u32 2147483647, %v395
    %vm407 = vcmp.eq.f32.partialorder %v406, 8.507059e+37
    %v408 = vand.u32 %v395, 2147483648
    %v409 = vor.u32 1.1754944e-38, %v408
    %v410 = vsel %vm407, %v409, %v405
    %v411 = vmul.f32 1.0, %v410
    %v412 = vrcp.pop %v396
    %v413 = vmul.f32 %v396, %v412
    %v414 = vsub.f32 1.0, %v413
    %v415 = vmul.f32 %v412, %v414
    %v416 = vadd.f32 %v412, %v415
    %vm417 = vweird.f32 %v396
    %vm418 = vweird.f32 %v412
    %vm419 = vmor %vm417, %vm418
    %v420 = vsel %vm419, %v412, %v416
    %v421 = vand.u32 2147483647, %v396
    %vm422 = vcmp.eq.f32.partialorder %v421, 8.507059e+37
    %v423 = vand.u32 %v396, 2147483648
    %v424 = vor.u32 1.1754944e-38, %v423
    %v425 = vsel %vm422, %v424, %v420
    %v426 = vmul.f32 1.0, %v425
    %v427 = vadd.f32 %v283, %v359
    %v428 = vadd.f32 %v286, %v362
    %v429 = vxor.u32 %v427, 2147483648
    %v430 = vxor.u32 %v428, 2147483648
    %v431 = vmul.f32 %v429, 1.442695
    %v432 = vpow.pop %v431
    %v433 = vmul.f32 %v430, 1.442695
    %v434 = vpow.pop %v433
    %v435 = vadd.f32 %v432, 1.0
    %v436 = vadd.f32 %v434, 1.0
    %v437 = vrcp.pop %v435
    %v438 = vmul.f32 %v435, %v437
    %v439 = vsub.f32 1.0, %v438
    %v440 = vmul.f32 %v437, %v439
    %v441 = vadd.f32 %v437, %v440
    %vm442 = vweird.f32 %v435
    %vm443 = vweird.f32 %v437
    %vm444 = vmor %vm442, %vm443
    %v445 = vsel %vm444, %v437, %v441
    %v446 = vand.u32 2147483647, %v435
    %vm447 = vcmp.eq.f32.partialorder %v446, 8.507059e+37
    %v448 = vand.u32 %v435, 2147483648
    %v449 = vor.u32 1.1754944e-38, %v448
    %v450 = vsel %vm447, %v449, %v445
    %v451 = vmul.f32 1.0, %v450
    %v452 = vrcp.pop %v436
    %v453 = vmul.f32 %v436, %v452
    %v454 = vsub.f32 1.0, %v453
    %v455 = vmul.f32 %v452, %v454
    %v456 = vadd.f32 %v452, %v455
    %vm457 = vweird.f32 %v436
    %vm458 = vweird.f32 %v452
    %vm459 = vmor %vm457, %vm458
    %v460 = vsel %vm459, %v452, %v456
    %v461 = vand.u32 2147483647, %v436
    %vm462 = vcmp.eq.f32.partialorder %v461, 8.507059e+37
    %v463 = vand.u32 %v436, 2147483648
    %v464 = vor.u32 1.1754944e-38, %v463
    %v465 = vsel %vm462, %v464, %v460
    %v466 = vmul.f32 1.0, %v465
    %v467 = vmul.f32 %v411, %v382
    %v468 = vmul.f32 %v426, %v385
    %v469 = vadd.f32 %v306, %v467
    %v470 = vadd.f32 %v309, %v468
    %v471 = vtanh.pop %v469
    %v472 = vtanh.pop %v470
    %v473 = vsub.f32 1.0, %v451
    %v474 = vsub.f32 1.0, %v466
    %v475 = vmul.f32 %v473, %v471
    %v476 = vmul.f32 %v474, %v472
    %v477 = vmul.f32 %v451, 0.0
    %v478 = vmul.f32 %v466, 0.0
    %v479 = vadd.f32 %v475, %v477
    %v480 = vadd.f32 %v476, %v478
    %v482 = vsel %vm235, %v92, 0
    %v485 = vsel %vm235, %v93, 0
    %487 = vmatpush.msra.mxu0 0.0
    %488 = vmatpush.msra.mxu0 0.0
    %489 = vmatpush.msra.mxu0 0.0
    %490 = vmatpush.msra.mxu0 0.0
    %491 = vmatpush.msra.mxu0 0.0
    %492 = vmatpush.msra.mxu0 0.0
    %493 = vmatpush.msra.mxu0 0.0
    %494 = vmatpush.msra.mxu0 0.0
    %495 = vmatpush.msra.mxu0 0.0
    %496 = vmatpush.msra.mxu0 0.0
    %497 = vmatpush.msra.mxu0 0.0
    %498 = vmatpush.msra.mxu0 0.0
    %499 = vmatpush.msra.mxu0 %v175
    %500 = vmatpush.msra.mxu0 %v172
    %501 = vmatpush.msra.mxu0 %v169
    %502 = vmatpush.msra.mxu0 %v166
    %503 = vmatmul.f32.gmra.mxu0 %v482
    %v504 = vpop.f32.mrf.mxu0
    %v505 = vadd.f32 %v229, %v504
    %506 = vmatmul.f32.gmra.mxu0 %v485
    %v507 = vpop.f32.mrf.mxu0
    %v508 = vadd.f32 %v229, %v507
    %509 = vdwg.mxu0
    %510 = vmatpush.msra.mxu0 0.0
    %511 = vmatpush.msra.mxu0 0.0
    %512 = vmatpush.msra.mxu0 0.0
    %513 = vmatpush.msra.mxu0 0.0
    %514 = vmatpush.msra.mxu0 0.0
    %515 = vmatpush.msra.mxu0 0.0
    %516 = vmatpush.msra.mxu0 0.0
    %517 = vmatpush.msra.mxu0 0.0
    %518 = vmatpush.msra.mxu0 0.0
    %519 = vmatpush.msra.mxu0 0.0
    %520 = vmatpush.msra.mxu0 0.0
    %521 = vmatpush.msra.mxu0 0.0
    %522 = vmatpush.msra.mxu0 %v176
    %523 = vmatpush.msra.mxu0 %v173
    %524 = vmatpush.msra.mxu0 %v170
    %525 = vmatpush.msra.mxu0 %v167
    %526 = vmatmul.f32.gmra.mxu0 %v482
    %v527 = vpop.f32.mrf.mxu0
    %v528 = vadd.f32 %v230, %v527
    %529 = vmatmul.f32.gmra.mxu0 %v485
    %v530 = vpop.f32.mrf.mxu0
    %v531 = vadd.f32 %v230, %v530
    %532 = vdwg.mxu0
    %533 = vmatpush.msra.mxu0 0.0
    %534 = vmatpush.msra.mxu0 0.0
    %535 = vmatpush.msra.mxu0 0.0
    %536 = vmatpush.msra.mxu0 0.0
    %537 = vmatpush.msra.mxu0 0.0
    %538 = vmatpush.msra.mxu0 0.0
    %539 = vmatpush.msra.mxu0 0.0
    %540 = vmatpush.msra.mxu0 0.0
    %541 = vmatpush.msra.mxu0 0.0
    %542 = vmatpush.msra.mxu0 0.0
    %543 = vmatpush.msra.mxu0 0.0
    %544 = vmatpush.msra.mxu0 0.0
    %545 = vmatpush.msra.mxu0 %v177
    %546 = vmatpush.msra.mxu0 %v174
    %547 = vmatpush.msra.mxu0 %v171
    %548 = vmatpush.msra.mxu0 %v168
    %549 = vmatmul.f32.gmra.mxu0 %v482
    %v550 = vpop.f32.mrf.mxu0
    %v551 = vadd.f32 %v231, %v550
    %552 = vmatmul.f32.gmra.mxu0 %v485
    %v553 = vpop.f32.mrf.mxu0
    %v554 = vadd.f32 %v231, %v553
    %555 = vdwg.mxu0
    %556 = vmatpush.msra.mxu0 %v224
    %557 = vmatpush.msra.mxu0 %v221
    %558 = vmatpush.msra.mxu0 %v218
    %559 = vmatpush.msra.mxu0 %v215
    %560 = vmatpush.msra.mxu0 %v212
    %561 = vmatpush.msra.mxu0 %v209
    %562 = vmatpush.msra.mxu0 %v206
    %563 = vmatpush.msra.mxu0 %v203
    %564 = vmatpush.msra.mxu0 %v200
    %565 = vmatpush.msra.mxu0 %v197
    %566 = vmatpush.msra.mxu0 %v194
    %567 = vmatpush.msra.mxu0 %v191
    %568 = vmatpush.msra.mxu0 %v188
    %569 = vmatpush.msra.mxu0 %v185
    %570 = vmatpush.msra.mxu0 %v182
    %571 = vmatpush.msra.mxu0 %v179
    %572 = vmatmul.f32.gmra.mxu0 %v479
    %v573 = vpop.f32.mrf.mxu0
    %v574 = vadd.f32 %v312, %v573
    %575 = vmatmul.f32.gmra.mxu0 %v480
    %v576 = vpop.f32.mrf.mxu0
    %v577 = vadd.f32 %v312, %v576
    %578 = vdwg.mxu0
    %579 = vmatpush.msra.mxu0 %v225
    %580 = vmatpush.msra.mxu0 %v222
    %581 = vmatpush.msra.mxu0 %v219
    %582 = vmatpush.msra.mxu0 %v216
    %583 = vmatpush.msra.mxu0 %v213
    %584 = vmatpush.msra.mxu0 %v210
    %585 = vmatpush.msra.mxu0 %v207
    %586 = vmatpush.msra.mxu0 %v204
    %587 = vmatpush.msra.mxu0 %v201
    %588 = vmatpush.msra.mxu0 %v198
    %589 = vmatpush.msra.mxu0 %v195
    %590 = vmatpush.msra.mxu0 %v192
    %591 = vmatpush.msra.mxu0 %v189
    %592 = vmatpush.msra.mxu0 %v186
    %593 = vmatpush.msra.mxu0 %v183
    %594 = vmatpush.msra.mxu0 %v180
    %595 = vmatmul.f32.gmra.mxu0 %v479
    %v596 = vpop.f32.mrf.mxu0
    %v597 = vadd.f32 %v313, %v596
    %598 = vmatmul.f32.gmra.mxu0 %v480
    %v599 = vpop.f32.mrf.mxu0
    %v600 = vadd.f32 %v313, %v599
    %601 = vdwg.mxu0
    %602 = vmatpush.msra.mxu0 %v226
    %603 = vmatpush.msra.mxu0 %v223
    %604 = vmatpush.msra.mxu0 %v220
    %605 = vmatpush.msra.mxu0 %v217
    %606 = vmatpush.msra.mxu0 %v214
    %607 = vmatpush.msra.mxu0 %v211
    %608 = vmatpush.msra.mxu0 %v208
    %609 = vmatpush.msra.mxu0 %v205
    %610 = vmatpush.msra.mxu0 %v202
    %611 = vmatpush.msra.mxu0 %v199
    %612 = vmatpush.msra.mxu0 %v196
    %613 = vmatpush.msra.mxu0 %v193
    %614 = vmatpush.msra.mxu0 %v190
    %615 = vmatpush.msra.mxu0 %v187
    %616 = vmatpush.msra.mxu0 %v184
    %617 = vmatpush.msra.mxu0 %v181
    %618 = vmatmul.f32.gmra.mxu0 %v479
    %v619 = vpop.f32.mrf.mxu0
    %v620 = vadd.f32 %v314, %v619
    %621 = vmatmul.f32.gmra.mxu0 %v480
    %v622 = vpop.f32.mrf.mxu0
    %v623 = vadd.f32 %v314, %v622
    %624 = vdwg.mxu0
    %v625 = vadd.f32 %v505, %v574
    %v626 = vadd.f32 %v508, %v577
    %v627 = vxor.u32 %v625, 2147483648
    %v628 = vxor.u32 %v626, 2147483648
    %v629 = vmul.f32 %v627, 1.442695
    %v630 = vpow.pop %v629
    %v631 = vmul.f32 %v628, 1.442695
    %v632 = vpow.pop %v631
    %v633 = vadd.f32 %v630, 1.0
    %v634 = vadd.f32 %v632, 1.0
    %v635 = vrcp.pop %v633
    %v636 = vmul.f32 %v633, %v635
    %v637 = vsub.f32 1.0, %v636
    %v638 = vmul.f32 %v635, %v637
    %v639 = vadd.f32 %v635, %v638
    %vm640 = vweird.f32 %v633
    %vm641 = vweird.f32 %v635
    %vm642 = vmor %vm640, %vm641
    %v643 = vsel %vm642, %v635, %v639
    %v644 = vand.u32 2147483647, %v633
    %vm645 = vcmp.eq.f32.partialorder %v644, 8.507059e+37
    %v646 = vand.u32 %v633, 2147483648
    %v647 = vor.u32 1.1754944e-38, %v646
    %v648 = vsel %vm645, %v647, %v643
    %v649 = vmul.f32 1.0, %v648
    %v650 = vrcp.pop %v634
    %v651 = vmul.f32 %v634, %v650
    %v652 = vsub.f32 1.0, %v651
    %v653 = vmul.f32 %v650, %v652
    %v654 = vadd.f32 %v650, %v653
    %vm655 = vweird.f32 %v634
    %vm656 = vweird.f32 %v650
    %vm657 = vmor %vm655, %vm656
    %v658 = vsel %vm657, %v650, %v654
    %v659 = vand.u32 2147483647, %v634
    %vm660 = vcmp.eq.f32.partialorder %v659, 8.507059e+37
    %v661 = vand.u32 %v634, 2147483648
    %v662 = vor.u32 1.1754944e-38, %v661
    %v663 = vsel %vm660, %v662, %v658
    %v664 = vmul.f32 1.0, %v663
    %v665 = vadd.f32 %v528, %v597
    %v666 = vadd.f32 %v531, %v600
    %v667 = vxor.u32 %v665, 2147483648
    %v668 = vxor.u32 %v666, 2147483648
    %v669 = vmul.f32 %v667, 1.442695
    %v670 = vpow.pop %v669
    %v671 = vmul.f32 %v668, 1.442695
    %v672 = vpow.pop %v671
    %v673 = vadd.f32 %v670, 1.0
    %v674 = vadd.f32 %v672, 1.0
    %v675 = vrcp.pop %v673
    %v676 = vmul.f32 %v673, %v675
    %v677 = vsub.f32 1.0, %v676
    %v678 = vmul.f32 %v675, %v677
    %v679 = vadd.f32 %v675, %v678
    %vm680 = vweird.f32 %v673
    %vm681 = vweird.f32 %v675
    %vm682 = vmor %vm680, %vm681
    %v683 = vsel %vm682, %v675, %v679
    %v684 = vand.u32 2147483647, %v673
    %vm685 = vcmp.eq.f32.partialorder %v684, 8.507059e+37
    %v686 = vand.u32 %v673, 2147483648
    %v687 = vor.u32 1.1754944e-38, %v686
    %v688 = vsel %vm685, %v687, %v683
    %v689 = vmul.f32 1.0, %v688
    %v690 = vrcp.pop %v674
    %v691 = vmul.f32 %v674, %v690
    %v692 = vsub.f32 1.0, %v691
    %v693 = vmul.f32 %v690, %v692
    %v694 = vadd.f32 %v690, %v693
    %vm695 = vweird.f32 %v674
    %vm696 = vweird.f32 %v690
    %vm697 = vmor %vm695, %vm696
    %v698 = vsel %vm697, %v690, %v694
    %v699 = vand.u32 2147483647, %v674
    %vm700 = vcmp.eq.f32.partialorder %v699, 8.507059e+37
    %v701 = vand.u32 %v674, 2147483648
    %v702 = vor.u32 1.1754944e-38, %v701
    %v703 = vsel %vm700, %v702, %v698
    %v704 = vmul.f32 1.0, %v703
    %v705 = vmul.f32 %v649, %v620
    %v706 = vmul.f32 %v664, %v623
    %v707 = vadd.f32 %v551, %v705
    %v708 = vadd.f32 %v554, %v706
    %v709 = vtanh.pop %v707
    %v710 = vtanh.pop %v708
    %v711 = vsub.f32 1.0, %v689
    %v712 = vsub.f32 1.0, %v704
    %v713 = vmul.f32 %v711, %v709
    %v714 = vmul.f32 %v712, %v710
    %v715 = vmul.f32 %v689, %v479
    %v716 = vmul.f32 %v704, %v480
    %v717 = vadd.f32 %v713, %v715
    %v718 = vadd.f32 %v714, %v716
    %v720 = vsel %vm235, %v104, 0
    %v723 = vsel %vm235, %v105, 0
    %725 = vmatpush.msra.mxu0 0.0
    %726 = vmatpush.msra.mxu0 0.0
    %727 = vmatpush.msra.mxu0 0.0
    %728 = vmatpush.msra.mxu0 0.0
    %729 = vmatpush.msra.mxu0 0.0
    %730 = vmatpush.msra.mxu0 0.0
    %731 = vmatpush.msra.mxu0 0.0
    %732 = vmatpush.msra.mxu0 0.0
    %733 = vmatpush.msra.mxu0 0.0
    %734 = vmatpush.msra.mxu0 0.0
    %735 = vmatpush.msra.mxu0 0.0
    %736 = vmatpush.msra.mxu0 0.0
    %737 = vmatpush.msra.mxu0 %v175
    %738 = vmatpush.msra.mxu0 %v172
    %739 = vmatpush.msra.mxu0 %v169
    %740 = vmatpush.msra.mxu0 %v166
    %741 = vmatmul.f32.gmra.mxu0 %v720
    %v742 = vpop.f32.mrf.mxu0
    %v743 = vadd.f32 %v229, %v742
    %744 = vmatmul.f32.gmra.mxu0 %v723
    %v745 = vpop.f32.mrf.mxu0
    %v746 = vadd.f32 %v229, %v745
    %747 = vdwg.mxu0
    %748 = vmatpush.msra.mxu0 0.0
    %749 = vmatpush.msra.mxu0 0.0
    %750 = vmatpush.msra.mxu0 0.0
    %751 = vmatpush.msra.mxu0 0.0
    %752 = vmatpush.msra.mxu0 0.0
    %753 = vmatpush.msra.mxu0 0.0
    %754 = vmatpush.msra.mxu0 0.0
    %755 = vmatpush.msra.mxu0 0.0
    %756 = vmatpush.msra.mxu0 0.0
    %757 = vmatpush.msra.mxu0 0.0
    %758 = vmatpush.msra.mxu0 0.0
    %759 = vmatpush.msra.mxu0 0.0
    %760 = vmatpush.msra.mxu0 %v176
    %761 = vmatpush.msra.mxu0 %v173
    %762 = vmatpush.msra.mxu0 %v170
    %763 = vmatpush.msra.mxu0 %v167
    %764 = vmatmul.f32.gmra.mxu0 %v720
    %v765 = vpop.f32.mrf.mxu0
    %v766 = vadd.f32 %v230, %v765
    %767 = vmatmul.f32.gmra.mxu0 %v723
    %v768 = vpop.f32.mrf.mxu0
    %v769 = vadd.f32 %v230, %v768
    %770 = vdwg.mxu0
    %771 = vmatpush.msra.mxu0 0.0
    %772 = vmatpush.msra.mxu0 0.0
    %773 = vmatpush.msra.mxu0 0.0
    %774 = vmatpush.msra.mxu0 0.0
    %775 = vmatpush.msra.mxu0 0.0
    %776 = vmatpush.msra.mxu0 0.0
    %777 = vmatpush.msra.mxu0 0.0
    %778 = vmatpush.msra.mxu0 0.0
    %779 = vmatpush.msra.mxu0 0.0
    %780 = vmatpush.msra.mxu0 0.0
    %781 = vmatpush.msra.mxu0 0.0
    %782 = vmatpush.msra.mxu0 0.0
    %783 = vmatpush.msra.mxu0 %v177
    %784 = vmatpush.msra.mxu0 %v174
    %785 = vmatpush.msra.mxu0 %v171
    %786 = vmatpush.msra.mxu0 %v168
    %787 = vmatmul.f32.gmra.mxu0 %v720
    %v788 = vpop.f32.mrf.mxu0
    %v789 = vadd.f32 %v231, %v788
    %790 = vmatmul.f32.gmra.mxu0 %v723
    %v791 = vpop.f32.mrf.mxu0
    %v792 = vadd.f32 %v231, %v791
    %793 = vdwg.mxu0
    %794 = vmatpush.msra.mxu0 %v224
    %795 = vmatpush.msra.mxu0 %v221
    %796 = vmatpush.msra.mxu0 %v218
    %797 = vmatpush.msra.mxu0 %v215
    %798 = vmatpush.msra.mxu0 %v212
    %799 = vmatpush.msra.mxu0 %v209
    %800 = vmatpush.msra.mxu0 %v206
    %801 = vmatpush.msra.mxu0 %v203
    %802 = vmatpush.msra.mxu0 %v200
    %803 = vmatpush.msra.mxu0 %v197
    %804 = vmatpush.msra.mxu0 %v194
    %805 = vmatpush.msra.mxu0 %v191
    %806 = vmatpush.msra.mxu0 %v188
    %807 = vmatpush.msra.mxu0 %v185
    %808 = vmatpush.msra.mxu0 %v182
    %809 = vmatpush.msra.mxu0 %v179
    %810 = vmatmul.f32.gmra.mxu0 %v717
    %v811 = vpop.f32.mrf.mxu0
    %v812 = vadd.f32 %v312, %v811
    %813 = vmatmul.f32.gmra.mxu0 %v718
    %v814 = vpop.f32.mrf.mxu0
    %v815 = vadd.f32 %v312, %v814
    %816 = vdwg.mxu0
    %817 = vmatpush.msra.mxu0 %v225
    %818 = vmatpush.msra.mxu0 %v222
    %819 = vmatpush.msra.mxu0 %v219
    %820 = vmatpush.msra.mxu0 %v216
    %821 = vmatpush.msra.mxu0 %v213
    %822 = vmatpush.msra.mxu0 %v210
    %823 = vmatpush.msra.mxu0 %v207
    %824 = vmatpush.msra.mxu0 %v204
    %825 = vmatpush.msra.mxu0 %v201
    %826 = vmatpush.msra.mxu0 %v198
    %827 = vmatpush.msra.mxu0 %v195
    %828 = vmatpush.msra.mxu0 %v192
    %829 = vmatpush.msra.mxu0 %v189
    %830 = vmatpush.msra.mxu0 %v186
    %831 = vmatpush.msra.mxu0 %v183
    %832 = vmatpush.msra.mxu0 %v180
    %833 = vmatmul.f32.gmra.mxu0 %v717
    %v834 = vpop.f32.mrf.mxu0
    %v835 = vadd.f32 %v313, %v834
    %836 = vmatmul.f32.gmra.mxu0 %v718
    %v837 = vpop.f32.mrf.mxu0
    %v838 = vadd.f32 %v313, %v837
    %839 = vdwg.mxu0
    %840 = vmatpush.msra.mxu0 %v226
    %841 = vmatpush.msra.mxu0 %v223
    %842 = vmatpush.msra.mxu0 %v220
    %843 = vmatpush.msra.mxu0 %v217
    %844 = vmatpush.msra.mxu0 %v214
    %845 = vmatpush.msra.mxu0 %v211
    %846 = vmatpush.msra.mxu0 %v208
    %847 = vmatpush.msra.mxu0 %v205
    %848 = vmatpush.msra.mxu0 %v202
    %849 = vmatpush.msra.mxu0 %v199
    %850 = vmatpush.msra.mxu0 %v196
    %851 = vmatpush.msra.mxu0 %v193
    %852 = vmatpush.msra.mxu0 %v190
    %853 = vmatpush.msra.mxu0 %v187
    %854 = vmatpush.msra.mxu0 %v184
    %855 = vmatpush.msra.mxu0 %v181
    %856 = vmatmul.f32.gmra.mxu0 %v717
    %v857 = vpop.f32.mrf.mxu0
    %v858 = vadd.f32 %v314, %v857
    %859 = vmatmul.f32.gmra.mxu0 %v718
    %v860 = vpop.f32.mrf.mxu0
    %v861 = vadd.f32 %v314, %v860
    %862 = vdwg.mxu0
    %v863 = vadd.f32 %v743, %v812
    %v864 = vadd.f32 %v746, %v815
    %v865 = vxor.u32 %v863, 2147483648
    %v866 = vxor.u32 %v864, 2147483648
    %v867 = vmul.f32 %v865, 1.442695
    %v868 = vpow.pop %v867
    %v869 = vmul.f32 %v866, 1.442695
    %v870 = vpow.pop %v869
    %v871 = vadd.f32 %v868, 1.0
    %v872 = vadd.f32 %v870, 1.0
    %v873 = vrcp.pop %v871
    %v874 = vmul.f32 %v871, %v873
    %v875 = vsub.f32 1.0, %v874
    %v876 = vmul.f32 %v873, %v875
    %v877 = vadd.f32 %v873, %v876
    %vm878 = vweird.f32 %v871
    %vm879 = vweird.f32 %v873
    %vm880 = vmor %vm878, %vm879
    %v881 = vsel %vm880, %v873, %v877
    %v882 = vand.u32 2147483647, %v871
    %vm883 = vcmp.eq.f32.partialorder %v882, 8.507059e+37
    %v884 = vand.u32 %v871, 2147483648
    %v885 = vor.u32 1.1754944e-38, %v884
    %v886 = vsel %vm883, %v885, %v881
    %v887 = vmul.f32 1.0, %v886
    %v888 = vrcp.pop %v872
    %v889 = vmul.f32 %v872, %v888
    %v890 = vsub.f32 1.0, %v889
    %v891 = vmul.f32 %v888, %v890
    %v892 = vadd.f32 %v888, %v891
    %vm893 = vweird.f32 %v872
    %vm894 = vweird.f32 %v888
    %vm895 = vmor %vm893, %vm894
    %v896 = vsel %vm895, %v888, %v892
    %v897 = vand.u32 2147483647, %v872
    %vm898 = vcmp.eq.f32.partialorder %v897, 8.507059e+37
    %v899 = vand.u32 %v872, 2147483648
    %v900 = vor.u32 1.1754944e-38, %v899
    %v901 = vsel %vm898, %v900, %v896
    %v902 = vmul.f32 1.0, %v901
    %v903 = vadd.f32 %v766, %v835
    %v904 = vadd.f32 %v769, %v838
    %v905 = vxor.u32 %v903, 2147483648
    %v906 = vxor.u32 %v904, 2147483648
    %v907 = vmul.f32 %v905, 1.442695
    %v908 = vpow.pop %v907
    %v909 = vmul.f32 %v906, 1.442695
    %v910 = vpow.pop %v909
    %v911 = vadd.f32 %v908, 1.0
    %v912 = vadd.f32 %v910, 1.0
    %v913 = vrcp.pop %v911
    %v914 = vmul.f32 %v911, %v913
    %v915 = vsub.f32 1.0, %v914
    %v916 = vmul.f32 %v913, %v915
    %v917 = vadd.f32 %v913, %v916
    %vm918 = vweird.f32 %v911
    %vm919 = vweird.f32 %v913
    %vm920 = vmor %vm918, %vm919
    %v921 = vsel %vm920, %v913, %v917
    %v922 = vand.u32 2147483647, %v911
    %vm923 = vcmp.eq.f32.partialorder %v922, 8.507059e+37
    %v924 = vand.u32 %v911, 2147483648
    %v925 = vor.u32 1.1754944e-38, %v924
    %v926 = vsel %vm923, %v925, %v921
    %v927 = vmul.f32 1.0, %v926
    %v928 = vrcp.pop %v912
    %v929 = vmul.f32 %v912, %v928
    %v930 = vsub.f32 1.0, %v929
    %v931 = vmul.f32 %v928, %v930
    %v932 = vadd.f32 %v928, %v931
    %vm933 = vweird.f32 %v912
    %vm934 = vweird.f32 %v928
    %vm935 = vmor %vm933, %vm934
    %v936 = vsel %vm935, %v928, %v932
    %v937 = vand.u32 2147483647, %v912
    %vm938 = vcmp.eq.f32.partialorder %v937, 8.507059e+37
    %v939 = vand.u32 %v912, 2147483648
    %v940 = vor.u32 1.1754944e-38, %v939
    %v941 = vsel %vm938, %v940, %v936
    %v942 = vmul.f32 1.0, %v941
    %v943 = vmul.f32 %v887, %v858
    %v944 = vmul.f32 %v902, %v861
    %v945 = vadd.f32 %v789, %v943
    %v946 = vadd.f32 %v792, %v944
    %v947 = vtanh.pop %v945
    %v948 = vtanh.pop %v946
    %v949 = vsub.f32 1.0, %v927
    %v950 = vsub.f32 1.0, %v942
    %v951 = vmul.f32 %v949, %v947
    %v952 = vmul.f32 %v950, %v948
    %v953 = vmul.f32 %v927, %v717
    %v954 = vmul.f32 %v942, %v718
    %v955 = vadd.f32 %v951, %v953
    %v956 = vadd.f32 %v952, %v954
    %v958 = vsel %vm235, %v116, 0
    %v961 = vsel %vm235, %v117, 0
    %963 = vmatpush.msra.mxu0 0.0
    %964 = vmatpush.msra.mxu0 0.0
    %965 = vmatpush.msra.mxu0 0.0
    %966 = vmatpush.msra.mxu0 0.0
    %967 = vmatpush.msra.mxu0 0.0
    %968 = vmatpush.msra.mxu0 0.0
    %969 = vmatpush.msra.mxu0 0.0
    %970 = vmatpush.msra.mxu0 0.0
    %971 = vmatpush.msra.mxu0 0.0
    %972 = vmatpush.msra.mxu0 0.0
    %973 = vmatpush.msra.mxu0 0.0
    %974 = vmatpush.msra.mxu0 0.0
    %975 = vmatpush.msra.mxu0 %v175
    %976 = vmatpush.msra.mxu0 %v172
    %977 = vmatpush.msra.mxu0 %v169
    %978 = vmatpush.msra.mxu0 %v166
    %979 = vmatmul.f32.gmra.mxu0 %v958
    %v980 = vpop.f32.mrf.mxu0
    %v981 = vadd.f32 %v229, %v980
    %982 = vmatmul.f32.gmra.mxu0 %v961
    %v983 = vpop.f32.mrf.mxu0
    %v984 = vadd.f32 %v229, %v983
    %985 = vdwg.mxu0
    %986 = vmatpush.msra.mxu0 0.0
    %987 = vmatpush.msra.mxu0 0.0
    %988 = vmatpush.msra.mxu0 0.0
    %989 = vmatpush.msra.mxu0 0.0
    %990 = vmatpush.msra.mxu0 0.0
    %991 = vmatpush.msra.mxu0 0.0
    %992 = vmatpush.msra.mxu0 0.0
    %993 = vmatpush.msra.mxu0 0.0
    %994 = vmatpush.msra.mxu0 0.0
    %995 = vmatpush.msra.mxu0 0.0
    %996 = vmatpush.msra.mxu0 0.0
    %997 = vmatpush.msra.mxu0 0.0
    %998 = vmatpush.msra.mxu0 %v176
    %999 = vmatpush.msra.mxu0 %v173
    %1000 = vmatpush.msra.mxu0 %v170
    %1001 = vmatpush.msra.mxu0 %v167
    %1002 = vmatmul.f32.gmra.mxu0 %v958
    %v1003 = vpop.f32.mrf.mxu0
    %v1004 = vadd.f32 %v230, %v1003
    %1005 = vmatmul.f32.gmra.mxu0 %v961
    %v1006 = vpop.f32.mrf.mxu0
    %v1007 = vadd.f32 %v230, %v1006
    %1008 = vdwg.mxu0
    %1009 = vmatpush.msra.mxu0 0.0
    %1010 = vmatpush.msra.mxu0 0.0
    %1011 = vmatpush.msra.mxu0 0.0
    %1012 = vmatpush.msra.mxu0 0.0
    %1013 = vmatpush.msra.mxu0 0.0
    %1014 = vmatpush.msra.mxu0 0.0
    %1015 = vmatpush.msra.mxu0 0.0
    %1016 = vmatpush.msra.mxu0 0.0
    %1017 = vmatpush.msra.mxu0 0.0
    %1018 = vmatpush.msra.mxu0 0.0
    %1019 = vmatpush.msra.mxu0 0.0
    %1020 = vmatpush.msra.mxu0 0.0
    %1021 = vmatpush.msra.mxu0 %v177
    %1022 = vmatpush.msra.mxu0 %v174
    %1023 = vmatpush.msra.mxu0 %v171
    %1024 = vmatpush.msra.mxu0 %v168
    %1025 = vmatmul.f32.gmra.mxu0 %v958
    %v1026 = vpop.f32.mrf.mxu0
    %v1027 = vadd.f32 %v231, %v1026
    %1028 = vmatmul.f32.gmra.mxu0 %v961
    %v1029 = vpop.f32.mrf.mxu0
    %v1030 = vadd.f32 %v231, %v1029
    %1031 = vdwg.mxu0
    %1032 = vmatpush.msra.mxu0 %v224
    %1033 = vmatpush.msra.mxu0 %v221
    %1034 = vmatpush.msra.mxu0 %v218
    %1035 = vmatpush.msra.mxu0 %v215
    %1036 = vmatpush.msra.mxu0 %v212
    %1037 = vmatpush.msra.mxu0 %v209
    %1038 = vmatpush.msra.mxu0 %v206
    %1039 = vmatpush.msra.mxu0 %v203
    %1040 = vmatpush.msra.mxu0 %v200
    %1041 = vmatpush.msra.mxu0 %v197
    %1042 = vmatpush.msra.mxu0 %v194
    %1043 = vmatpush.msra.mxu0 %v191
    %1044 = vmatpush.msra.mxu0 %v188
    %1045 = vmatpush.msra.mxu0 %v185
    %1046 = vmatpush.msra.mxu0 %v182
    %1047 = vmatpush.msra.mxu0 %v179
    %1048 = vmatmul.f32.gmra.mxu0 %v955
    %v1049 = vpop.f32.mrf.mxu0
    %v1050 = vadd.f32 %v312, %v1049
    %1051 = vmatmul.f32.gmra.mxu0 %v956
    %v1052 = vpop.f32.mrf.mxu0
    %v1053 = vadd.f32 %v312, %v1052
    %1054 = vdwg.mxu0
    %1055 = vmatpush.msra.mxu0 %v225
    %1056 = vmatpush.msra.mxu0 %v222
    %1057 = vmatpush.msra.mxu0 %v219
    %1058 = vmatpush.msra.mxu0 %v216
    %1059 = vmatpush.msra.mxu0 %v213
    %1060 = vmatpush.msra.mxu0 %v210
    %1061 = vmatpush.msra.mxu0 %v207
    %1062 = vmatpush.msra.mxu0 %v204
    %1063 = vmatpush.msra.mxu0 %v201
    %1064 = vmatpush.msra.mxu0 %v198
    %1065 = vmatpush.msra.mxu0 %v195
    %1066 = vmatpush.msra.mxu0 %v192
    %1067 = vmatpush.msra.mxu0 %v189
    %1068 = vmatpush.msra.mxu0 %v186
    %1069 = vmatpush.msra.mxu0 %v183
    %1070 = vmatpush.msra.mxu0 %v180
    %1071 = vmatmul.f32.gmra.mxu0 %v955
    %v1072 = vpop.f32.mrf.mxu0
    %v1073 = vadd.f32 %v313, %v1072
    %1074 = vmatmul.f32.gmra.mxu0 %v956
    %v1075 = vpop.f32.mrf.mxu0
    %v1076 = vadd.f32 %v313, %v1075
    %1077 = vdwg.mxu0
    %1078 = vmatpush.msra.mxu0 %v226
    %1079 = vmatpush.msra.mxu0 %v223
    %1080 = vmatpush.msra.mxu0 %v220
    %1081 = vmatpush.msra.mxu0 %v217
    %1082 = vmatpush.msra.mxu0 %v214
    %1083 = vmatpush.msra.mxu0 %v211
    %1084 = vmatpush.msra.mxu0 %v208
    %1085 = vmatpush.msra.mxu0 %v205
    %1086 = vmatpush.msra.mxu0 %v202
    %1087 = vmatpush.msra.mxu0 %v199
    %1088 = vmatpush.msra.mxu0 %v196
    %1089 = vmatpush.msra.mxu0 %v193
    %1090 = vmatpush.msra.mxu0 %v190
    %1091 = vmatpush.msra.mxu0 %v187
    %1092 = vmatpush.msra.mxu0 %v184
    %1093 = vmatpush.msra.mxu0 %v181
    %1094 = vmatmul.f32.gmra.mxu0 %v955
    %v1095 = vpop.f32.mrf.mxu0
    %v1096 = vadd.f32 %v314, %v1095
    %1097 = vmatmul.f32.gmra.mxu0 %v956
    %v1098 = vpop.f32.mrf.mxu0
    %v1099 = vadd.f32 %v314, %v1098
    %1100 = vdwg.mxu0
    %v1101 = vadd.f32 %v981, %v1050
    %v1102 = vadd.f32 %v984, %v1053
    %v1103 = vxor.u32 %v1101, 2147483648
    %v1104 = vxor.u32 %v1102, 2147483648
    %v1105 = vmul.f32 %v1103, 1.442695
    %v1106 = vpow.pop %v1105
    %v1107 = vmul.f32 %v1104, 1.442695
    %v1108 = vpow.pop %v1107
    %v1109 = vadd.f32 %v1106, 1.0
    %v1110 = vadd.f32 %v1108, 1.0
    %v1111 = vrcp.pop %v1109
    %v1112 = vmul.f32 %v1109, %v1111
    %v1113 = vsub.f32 1.0, %v1112
    %v1114 = vmul.f32 %v1111, %v1113
    %v1115 = vadd.f32 %v1111, %v1114
    %vm1116 = vweird.f32 %v1109
    %vm1117 = vweird.f32 %v1111
    %vm1118 = vmor %vm1116, %vm1117
    %v1119 = vsel %vm1118, %v1111, %v1115
    %v1120 = vand.u32 2147483647, %v1109
    %vm1121 = vcmp.eq.f32.partialorder %v1120, 8.507059e+37
    %v1122 = vand.u32 %v1109, 2147483648
    %v1123 = vor.u32 1.1754944e-38, %v1122
    %v1124 = vsel %vm1121, %v1123, %v1119
    %v1125 = vmul.f32 1.0, %v1124
    %v1126 = vrcp.pop %v1110
    %v1127 = vmul.f32 %v1110, %v1126
    %v1128 = vsub.f32 1.0, %v1127
    %v1129 = vmul.f32 %v1126, %v1128
    %v1130 = vadd.f32 %v1126, %v1129
    %vm1131 = vweird.f32 %v1110
    %vm1132 = vweird.f32 %v1126
    %vm1133 = vmor %vm1131, %vm1132
    %v1134 = vsel %vm1133, %v1126, %v1130
    %v1135 = vand.u32 2147483647, %v1110
    %vm1136 = vcmp.eq.f32.partialorder %v1135, 8.507059e+37
    %v1137 = vand.u32 %v1110, 2147483648
    %v1138 = vor.u32 1.1754944e-38, %v1137
    %v1139 = vsel %vm1136, %v1138, %v1134
    %v1140 = vmul.f32 1.0, %v1139
    %v1141 = vadd.f32 %v1004, %v1073
    %v1142 = vadd.f32 %v1007, %v1076
    %v1143 = vxor.u32 %v1141, 2147483648
    %v1144 = vxor.u32 %v1142, 2147483648
    %v1145 = vmul.f32 %v1143, 1.442695
    %v1146 = vpow.pop %v1145
    %v1147 = vmul.f32 %v1144, 1.442695
    %v1148 = vpow.pop %v1147
    %v1149 = vadd.f32 %v1146, 1.0
    %v1150 = vadd.f32 %v1148, 1.0
    %v1151 = vrcp.pop %v1149
    %v1152 = vmul.f32 %v1149, %v1151
    %v1153 = vsub.f32 1.0, %v1152
    %v1154 = vmul.f32 %v1151, %v1153
    %v1155 = vadd.f32 %v1151, %v1154
    %vm1156 = vweird.f32 %v1149
    %vm1157 = vweird.f32 %v1151
    %vm1158 = vmor %vm1156, %vm1157
    %v1159 = vsel %vm1158, %v1151, %v1155
    %v1160 = vand.u32 2147483647, %v1149
    %vm1161 = vcmp.eq.f32.partialorder %v1160, 8.507059e+37
    %v1162 = vand.u32 %v1149, 2147483648
    %v1163 = vor.u32 1.1754944e-38, %v1162
    %v1164 = vsel %vm1161, %v1163, %v1159
    %v1165 = vmul.f32 1.0, %v1164
    %v1166 = vrcp.pop %v1150
    %v1167 = vmul.f32 %v1150, %v1166
    %v1168 = vsub.f32 1.0, %v1167
    %v1169 = vmul.f32 %v1166, %v1168
    %v1170 = vadd.f32 %v1166, %v1169
    %vm1171 = vweird.f32 %v1150
    %vm1172 = vweird.f32 %v1166
    %vm1173 = vmor %vm1171, %vm1172
    %v1174 = vsel %vm1173, %v1166, %v1170
    %v1175 = vand.u32 2147483647, %v1150
    %vm1176 = vcmp.eq.f32.partialorder %v1175, 8.507059e+37
    %v1177 = vand.u32 %v1150, 2147483648
    %v1178 = vor.u32 1.1754944e-38, %v1177
    %v1179 = vsel %vm1176, %v1178, %v1174
    %v1180 = vmul.f32 1.0, %v1179
    %v1181 = vmul.f32 %v1125, %v1096
    %v1182 = vmul.f32 %v1140, %v1099
    %v1183 = vadd.f32 %v1027, %v1181
    %v1184 = vadd.f32 %v1030, %v1182
    %v1185 = vtanh.pop %v1183
    %v1186 = vtanh.pop %v1184
    %v1187 = vsub.f32 1.0, %v1165
    %v1188 = vsub.f32 1.0, %v1180
    %v1189 = vmul.f32 %v1187, %v1185
    %v1190 = vmul.f32 %v1188, %v1186
    %v1191 = vmul.f32 %v1165, %v955
    %v1192 = vmul.f32 %v1180, %v956
    %v1193 = vadd.f32 %v1189, %v1191
    %v1194 = vadd.f32 %v1190, %v1192
    %v1196 = vsel %vm235, %v128, 0
    %v1199 = vsel %vm235, %v129, 0
    %1201 = vmatpush.msra.mxu0 0.0
    %1202 = vmatpush.msra.mxu0 0.0
    %1203 = vmatpush.msra.mxu0 0.0
    %1204 = vmatpush.msra.mxu0 0.0
    %1205 = vmatpush.msra.mxu0 0.0
    %1206 = vmatpush.msra.mxu0 0.0
    %1207 = vmatpush.msra.mxu0 0.0
    %1208 = vmatpush.msra.mxu0 0.0
    %1209 = vmatpush.msra.mxu0 0.0
    %1210 = vmatpush.msra.mxu0 0.0
    %1211 = vmatpush.msra.mxu0 0.0
    %1212 = vmatpush.msra.mxu0 0.0
    %1213 = vmatpush.msra.mxu0 %v175
    %1214 = vmatpush.msra.mxu0 %v172
    %1215 = vmatpush.msra.mxu0 %v169
    %1216 = vmatpush.msra.mxu0 %v166
    %1217 = vmatmul.f32.gmra.mxu0 %v1196
    %v1218 = vpop.f32.mrf.mxu0
    %v1219 = vadd.f32 %v229, %v1218
    %1220 = vmatmul.f32.gmra.mxu0 %v1199
    %v1221 = vpop.f32.mrf.mxu0
    %v1222 = vadd.f32 %v229, %v1221
    %1223 = vdwg.mxu0
    %1224 = vmatpush.msra.mxu0 0.0
    %1225 = vmatpush.msra.mxu0 0.0
    %1226 = vmatpush.msra.mxu0 0.0
    %1227 = vmatpush.msra.mxu0 0.0
    %1228 = vmatpush.msra.mxu0 0.0
    %1229 = vmatpush.msra.mxu0 0.0
    %1230 = vmatpush.msra.mxu0 0.0
    %1231 = vmatpush.msra.mxu0 0.0
    %1232 = vmatpush.msra.mxu0 0.0
    %1233 = vmatpush.msra.mxu0 0.0
    %1234 = vmatpush.msra.mxu0 0.0
    %1235 = vmatpush.msra.mxu0 0.0
    %1236 = vmatpush.msra.mxu0 %v176
    %1237 = vmatpush.msra.mxu0 %v173
    %1238 = vmatpush.msra.mxu0 %v170
    %1239 = vmatpush.msra.mxu0 %v167
    %1240 = vmatmul.f32.gmra.mxu0 %v1196
    %v1241 = vpop.f32.mrf.mxu0
    %v1242 = vadd.f32 %v230, %v1241
    %1243 = vmatmul.f32.gmra.mxu0 %v1199
    %v1244 = vpop.f32.mrf.mxu0
    %v1245 = vadd.f32 %v230, %v1244
    %1246 = vdwg.mxu0
    %1247 = vmatpush.msra.mxu0 0.0
    %1248 = vmatpush.msra.mxu0 0.0
    %1249 = vmatpush.msra.mxu0 0.0
    %1250 = vmatpush.msra.mxu0 0.0
    %1251 = vmatpush.msra.mxu0 0.0
    %1252 = vmatpush.msra.mxu0 0.0
    %1253 = vmatpush.msra.mxu0 0.0
    %1254 = vmatpush.msra.mxu0 0.0
    %1255 = vmatpush.msra.mxu0 0.0
    %1256 = vmatpush.msra.mxu0 0.0
    %1257 = vmatpush.msra.mxu0 0.0
    %1258 = vmatpush.msra.mxu0 0.0
    %1259 = vmatpush.msra.mxu0 %v177
    %1260 = vmatpush.msra.mxu0 %v174
    %1261 = vmatpush.msra.mxu0 %v171
    %1262 = vmatpush.msra.mxu0 %v168
    %1263 = vmatmul.f32.gmra.mxu0 %v1196
    %v1264 = vpop.f32.mrf.mxu0
    %v1265 = vadd.f32 %v231, %v1264
    %1266 = vmatmul.f32.gmra.mxu0 %v1199
    %v1267 = vpop.f32.mrf.mxu0
    %v1268 = vadd.f32 %v231, %v1267
    %1269 = vdwg.mxu0
    %1270 = vmatpush.msra.mxu0 %v224
    %1271 = vmatpush.msra.mxu0 %v221
    %1272 = vmatpush.msra.mxu0 %v218
    %1273 = vmatpush.msra.mxu0 %v215
    %1274 = vmatpush.msra.mxu0 %v212
    %1275 = vmatpush.msra.mxu0 %v209
    %1276 = vmatpush.msra.mxu0 %v206
    %1277 = vmatpush.msra.mxu0 %v203
    %1278 = vmatpush.msra.mxu0 %v200
    %1279 = vmatpush.msra.mxu0 %v197
    %1280 = vmatpush.msra.mxu0 %v194
    %1281 = vmatpush.msra.mxu0 %v191
    %1282 = vmatpush.msra.mxu0 %v188
    %1283 = vmatpush.msra.mxu0 %v185
    %1284 = vmatpush.msra.mxu0 %v182
    %1285 = vmatpush.msra.mxu0 %v179
    %1286 = vmatmul.f32.gmra.mxu0 %v1193
    %v1287 = vpop.f32.mrf.mxu0
    %v1288 = vadd.f32 %v312, %v1287
    %1289 = vmatmul.f32.gmra.mxu0 %v1194
    %v1290 = vpop.f32.mrf.mxu0
    %v1291 = vadd.f32 %v312, %v1290
    %1292 = vdwg.mxu0
    %1293 = vmatpush.msra.mxu0 %v225
    %1294 = vmatpush.msra.mxu0 %v222
    %1295 = vmatpush.msra.mxu0 %v219
    %1296 = vmatpush.msra.mxu0 %v216
    %1297 = vmatpush.msra.mxu0 %v213
    %1298 = vmatpush.msra.mxu0 %v210
    %1299 = vmatpush.msra.mxu0 %v207
    %1300 = vmatpush.msra.mxu0 %v204
    %1301 = vmatpush.msra.mxu0 %v201
    %1302 = vmatpush.msra.mxu0 %v198
    %1303 = vmatpush.msra.mxu0 %v195
    %1304 = vmatpush.msra.mxu0 %v192
    %1305 = vmatpush.msra.mxu0 %v189
    %1306 = vmatpush.msra.mxu0 %v186
    %1307 = vmatpush.msra.mxu0 %v183
    %1308 = vmatpush.msra.mxu0 %v180
    %1309 = vmatmul.f32.gmra.mxu0 %v1193
    %v1310 = vpop.f32.mrf.mxu0
    %v1311 = vadd.f32 %v313, %v1310
    %1312 = vmatmul.f32.gmra.mxu0 %v1194
    %v1313 = vpop.f32.mrf.mxu0
    %v1314 = vadd.f32 %v313, %v1313
    %1315 = vdwg.mxu0
    %1316 = vmatpush.msra.mxu0 %v226
    %1317 = vmatpush.msra.mxu0 %v223
    %1318 = vmatpush.msra.mxu0 %v220
    %1319 = vmatpush.msra.mxu0 %v217
    %1320 = vmatpush.msra.mxu0 %v214
    %1321 = vmatpush.msra.mxu0 %v211
    %1322 = vmatpush.msra.mxu0 %v208
    %1323 = vmatpush.msra.mxu0 %v205
    %1324 = vmatpush.msra.mxu0 %v202
    %1325 = vmatpush.msra.mxu0 %v199
    %1326 = vmatpush.msra.mxu0 %v196
    %1327 = vmatpush.msra.mxu0 %v193
    %1328 = vmatpush.msra.mxu0 %v190
    %1329 = vmatpush.msra.mxu0 %v187
    %1330 = vmatpush.msra.mxu0 %v184
    %1331 = vmatpush.msra.mxu0 %v181
    %1332 = vmatmul.f32.gmra.mxu0 %v1193
    %v1333 = vpop.f32.mrf.mxu0
    %v1334 = vadd.f32 %v314, %v1333
    %1335 = vmatmul.f32.gmra.mxu0 %v1194
    %v1336 = vpop.f32.mrf.mxu0
    %v1337 = vadd.f32 %v314, %v1336
    %1338 = vdwg.mxu0
    %v1339 = vadd.f32 %v1219, %v1288
    %v1340 = vadd.f32 %v1222, %v1291
    %v1341 = vxor.u32 %v1339, 2147483648
    %v1342 = vxor.u32 %v1340, 2147483648
    %v1343 = vmul.f32 %v1341, 1.442695
    %v1344 = vpow.pop %v1343
    %v1345 = vmul.f32 %v1342, 1.442695
    %v1346 = vpow.pop %v1345
    %v1347 = vadd.f32 %v1344, 1.0
    %v1348 = vadd.f32 %v1346, 1.0
    %v1349 = vrcp.pop %v1347
    %v1350 = vmul.f32 %v1347, %v1349
    %v1351 = vsub.f32 1.0, %v1350
    %v1352 = vmul.f32 %v1349, %v1351
    %v1353 = vadd.f32 %v1349, %v1352
    %vm1354 = vweird.f32 %v1347
    %vm1355 = vweird.f32 %v1349
    %vm1356 = vmor %vm1354, %vm1355
    %v1357 = vsel %vm1356, %v1349, %v1353
    %v1358 = vand.u32 2147483647, %v1347
    %vm1359 = vcmp.eq.f32.partialorder %v1358, 8.507059e+37
    %v1360 = vand.u32 %v1347, 2147483648
    %v1361 = vor.u32 1.1754944e-38, %v1360
    %v1362 = vsel %vm1359, %v1361, %v1357
    %v1363 = vmul.f32 1.0, %v1362
    %v1364 = vrcp.pop %v1348
    %v1365 = vmul.f32 %v1348, %v1364
    %v1366 = vsub.f32 1.0, %v1365
    %v1367 = vmul.f32 %v1364, %v1366
    %v1368 = vadd.f32 %v1364, %v1367
    %vm1369 = vweird.f32 %v1348
    %vm1370 = vweird.f32 %v1364
    %vm1371 = vmor %vm1369, %vm1370
    %v1372 = vsel %vm1371, %v1364, %v1368
    %v1373 = vand.u32 2147483647, %v1348
    %vm1374 = vcmp.eq.f32.partialorder %v1373, 8.507059e+37
    %v1375 = vand.u32 %v1348, 2147483648
    %v1376 = vor.u32 1.1754944e-38, %v1375
    %v1377 = vsel %vm1374, %v1376, %v1372
    %v1378 = vmul.f32 1.0, %v1377
    %v1379 = vadd.f32 %v1242, %v1311
    %v1380 = vadd.f32 %v1245, %v1314
    %v1381 = vxor.u32 %v1379, 2147483648
    %v1382 = vxor.u32 %v1380, 2147483648
    %v1383 = vmul.f32 %v1381, 1.442695
    %v1384 = vpow.pop %v1383
    %v1385 = vmul.f32 %v1382, 1.442695
    %v1386 = vpow.pop %v1385
    %v1387 = vadd.f32 %v1384, 1.0
    %v1388 = vadd.f32 %v1386, 1.0
    %v1389 = vrcp.pop %v1387
    %v1390 = vmul.f32 %v1387, %v1389
    %v1391 = vsub.f32 1.0, %v1390
    %v1392 = vmul.f32 %v1389, %v1391
    %v1393 = vadd.f32 %v1389, %v1392
    %vm1394 = vweird.f32 %v1387
    %vm1395 = vweird.f32 %v1389
    %vm1396 = vmor %vm1394, %vm1395
    %v1397 = vsel %vm1396, %v1389, %v1393
    %v1398 = vand.u32 2147483647, %v1387
    %vm1399 = vcmp.eq.f32.partialorder %v1398, 8.507059e+37
    %v1400 = vand.u32 %v1387, 2147483648
    %v1401 = vor.u32 1.1754944e-38, %v1400
    %v1402 = vsel %vm1399, %v1401, %v1397
    %v1403 = vmul.f32 1.0, %v1402
    %v1404 = vrcp.pop %v1388
    %v1405 = vmul.f32 %v1388, %v1404
    %v1406 = vsub.f32 1.0, %v1405
    %v1407 = vmul.f32 %v1404, %v1406
    %v1408 = vadd.f32 %v1404, %v1407
    %vm1409 = vweird.f32 %v1388
    %vm1410 = vweird.f32 %v1404
    %vm1411 = vmor %vm1409, %vm1410
    %v1412 = vsel %vm1411, %v1404, %v1408
    %v1413 = vand.u32 2147483647, %v1388
    %vm1414 = vcmp.eq.f32.partialorder %v1413, 8.507059e+37
    %v1415 = vand.u32 %v1388, 2147483648
    %v1416 = vor.u32 1.1754944e-38, %v1415
    %v1417 = vsel %vm1414, %v1416, %v1412
    %v1418 = vmul.f32 1.0, %v1417
    %v1419 = vmul.f32 %v1363, %v1334
    %v1420 = vmul.f32 %v1378, %v1337
    %v1421 = vadd.f32 %v1265, %v1419
    %v1422 = vadd.f32 %v1268, %v1420
    %v1423 = vtanh.pop %v1421
    %v1424 = vtanh.pop %v1422
    %v1425 = vsub.f32 1.0, %v1403
    %v1426 = vsub.f32 1.0, %v1418
    %v1427 = vmul.f32 %v1425, %v1423
    %v1428 = vmul.f32 %v1426, %v1424
    %v1429 = vmul.f32 %v1403, %v1193
    %v1430 = vmul.f32 %v1418, %v1194
    %v1431 = vadd.f32 %v1427, %v1429
    %v1432 = vadd.f32 %v1428, %v1430
    %v1434 = vsel %vm235, %v140, 0
    %v1437 = vsel %vm235, %v141, 0
    %1439 = vmatpush.msra.mxu0 0.0
    %1440 = vmatpush.msra.mxu0 0.0
    %1441 = vmatpush.msra.mxu0 0.0
    %1442 = vmatpush.msra.mxu0 0.0
    %1443 = vmatpush.msra.mxu0 0.0
    %1444 = vmatpush.msra.mxu0 0.0
    %1445 = vmatpush.msra.mxu0 0.0
    %1446 = vmatpush.msra.mxu0 0.0
    %1447 = vmatpush.msra.mxu0 0.0
    %1448 = vmatpush.msra.mxu0 0.0
    %1449 = vmatpush.msra.mxu0 0.0
    %1450 = vmatpush.msra.mxu0 0.0
    %1451 = vmatpush.msra.mxu0 %v175
    %1452 = vmatpush.msra.mxu0 %v172
    %1453 = vmatpush.msra.mxu0 %v169
    %1454 = vmatpush.msra.mxu0 %v166
    %1455 = vmatmul.f32.gmra.mxu0 %v1434
    %v1456 = vpop.f32.mrf.mxu0
    %v1457 = vadd.f32 %v229, %v1456
    %1458 = vmatmul.f32.gmra.mxu0 %v1437
    %v1459 = vpop.f32.mrf.mxu0
    %v1460 = vadd.f32 %v229, %v1459
    %1461 = vdwg.mxu0
    %1462 = vmatpush.msra.mxu0 0.0
    %1463 = vmatpush.msra.mxu0 0.0
    %1464 = vmatpush.msra.mxu0 0.0
    %1465 = vmatpush.msra.mxu0 0.0
    %1466 = vmatpush.msra.mxu0 0.0
    %1467 = vmatpush.msra.mxu0 0.0
    %1468 = vmatpush.msra.mxu0 0.0
    %1469 = vmatpush.msra.mxu0 0.0
    %1470 = vmatpush.msra.mxu0 0.0
    %1471 = vmatpush.msra.mxu0 0.0
    %1472 = vmatpush.msra.mxu0 0.0
    %1473 = vmatpush.msra.mxu0 0.0
    %1474 = vmatpush.msra.mxu0 %v176
    %1475 = vmatpush.msra.mxu0 %v173
    %1476 = vmatpush.msra.mxu0 %v170
    %1477 = vmatpush.msra.mxu0 %v167
    %1478 = vmatmul.f32.gmra.mxu0 %v1434
    %v1479 = vpop.f32.mrf.mxu0
    %v1480 = vadd.f32 %v230, %v1479
    %1481 = vmatmul.f32.gmra.mxu0 %v1437
    %v1482 = vpop.f32.mrf.mxu0
    %v1483 = vadd.f32 %v230, %v1482
    %1484 = vdwg.mxu0
    %1485 = vmatpush.msra.mxu0 0.0
    %1486 = vmatpush.msra.mxu0 0.0
    %1487 = vmatpush.msra.mxu0 0.0
    %1488 = vmatpush.msra.mxu0 0.0
    %1489 = vmatpush.msra.mxu0 0.0
    %1490 = vmatpush.msra.mxu0 0.0
    %1491 = vmatpush.msra.mxu0 0.0
    %1492 = vmatpush.msra.mxu0 0.0
    %1493 = vmatpush.msra.mxu0 0.0
    %1494 = vmatpush.msra.mxu0 0.0
    %1495 = vmatpush.msra.mxu0 0.0
    %1496 = vmatpush.msra.mxu0 0.0
    %1497 = vmatpush.msra.mxu0 %v177
    %1498 = vmatpush.msra.mxu0 %v174
    %1499 = vmatpush.msra.mxu0 %v171
    %1500 = vmatpush.msra.mxu0 %v168
    %1501 = vmatmul.f32.gmra.mxu0 %v1434
    %v1502 = vpop.f32.mrf.mxu0
    %v1503 = vadd.f32 %v231, %v1502
    %1504 = vmatmul.f32.gmra.mxu0 %v1437
    %v1505 = vpop.f32.mrf.mxu0
    %v1506 = vadd.f32 %v231, %v1505
    %1507 = vdwg.mxu0
    %1508 = vmatpush.msra.mxu0 %v224
    %1509 = vmatpush.msra.mxu0 %v221
    %1510 = vmatpush.msra.mxu0 %v218
    %1511 = vmatpush.msra.mxu0 %v215
    %1512 = vmatpush.msra.mxu0 %v212
    %1513 = vmatpush.msra.mxu0 %v209
    %1514 = vmatpush.msra.mxu0 %v206
    %1515 = vmatpush.msra.mxu0 %v203
    %1516 = vmatpush.msra.mxu0 %v200
    %1517 = vmatpush.msra.mxu0 %v197
    %1518 = vmatpush.msra.mxu0 %v194
    %1519 = vmatpush.msra.mxu0 %v191
    %1520 = vmatpush.msra.mxu0 %v188
    %1521 = vmatpush.msra.mxu0 %v185
    %1522 = vmatpush.msra.mxu0 %v182
    %1523 = vmatpush.msra.mxu0 %v179
    %1524 = vmatmul.f32.gmra.mxu0 %v1431
    %v1525 = vpop.f32.mrf.mxu0
    %v1526 = vadd.f32 %v312, %v1525
    %1527 = vmatmul.f32.gmra.mxu0 %v1432
    %v1528 = vpop.f32.mrf.mxu0
    %v1529 = vadd.f32 %v312, %v1528
    %1530 = vdwg.mxu0
    %1531 = vmatpush.msra.mxu0 %v225
    %1532 = vmatpush.msra.mxu0 %v222
    %1533 = vmatpush.msra.mxu0 %v219
    %1534 = vmatpush.msra.mxu0 %v216
    %1535 = vmatpush.msra.mxu0 %v213
    %1536 = vmatpush.msra.mxu0 %v210
    %1537 = vmatpush.msra.mxu0 %v207
    %1538 = vmatpush.msra.mxu0 %v204
    %1539 = vmatpush.msra.mxu0 %v201
    %1540 = vmatpush.msra.mxu0 %v198
    %1541 = vmatpush.msra.mxu0 %v195
    %1542 = vmatpush.msra.mxu0 %v192
    %1543 = vmatpush.msra.mxu0 %v189
    %1544 = vmatpush.msra.mxu0 %v186
    %1545 = vmatpush.msra.mxu0 %v183
    %1546 = vmatpush.msra.mxu0 %v180
    %1547 = vmatmul.f32.gmra.mxu0 %v1431
    %v1548 = vpop.f32.mrf.mxu0
    %v1549 = vadd.f32 %v313, %v1548
    %1550 = vmatmul.f32.gmra.mxu0 %v1432
    %v1551 = vpop.f32.mrf.mxu0
    %v1552 = vadd.f32 %v313, %v1551
    %1553 = vdwg.mxu0
    %1554 = vmatpush.msra.mxu0 %v226
    %1555 = vmatpush.msra.mxu0 %v223
    %1556 = vmatpush.msra.mxu0 %v220
    %1557 = vmatpush.msra.mxu0 %v217
    %1558 = vmatpush.msra.mxu0 %v214
    %1559 = vmatpush.msra.mxu0 %v211
    %1560 = vmatpush.msra.mxu0 %v208
    %1561 = vmatpush.msra.mxu0 %v205
    %1562 = vmatpush.msra.mxu0 %v202
    %1563 = vmatpush.msra.mxu0 %v199
    %1564 = vmatpush.msra.mxu0 %v196
    %1565 = vmatpush.msra.mxu0 %v193
    %1566 = vmatpush.msra.mxu0 %v190
    %1567 = vmatpush.msra.mxu0 %v187
    %1568 = vmatpush.msra.mxu0 %v184
    %1569 = vmatpush.msra.mxu0 %v181
    %1570 = vmatmul.f32.gmra.mxu0 %v1431
    %v1571 = vpop.f32.mrf.mxu0
    %v1572 = vadd.f32 %v314, %v1571
    %1573 = vmatmul.f32.gmra.mxu0 %v1432
    %v1574 = vpop.f32.mrf.mxu0
    %v1575 = vadd.f32 %v314, %v1574
    %1576 = vdwg.mxu0
    %v1577 = vadd.f32 %v1457, %v1526
    %v1578 = vadd.f32 %v1460, %v1529
    %v1579 = vxor.u32 %v1577, 2147483648
    %v1580 = vxor.u32 %v1578, 2147483648
    %v1581 = vmul.f32 %v1579, 1.442695
    %v1582 = vpow.pop %v1581
    %v1583 = vmul.f32 %v1580, 1.442695
    %v1584 = vpow.pop %v1583
    %v1585 = vadd.f32 %v1582, 1.0
    %v1586 = vadd.f32 %v1584, 1.0
    %v1587 = vrcp.pop %v1585
    %v1588 = vmul.f32 %v1585, %v1587
    %v1589 = vsub.f32 1.0, %v1588
    %v1590 = vmul.f32 %v1587, %v1589
    %v1591 = vadd.f32 %v1587, %v1590
    %vm1592 = vweird.f32 %v1585
    %vm1593 = vweird.f32 %v1587
    %vm1594 = vmor %vm1592, %vm1593
    %v1595 = vsel %vm1594, %v1587, %v1591
    %v1596 = vand.u32 2147483647, %v1585
    %vm1597 = vcmp.eq.f32.partialorder %v1596, 8.507059e+37
    %v1598 = vand.u32 %v1585, 2147483648
    %v1599 = vor.u32 1.1754944e-38, %v1598
    %v1600 = vsel %vm1597, %v1599, %v1595
    %v1601 = vmul.f32 1.0, %v1600
    %v1602 = vrcp.pop %v1586
    %v1603 = vmul.f32 %v1586, %v1602
    %v1604 = vsub.f32 1.0, %v1603
    %v1605 = vmul.f32 %v1602, %v1604
    %v1606 = vadd.f32 %v1602, %v1605
    %vm1607 = vweird.f32 %v1586
    %vm1608 = vweird.f32 %v1602
    %vm1609 = vmor %vm1607, %vm1608
    %v1610 = vsel %vm1609, %v1602, %v1606
    %v1611 = vand.u32 2147483647, %v1586
    %vm1612 = vcmp.eq.f32.partialorder %v1611, 8.507059e+37
    %v1613 = vand.u32 %v1586, 2147483648
    %v1614 = vor.u32 1.1754944e-38, %v1613
    %v1615 = vsel %vm1612, %v1614, %v1610
    %v1616 = vmul.f32 1.0, %v1615
    %v1617 = vadd.f32 %v1480, %v1549
    %v1618 = vadd.f32 %v1483, %v1552
    %v1619 = vxor.u32 %v1617, 2147483648
    %v1620 = vxor.u32 %v1618, 2147483648
    %v1621 = vmul.f32 %v1619, 1.442695
    %v1622 = vpow.pop %v1621
    %v1623 = vmul.f32 %v1620, 1.442695
    %v1624 = vpow.pop %v1623
    %v1625 = vadd.f32 %v1622, 1.0
    %v1626 = vadd.f32 %v1624, 1.0
    %v1627 = vrcp.pop %v1625
    %v1628 = vmul.f32 %v1625, %v1627
    %v1629 = vsub.f32 1.0, %v1628
    %v1630 = vmul.f32 %v1627, %v1629
    %v1631 = vadd.f32 %v1627, %v1630
    %vm1632 = vweird.f32 %v1625
    %vm1633 = vweird.f32 %v1627
    %vm1634 = vmor %vm1632, %vm1633
    %v1635 = vsel %vm1634, %v1627, %v1631
    %v1636 = vand.u32 2147483647, %v1625
    %vm1637 = vcmp.eq.f32.partialorder %v1636, 8.507059e+37
    %v1638 = vand.u32 %v1625, 2147483648
    %v1639 = vor.u32 1.1754944e-38, %v1638
    %v1640 = vsel %vm1637, %v1639, %v1635
    %v1641 = vmul.f32 1.0, %v1640
    %v1642 = vrcp.pop %v1626
    %v1643 = vmul.f32 %v1626, %v1642
    %v1644 = vsub.f32 1.0, %v1643
    %v1645 = vmul.f32 %v1642, %v1644
    %v1646 = vadd.f32 %v1642, %v1645
    %vm1647 = vweird.f32 %v1626
    %vm1648 = vweird.f32 %v1642
    %vm1649 = vmor %vm1647, %vm1648
    %v1650 = vsel %vm1649, %v1642, %v1646
    %v1651 = vand.u32 2147483647, %v1626
    %vm1652 = vcmp.eq.f32.partialorder %v1651, 8.507059e+37
    %v1653 = vand.u32 %v1626, 2147483648
    %v1654 = vor.u32 1.1754944e-38, %v1653
    %v1655 = vsel %vm1652, %v1654, %v1650
    %v1656 = vmul.f32 1.0, %v1655
    %v1657 = vmul.f32 %v1601, %v1572
    %v1658 = vmul.f32 %v1616, %v1575
    %v1659 = vadd.f32 %v1503, %v1657
    %v1660 = vadd.f32 %v1506, %v1658
    %v1661 = vtanh.pop %v1659
    %v1662 = vtanh.pop %v1660
    %v1663 = vsub.f32 1.0, %v1641
    %v1664 = vsub.f32 1.0, %v1656
    %v1665 = vmul.f32 %v1663, %v1661
    %v1666 = vmul.f32 %v1664, %v1662
    %v1667 = vmul.f32 %v1641, %v1431
    %v1668 = vmul.f32 %v1656, %v1432
    %v1669 = vadd.f32 %v1665, %v1667
    %v1670 = vadd.f32 %v1666, %v1668
    %v1672 = vsel %vm235, %v152, 0
    %v1675 = vsel %vm235, %v153, 0
    %1677 = vmatpush.msra.mxu0 0.0
    %1678 = vmatpush.msra.mxu0 0.0
    %1679 = vmatpush.msra.mxu0 0.0
    %1680 = vmatpush.msra.mxu0 0.0
    %1681 = vmatpush.msra.mxu0 0.0
    %1682 = vmatpush.msra.mxu0 0.0
    %1683 = vmatpush.msra.mxu0 0.0
    %1684 = vmatpush.msra.mxu0 0.0
    %1685 = vmatpush.msra.mxu0 0.0
    %1686 = vmatpush.msra.mxu0 0.0
    %1687 = vmatpush.msra.mxu0 0.0
    %1688 = vmatpush.msra.mxu0 0.0
    %1689 = vmatpush.msra.mxu0 %v175
    %1690 = vmatpush.msra.mxu0 %v172
    %1691 = vmatpush.msra.mxu0 %v169
    %1692 = vmatpush.msra.mxu0 %v166
    %1693 = vmatmul.f32.gmra.mxu0 %v1672
    %v1694 = vpop.f32.mrf.mxu0
    %v1695 = vadd.f32 %v229, %v1694
    %1696 = vmatmul.f32.gmra.mxu0 %v1675
    %v1697 = vpop.f32.mrf.mxu0
    %v1698 = vadd.f32 %v229, %v1697
    %1699 = vdwg.mxu0
    %1700 = vmatpush.msra.mxu0 0.0
    %1701 = vmatpush.msra.mxu0 0.0
    %1702 = vmatpush.msra.mxu0 0.0
    %1703 = vmatpush.msra.mxu0 0.0
    %1704 = vmatpush.msra.mxu0 0.0
    %1705 = vmatpush.msra.mxu0 0.0
    %1706 = vmatpush.msra.mxu0 0.0
    %1707 = vmatpush.msra.mxu0 0.0
    %1708 = vmatpush.msra.mxu0 0.0
    %1709 = vmatpush.msra.mxu0 0.0
    %1710 = vmatpush.msra.mxu0 0.0
    %1711 = vmatpush.msra.mxu0 0.0
    %1712 = vmatpush.msra.mxu0 %v176
    %1713 = vmatpush.msra.mxu0 %v173
    %1714 = vmatpush.msra.mxu0 %v170
    %1715 = vmatpush.msra.mxu0 %v167
    %1716 = vmatmul.f32.gmra.mxu0 %v1672
    %v1717 = vpop.f32.mrf.mxu0
    %v1718 = vadd.f32 %v230, %v1717
    %1719 = vmatmul.f32.gmra.mxu0 %v1675
    %v1720 = vpop.f32.mrf.mxu0
    %v1721 = vadd.f32 %v230, %v1720
    %1722 = vdwg.mxu0
    %1723 = vmatpush.msra.mxu0 0.0
    %1724 = vmatpush.msra.mxu0 0.0
    %1725 = vmatpush.msra.mxu0 0.0
    %1726 = vmatpush.msra.mxu0 0.0
    %1727 = vmatpush.msra.mxu0 0.0
    %1728 = vmatpush.msra.mxu0 0.0
    %1729 = vmatpush.msra.mxu0 0.0
    %1730 = vmatpush.msra.mxu0 0.0
    %1731 = vmatpush.msra.mxu0 0.0
    %1732 = vmatpush.msra.mxu0 0.0
    %1733 = vmatpush.msra.mxu0 0.0
    %1734 = vmatpush.msra.mxu0 0.0
    %1735 = vmatpush.msra.mxu0 %v177
    %1736 = vmatpush.msra.mxu0 %v174
    %1737 = vmatpush.msra.mxu0 %v171
    %1738 = vmatpush.msra.mxu0 %v168
    %1739 = vmatmul.f32.gmra.mxu0 %v1672
    %v1740 = vpop.f32.mrf.mxu0
    %v1741 = vadd.f32 %v231, %v1740
    %1742 = vmatmul.f32.gmra.mxu0 %v1675
    %v1743 = vpop.f32.mrf.mxu0
    %v1744 = vadd.f32 %v231, %v1743
    %1745 = vdwg.mxu0
    %1746 = vmatpush.msra.mxu0 %v224
    %1747 = vmatpush.msra.mxu0 %v221
    %1748 = vmatpush.msra.mxu0 %v218
    %1749 = vmatpush.msra.mxu0 %v215
    %1750 = vmatpush.msra.mxu0 %v212
    %1751 = vmatpush.msra.mxu0 %v209
    %1752 = vmatpush.msra.mxu0 %v206
    %1753 = vmatpush.msra.mxu0 %v203
    %1754 = vmatpush.msra.mxu0 %v200
    %1755 = vmatpush.msra.mxu0 %v197
    %1756 = vmatpush.msra.mxu0 %v194
    %1757 = vmatpush.msra.mxu0 %v191
    %1758 = vmatpush.msra.mxu0 %v188
    %1759 = vmatpush.msra.mxu0 %v185
    %1760 = vmatpush.msra.mxu0 %v182
    %1761 = vmatpush.msra.mxu0 %v179
    %1762 = vmatmul.f32.gmra.mxu0 %v1669
    %v1763 = vpop.f32.mrf.mxu0
    %v1764 = vadd.f32 %v312, %v1763
    %1765 = vmatmul.f32.gmra.mxu0 %v1670
    %v1766 = vpop.f32.mrf.mxu0
    %v1767 = vadd.f32 %v312, %v1766
    %1768 = vdwg.mxu0
    %1769 = vmatpush.msra.mxu0 %v225
    %1770 = vmatpush.msra.mxu0 %v222
    %1771 = vmatpush.msra.mxu0 %v219
    %1772 = vmatpush.msra.mxu0 %v216
    %1773 = vmatpush.msra.mxu0 %v213
    %1774 = vmatpush.msra.mxu0 %v210
    %1775 = vmatpush.msra.mxu0 %v207
    %1776 = vmatpush.msra.mxu0 %v204
    %1777 = vmatpush.msra.mxu0 %v201
    %1778 = vmatpush.msra.mxu0 %v198
    %1779 = vmatpush.msra.mxu0 %v195
    %1780 = vmatpush.msra.mxu0 %v192
    %1781 = vmatpush.msra.mxu0 %v189
    %1782 = vmatpush.msra.mxu0 %v186
    %1783 = vmatpush.msra.mxu0 %v183
    %1784 = vmatpush.msra.mxu0 %v180
    %1785 = vmatmul.f32.gmra.mxu0 %v1669
    %v1786 = vpop.f32.mrf.mxu0
    %v1787 = vadd.f32 %v313, %v1786
    %1788 = vmatmul.f32.gmra.mxu0 %v1670
    %v1789 = vpop.f32.mrf.mxu0
    %v1790 = vadd.f32 %v313, %v1789
    %1791 = vdwg.mxu0
    %1792 = vmatpush.msra.mxu0 %v226
    %1793 = vmatpush.msra.mxu0 %v223
    %1794 = vmatpush.msra.mxu0 %v220
    %1795 = vmatpush.msra.mxu0 %v217
    %1796 = vmatpush.msra.mxu0 %v214
    %1797 = vmatpush.msra.mxu0 %v211
    %1798 = vmatpush.msra.mxu0 %v208
    %1799 = vmatpush.msra.mxu0 %v205
    %1800 = vmatpush.msra.mxu0 %v202
    %1801 = vmatpush.msra.mxu0 %v199
    %1802 = vmatpush.msra.mxu0 %v196
    %1803 = vmatpush.msra.mxu0 %v193
    %1804 = vmatpush.msra.mxu0 %v190
    %1805 = vmatpush.msra.mxu0 %v187
    %1806 = vmatpush.msra.mxu0 %v184
    %1807 = vmatpush.msra.mxu0 %v181
    %1808 = vmatmul.f32.gmra.mxu0 %v1669
    %v1809 = vpop.f32.mrf.mxu0
    %v1810 = vadd.f32 %v314, %v1809
    %1811 = vmatmul.f32.gmra.mxu0 %v1670
    %v1812 = vpop.f32.mrf.mxu0
    %v1813 = vadd.f32 %v314, %v1812
    %1814 = vdwg.mxu0
    %v1815 = vadd.f32 %v1695, %v1764
    %v1816 = vadd.f32 %v1698, %v1767
    %v1817 = vxor.u32 %v1815, 2147483648
    %v1818 = vxor.u32 %v1816, 2147483648
    %v1819 = vmul.f32 %v1817, 1.442695
    %v1820 = vpow.pop %v1819
    %v1821 = vmul.f32 %v1818, 1.442695
    %v1822 = vpow.pop %v1821
    %v1823 = vadd.f32 %v1820, 1.0
    %v1824 = vadd.f32 %v1822, 1.0
    %v1825 = vrcp.pop %v1823
    %v1826 = vmul.f32 %v1823, %v1825
    %v1827 = vsub.f32 1.0, %v1826
    %v1828 = vmul.f32 %v1825, %v1827
    %v1829 = vadd.f32 %v1825, %v1828
    %vm1830 = vweird.f32 %v1823
    %vm1831 = vweird.f32 %v1825
    %vm1832 = vmor %vm1830, %vm1831
    %v1833 = vsel %vm1832, %v1825, %v1829
    %v1834 = vand.u32 2147483647, %v1823
    %vm1835 = vcmp.eq.f32.partialorder %v1834, 8.507059e+37
    %v1836 = vand.u32 %v1823, 2147483648
    %v1837 = vor.u32 1.1754944e-38, %v1836
    %v1838 = vsel %vm1835, %v1837, %v1833
    %v1839 = vmul.f32 1.0, %v1838
    %v1840 = vrcp.pop %v1824
    %v1841 = vmul.f32 %v1824, %v1840
    %v1842 = vsub.f32 1.0, %v1841
    %v1843 = vmul.f32 %v1840, %v1842
    %v1844 = vadd.f32 %v1840, %v1843
    %vm1845 = vweird.f32 %v1824
    %vm1846 = vweird.f32 %v1840
    %vm1847 = vmor %vm1845, %vm1846
    %v1848 = vsel %vm1847, %v1840, %v1844
    %v1849 = vand.u32 2147483647, %v1824
    %vm1850 = vcmp.eq.f32.partialorder %v1849, 8.507059e+37
    %v1851 = vand.u32 %v1824, 2147483648
    %v1852 = vor.u32 1.1754944e-38, %v1851
    %v1853 = vsel %vm1850, %v1852, %v1848
    %v1854 = vmul.f32 1.0, %v1853
    %v1855 = vadd.f32 %v1718, %v1787
    %v1856 = vadd.f32 %v1721, %v1790
    %v1857 = vxor.u32 %v1855, 2147483648
    %v1858 = vxor.u32 %v1856, 2147483648
    %v1859 = vmul.f32 %v1857, 1.442695
    %v1860 = vpow.pop %v1859
    %v1861 = vmul.f32 %v1858, 1.442695
    %v1862 = vpow.pop %v1861
    %v1863 = vadd.f32 %v1860, 1.0
    %v1864 = vadd.f32 %v1862, 1.0
    %v1865 = vrcp.pop %v1863
    %v1866 = vmul.f32 %v1863, %v1865
    %v1867 = vsub.f32 1.0, %v1866
    %v1868 = vmul.f32 %v1865, %v1867
    %v1869 = vadd.f32 %v1865, %v1868
    %vm1870 = vweird.f32 %v1863
    %vm1871 = vweird.f32 %v1865
    %vm1872 = vmor %vm1870, %vm1871
    %v1873 = vsel %vm1872, %v1865, %v1869
    %v1874 = vand.u32 2147483647, %v1863
    %vm1875 = vcmp.eq.f32.partialorder %v1874, 8.507059e+37
    %v1876 = vand.u32 %v1863, 2147483648
    %v1877 = vor.u32 1.1754944e-38, %v1876
    %v1878 = vsel %vm1875, %v1877, %v1873
    %v1879 = vmul.f32 1.0, %v1878
    %v1880 = vrcp.pop %v1864
    %v1881 = vmul.f32 %v1864, %v1880
    %v1882 = vsub.f32 1.0, %v1881
    %v1883 = vmul.f32 %v1880, %v1882
    %v1884 = vadd.f32 %v1880, %v1883
    %vm1885 = vweird.f32 %v1864
    %vm1886 = vweird.f32 %v1880
    %vm1887 = vmor %vm1885, %vm1886
    %v1888 = vsel %vm1887, %v1880, %v1884
    %v1889 = vand.u32 2147483647, %v1864
    %vm1890 = vcmp.eq.f32.partialorder %v1889, 8.507059e+37
    %v1891 = vand.u32 %v1864, 2147483648
    %v1892 = vor.u32 1.1754944e-38, %v1891
    %v1893 = vsel %vm1890, %v1892, %v1888
    %v1894 = vmul.f32 1.0, %v1893
    %v1895 = vmul.f32 %v1839, %v1810
    %v1896 = vmul.f32 %v1854, %v1813
    %v1897 = vadd.f32 %v1741, %v1895
    %v1898 = vadd.f32 %v1744, %v1896
    %v1899 = vtanh.pop %v1897
    %v1900 = vtanh.pop %v1898
    %v1901 = vsub.f32 1.0, %v1879
    %v1902 = vsub.f32 1.0, %v1894
    %v1903 = vmul.f32 %v1901, %v1899
    %v1904 = vmul.f32 %v1902, %v1900
    %v1905 = vmul.f32 %v1879, %v1669
    %v1906 = vmul.f32 %v1894, %v1670
    %v1907 = vadd.f32 %v1903, %v1905
    %v1908 = vadd.f32 %v1904, %v1906
    %v1910 = vsel %vm235, %v164, 0
    %v1913 = vsel %vm235, %v165, 0
    %1915 = vmatpush.msra.mxu0 0.0
    %1916 = vmatpush.msra.mxu0 0.0
    %1917 = vmatpush.msra.mxu0 0.0
    %1918 = vmatpush.msra.mxu0 0.0
    %1919 = vmatpush.msra.mxu0 0.0
    %1920 = vmatpush.msra.mxu0 0.0
    %1921 = vmatpush.msra.mxu0 0.0
    %1922 = vmatpush.msra.mxu0 0.0
    %1923 = vmatpush.msra.mxu0 0.0
    %1924 = vmatpush.msra.mxu0 0.0
    %1925 = vmatpush.msra.mxu0 0.0
    %1926 = vmatpush.msra.mxu0 0.0
    %1927 = vmatpush.msra.mxu0 %v175
    %1928 = vmatpush.msra.mxu0 %v172
    %1929 = vmatpush.msra.mxu0 %v169
    %1930 = vmatpush.msra.mxu0 %v166
    %1931 = vmatmul.f32.gmra.mxu0 %v1910
    %v1932 = vpop.f32.mrf.mxu0
    %v1933 = vadd.f32 %v229, %v1932
    %1934 = vmatmul.f32.gmra.mxu0 %v1913
    %v1935 = vpop.f32.mrf.mxu0
    %v1936 = vadd.f32 %v229, %v1935
    %1937 = vdwg.mxu0
    %1938 = vmatpush.msra.mxu0 0.0
    %1939 = vmatpush.msra.mxu0 0.0
    %1940 = vmatpush.msra.mxu0 0.0
    %1941 = vmatpush.msra.mxu0 0.0
    %1942 = vmatpush.msra.mxu0 0.0
    %1943 = vmatpush.msra.mxu0 0.0
    %1944 = vmatpush.msra.mxu0 0.0
    %1945 = vmatpush.msra.mxu0 0.0
    %1946 = vmatpush.msra.mxu0 0.0
    %1947 = vmatpush.msra.mxu0 0.0
    %1948 = vmatpush.msra.mxu0 0.0
    %1949 = vmatpush.msra.mxu0 0.0
    %1950 = vmatpush.msra.mxu0 %v176
    %1951 = vmatpush.msra.mxu0 %v173
    %1952 = vmatpush.msra.mxu0 %v170
    %1953 = vmatpush.msra.mxu0 %v167
    %1954 = vmatmul.f32.gmra.mxu0 %v1910
    %v1955 = vpop.f32.mrf.mxu0
    %v1956 = vadd.f32 %v230, %v1955
    %1957 = vmatmul.f32.gmra.mxu0 %v1913
    %v1958 = vpop.f32.mrf.mxu0
    %v1959 = vadd.f32 %v230, %v1958
    %1960 = vdwg.mxu0
    %1961 = vmatpush.msra.mxu0 0.0
    %1962 = vmatpush.msra.mxu0 0.0
    %1963 = vmatpush.msra.mxu0 0.0
    %1964 = vmatpush.msra.mxu0 0.0
    %1965 = vmatpush.msra.mxu0 0.0
    %1966 = vmatpush.msra.mxu0 0.0
    %1967 = vmatpush.msra.mxu0 0.0
    %1968 = vmatpush.msra.mxu0 0.0
    %1969 = vmatpush.msra.mxu0 0.0
    %1970 = vmatpush.msra.mxu0 0.0
    %1971 = vmatpush.msra.mxu0 0.0
    %1972 = vmatpush.msra.mxu0 0.0
    %1973 = vmatpush.msra.mxu0 %v177
    %1974 = vmatpush.msra.mxu0 %v174
    %1975 = vmatpush.msra.mxu0 %v171
    %1976 = vmatpush.msra.mxu0 %v168
    %1977 = vmatmul.f32.gmra.mxu0 %v1910
    %v1978 = vpop.f32.mrf.mxu0
    %v1979 = vadd.f32 %v231, %v1978
    %1980 = vmatmul.f32.gmra.mxu0 %v1913
    %v1981 = vpop.f32.mrf.mxu0
    %v1982 = vadd.f32 %v231, %v1981
    %1983 = vdwg.mxu0
    %1984 = vmatpush.msra.mxu0 %v224
    %1985 = vmatpush.msra.mxu0 %v221
    %1986 = vmatpush.msra.mxu0 %v218
    %1987 = vmatpush.msra.mxu0 %v215
    %1988 = vmatpush.msra.mxu0 %v212
    %1989 = vmatpush.msra.mxu0 %v209
    %1990 = vmatpush.msra.mxu0 %v206
    %1991 = vmatpush.msra.mxu0 %v203
    %1992 = vmatpush.msra.mxu0 %v200
    %1993 = vmatpush.msra.mxu0 %v197
    %1994 = vmatpush.msra.mxu0 %v194
    %1995 = vmatpush.msra.mxu0 %v191
    %1996 = vmatpush.msra.mxu0 %v188
    %1997 = vmatpush.msra.mxu0 %v185
    %1998 = vmatpush.msra.mxu0 %v182
    %1999 = vmatpush.msra.mxu0 %v179
    %2000 = vmatmul.f32.gmra.mxu0 %v1907
    %v2001 = vpop.f32.mrf.mxu0
    %v2002 = vadd.f32 %v312, %v2001
    %2003 = vmatmul.f32.gmra.mxu0 %v1908
    %v2004 = vpop.f32.mrf.mxu0
    %v2005 = vadd.f32 %v312, %v2004
    %2006 = vdwg.mxu0
    %2007 = vmatpush.msra.mxu0 %v225
    %2008 = vmatpush.msra.mxu0 %v222
    %2009 = vmatpush.msra.mxu0 %v219
    %2010 = vmatpush.msra.mxu0 %v216
    %2011 = vmatpush.msra.mxu0 %v213
    %2012 = vmatpush.msra.mxu0 %v210
    %2013 = vmatpush.msra.mxu0 %v207
    %2014 = vmatpush.msra.mxu0 %v204
    %2015 = vmatpush.msra.mxu0 %v201
    %2016 = vmatpush.msra.mxu0 %v198
    %2017 = vmatpush.msra.mxu0 %v195
    %2018 = vmatpush.msra.mxu0 %v192
    %2019 = vmatpush.msra.mxu0 %v189
    %2020 = vmatpush.msra.mxu0 %v186
    %2021 = vmatpush.msra.mxu0 %v183
    %2022 = vmatpush.msra.mxu0 %v180
    %2023 = vmatmul.f32.gmra.mxu0 %v1907
    %v2024 = vpop.f32.mrf.mxu0
    %v2025 = vadd.f32 %v313, %v2024
    %2026 = vmatmul.f32.gmra.mxu0 %v1908
    %v2027 = vpop.f32.mrf.mxu0
    %v2028 = vadd.f32 %v313, %v2027
    %2029 = vdwg.mxu0
    %2030 = vmatpush.msra.mxu0 %v226
    %2031 = vmatpush.msra.mxu0 %v223
    %2032 = vmatpush.msra.mxu0 %v220
    %2033 = vmatpush.msra.mxu0 %v217
    %2034 = vmatpush.msra.mxu0 %v214
    %2035 = vmatpush.msra.mxu0 %v211
    %2036 = vmatpush.msra.mxu0 %v208
    %2037 = vmatpush.msra.mxu0 %v205
    %2038 = vmatpush.msra.mxu0 %v202
    %2039 = vmatpush.msra.mxu0 %v199
    %2040 = vmatpush.msra.mxu0 %v196
    %2041 = vmatpush.msra.mxu0 %v193
    %2042 = vmatpush.msra.mxu0 %v190
    %2043 = vmatpush.msra.mxu0 %v187
    %2044 = vmatpush.msra.mxu0 %v184
    %2045 = vmatpush.msra.mxu0 %v181
    %2046 = vmatmul.f32.gmra.mxu0 %v1907
    %v2047 = vpop.f32.mrf.mxu0
    %v2048 = vadd.f32 %v314, %v2047
    %2049 = vmatmul.f32.gmra.mxu0 %v1908
    %v2050 = vpop.f32.mrf.mxu0
    %v2051 = vadd.f32 %v314, %v2050
    %2052 = vdwg.mxu0
    %v2053 = vadd.f32 %v1933, %v2002
    %v2054 = vadd.f32 %v1936, %v2005
    %v2055 = vxor.u32 %v2053, 2147483648
    %v2056 = vxor.u32 %v2054, 2147483648
    %v2057 = vmul.f32 %v2055, 1.442695
    %v2058 = vpow.pop %v2057
    %v2059 = vmul.f32 %v2056, 1.442695
    %v2060 = vpow.pop %v2059
    %v2061 = vadd.f32 %v2058, 1.0
    %v2062 = vadd.f32 %v2060, 1.0
    %v2063 = vrcp.pop %v2061
    %v2064 = vmul.f32 %v2061, %v2063
    %v2065 = vsub.f32 1.0, %v2064
    %v2066 = vmul.f32 %v2063, %v2065
    %v2067 = vadd.f32 %v2063, %v2066
    %vm2068 = vweird.f32 %v2061
    %vm2069 = vweird.f32 %v2063
    %vm2070 = vmor %vm2068, %vm2069
    %v2071 = vsel %vm2070, %v2063, %v2067
    %v2072 = vand.u32 2147483647, %v2061
    %vm2073 = vcmp.eq.f32.partialorder %v2072, 8.507059e+37
    %v2074 = vand.u32 %v2061, 2147483648
    %v2075 = vor.u32 1.1754944e-38, %v2074
    %v2076 = vsel %vm2073, %v2075, %v2071
    %v2077 = vmul.f32 1.0, %v2076
    %v2078 = vrcp.pop %v2062
    %v2079 = vmul.f32 %v2062, %v2078
    %v2080 = vsub.f32 1.0, %v2079
    %v2081 = vmul.f32 %v2078, %v2080
    %v2082 = vadd.f32 %v2078, %v2081
    %vm2083 = vweird.f32 %v2062
    %vm2084 = vweird.f32 %v2078
    %vm2085 = vmor %vm2083, %vm2084
    %v2086 = vsel %vm2085, %v2078, %v2082
    %v2087 = vand.u32 2147483647, %v2062
    %vm2088 = vcmp.eq.f32.partialorder %v2087, 8.507059e+37
    %v2089 = vand.u32 %v2062, 2147483648
    %v2090 = vor.u32 1.1754944e-38, %v2089
    %v2091 = vsel %vm2088, %v2090, %v2086
    %v2092 = vmul.f32 1.0, %v2091
    %v2093 = vadd.f32 %v1956, %v2025
    %v2094 = vadd.f32 %v1959, %v2028
    %v2095 = vxor.u32 %v2093, 2147483648
    %v2096 = vxor.u32 %v2094, 2147483648
    %v2097 = vmul.f32 %v2095, 1.442695
    %v2098 = vpow.pop %v2097
    %v2099 = vmul.f32 %v2096, 1.442695
    %v2100 = vpow.pop %v2099
    %v2101 = vadd.f32 %v2098, 1.0
    %v2102 = vadd.f32 %v2100, 1.0
    %v2103 = vrcp.pop %v2101
    %v2104 = vmul.f32 %v2101, %v2103
    %v2105 = vsub.f32 1.0, %v2104
    %v2106 = vmul.f32 %v2103, %v2105
    %v2107 = vadd.f32 %v2103, %v2106
    %vm2108 = vweird.f32 %v2101
    %vm2109 = vweird.f32 %v2103
    %vm2110 = vmor %vm2108, %vm2109
    %v2111 = vsel %vm2110, %v2103, %v2107
    %v2112 = vand.u32 2147483647, %v2101
    %vm2113 = vcmp.eq.f32.partialorder %v2112, 8.507059e+37
    %v2114 = vand.u32 %v2101, 2147483648
    %v2115 = vor.u32 1.1754944e-38, %v2114
    %v2116 = vsel %vm2113, %v2115, %v2111
    %v2117 = vmul.f32 1.0, %v2116
    %v2118 = vrcp.pop %v2102
    %v2119 = vmul.f32 %v2102, %v2118
    %v2120 = vsub.f32 1.0, %v2119
    %v2121 = vmul.f32 %v2118, %v2120
    %v2122 = vadd.f32 %v2118, %v2121
    %vm2123 = vweird.f32 %v2102
    %vm2124 = vweird.f32 %v2118
    %vm2125 = vmor %vm2123, %vm2124
    %v2126 = vsel %vm2125, %v2118, %v2122
    %v2127 = vand.u32 2147483647, %v2102
    %vm2128 = vcmp.eq.f32.partialorder %v2127, 8.507059e+37
    %v2129 = vand.u32 %v2102, 2147483648
    %v2130 = vor.u32 1.1754944e-38, %v2129
    %v2131 = vsel %vm2128, %v2130, %v2126
    %v2132 = vmul.f32 1.0, %v2131
    %v2133 = vmul.f32 %v2077, %v2048
    %v2134 = vmul.f32 %v2092, %v2051
    %v2135 = vadd.f32 %v1979, %v2133
    %v2136 = vadd.f32 %v1982, %v2134
    %v2137 = vtanh.pop %v2135
    %v2138 = vtanh.pop %v2136
    %v2139 = vsub.f32 1.0, %v2117
    %v2140 = vsub.f32 1.0, %v2132
    %v2141 = vmul.f32 %v2139, %v2137
    %v2142 = vmul.f32 %v2140, %v2138
    %v2143 = vmul.f32 %v2117, %v1907
    %v2144 = vmul.f32 %v2132, %v1908
    %v2145 = vadd.f32 %v2141, %v2143
    %v2146 = vadd.f32 %v2142, %v2144
    %v2147 = vld [vmem:[%s6] sm:$0xff]
    %v2148 = vld [vmem:[%s6 + $0x8] sm:$0xff]
    %v2149 = vld [vmem:[%s6 + $0x10] sm:$0xff]
    %v2150 = vld [vmem:[%s6 + $0x18] sm:$0xff]
    %v2151 = vld [vmem:[%s6 + $0x20] sm:$0xff]
    %v2152 = vld [vmem:[%s6 + $0x28] sm:$0xff]
    %v2153 = vld [vmem:[%s6 + $0x30] sm:$0xff]
    %v2154 = vld [vmem:[%s6 + $0x38] sm:$0xff]
    %v2155 = vld [vmem:[%s6 + $0x40] sm:$0xff]
    %v2156 = vld [vmem:[%s6 + $0x48] sm:$0xff]
    %v2157 = vld [vmem:[%s6 + $0x50] sm:$0xff]
    %v2158 = vld [vmem:[%s6 + $0x58] sm:$0xff]
    %v2159 = vld [vmem:[%s7] sm:$0x7]
    %v2160 = vld [vmem:[#allocation4] sm:$0xff]
    %v2161 = vld [vmem:[#allocation4 + $0x8] sm:$0xff]
    %v2162 = vld [vmem:[#allocation4 + $0x10] sm:$0xff]
    %v2163 = vld [vmem:[#allocation4 + $0x18] sm:$0xff]
    %v2164 = vld [vmem:[#allocation4 + $0x20] sm:$0xff]
    %v2165 = vld [vmem:[#allocation4 + $0x28] sm:$0xff]
    %v2166 = vld [vmem:[#allocation4 + $0x30] sm:$0xff]
    %v2167 = vld [vmem:[#allocation4 + $0x38] sm:$0xff]
    %v2168 = vld [vmem:[#allocation4 + $0x40] sm:$0xff]
    %v2169 = vld [vmem:[#allocation4 + $0x48] sm:$0xff]
    %v2170 = vld [vmem:[#allocation4 + $0x50] sm:$0xff]
    %v2171 = vld [vmem:[#allocation4 + $0x58] sm:$0xff]
    %v2172 = vld [vmem:[#allocation4 + $0x60] sm:$0xff]
    %v2173 = vld [vmem:[#allocation4 + $0x68] sm:$0xff]
    %v2174 = vld [vmem:[#allocation4 + $0x70] sm:$0xff]
    %v2175 = vld [vmem:[#allocation4 + $0x78] sm:$0xff]
    %v2176 = vld [vmem:[#allocation4 + $0x80] sm:$0xff]
    %v2177 = vld [vmem:[#allocation4 + $0x88] sm:$0xff]
    %v2178 = vld [vmem:[#allocation4 + $0x90] sm:$0xff]
    %v2179 = vld [vmem:[#allocation4 + $0x98] sm:$0xff]
    %v2180 = vld [vmem:[#allocation4 + $0xa0] sm:$0xff]
    %v2181 = vld [vmem:[#allocation4 + $0xa8] sm:$0xff]
    %v2182 = vld [vmem:[#allocation4 + $0xb0] sm:$0xff]
    %v2183 = vld [vmem:[#allocation4 + $0xb8] sm:$0xff]
    %v2184 = vld [vmem:[#allocation4 + $0xc0] sm:$0xff]
    %v2185 = vld [vmem:[#allocation4 + $0xc8] sm:$0xff]
    %v2186 = vld [vmem:[#allocation4 + $0xd0] sm:$0xff]
    %v2187 = vld [vmem:[#allocation4 + $0xd8] sm:$0xff]
    %v2188 = vld [vmem:[#allocation4 + $0xe0] sm:$0xff]
    %v2189 = vld [vmem:[#allocation4 + $0xe8] sm:$0xff]
    %v2190 = vld [vmem:[#allocation4 + $0xf0] sm:$0xff]
    %v2191 = vld [vmem:[#allocation4 + $0xf8] sm:$0xff]
    %v2192 = vld [vmem:[#allocation4 + $0x100] sm:$0xff]
    %v2193 = vld [vmem:[#allocation4 + $0x108] sm:$0xff]
    %v2194 = vld [vmem:[#allocation4 + $0x110] sm:$0xff]
    %v2195 = vld [vmem:[#allocation4 + $0x118] sm:$0xff]
    %v2196 = vld [vmem:[#allocation4 + $0x120] sm:$0xff]
    %v2197 = vld [vmem:[#allocation4 + $0x128] sm:$0xff]
    %v2198 = vld [vmem:[#allocation4 + $0x130] sm:$0xff]
    %v2199 = vld [vmem:[#allocation4 + $0x138] sm:$0xff]
    %v2200 = vld [vmem:[#allocation4 + $0x140] sm:$0xff]
    %v2201 = vld [vmem:[#allocation4 + $0x148] sm:$0xff]
    %v2202 = vld [vmem:[#allocation4 + $0x150] sm:$0xff]
    %v2203 = vld [vmem:[#allocation4 + $0x158] sm:$0xff]
    %v2204 = vld [vmem:[#allocation4 + $0x160] sm:$0xff]
    %v2205 = vld [vmem:[#allocation4 + $0x168] sm:$0xff]
    %v2206 = vld [vmem:[#allocation4 + $0x170] sm:$0xff]
    %v2207 = vld [vmem:[#allocation4 + $0x178] sm:$0xff]
    %v2208 = vld [vmem:[%s9] sm:$0x7]
    %v2209 = vld [vmem:[%s10] sm:$0xff]
    %v2210 = vld [vmem:[%s10 + $0x8] sm:$0xff]
    %v2211 = vld [vmem:[%s10 + $0x10] sm:$0xff]
    %v2212 = vld [vmem:[%s10 + $0x18] sm:$0xff]
    %v2213 = vld [vmem:[%s10 + $0x20] sm:$0xff]
    %v2214 = vld [vmem:[%s10 + $0x28] sm:$0xff]
    %v2215 = vld [vmem:[%s10 + $0x30] sm:$0xff]
    %v2216 = vld [vmem:[%s10 + $0x38] sm:$0xff]
    %v2217 = vld [vmem:[%s10 + $0x40] sm:$0xff]
    %v2218 = vld [vmem:[%s10 + $0x48] sm:$0xff]
    %v2219 = vld [vmem:[%s10 + $0x50] sm:$0xff]
    %v2220 = vld [vmem:[%s10 + $0x58] sm:$0xff]
    %v2221 = vld [vmem:[%s10 + $0x60] sm:$0xff]
    %v2222 = vld [vmem:[%s10 + $0x68] sm:$0xff]
    %v2223 = vld [vmem:[%s10 + $0x70] sm:$0xff]
    %v2224 = vld [vmem:[%s10 + $0x78] sm:$0xff]
    %v2225 = vld [vmem:[%s11] sm:$0x1]
    %v2226 = vld [vmem:[%s12] sm:$0xff]
    %v2227 = vld [vmem:[%s12 + $0x8] sm:$0xff]
    %v2228 = vld [vmem:[%s12 + $0x10] sm:$0xff]
    %v2229 = vld [vmem:[%s12 + $0x18] sm:$0xff]
    %v2230 = vld [vmem:[%s13] sm:$0x1]
    %vm2231 = vcmp.eq.s32.totalorder %v69, 0
    %v2232 = vsel %vm2231, 1, 0
    %v2233 = vcvt.s32.f32 %v2232
    %v2235 = vperm.slane %v2159, 0
    %v2236 = vperm.slane %v2159, 1
    %v2237 = vperm.slane %v2159, 2
    %v2242 = vsel %vm235, %v2233, 0
    %2244 = vmatpush.msra.mxu0 0.0
    %2245 = vmatpush.msra.mxu0 0.0
    %2246 = vmatpush.msra.mxu0 0.0
    %2247 = vmatpush.msra.mxu0 0.0
    %2248 = vmatpush.msra.mxu0 0.0
    %2249 = vmatpush.msra.mxu0 0.0
    %2250 = vmatpush.msra.mxu0 0.0
    %2251 = vmatpush.msra.mxu0 0.0
    %2252 = vmatpush.msra.mxu0 0.0
    %2253 = vmatpush.msra.mxu0 0.0
    %2254 = vmatpush.msra.mxu0 0.0
    %2255 = vmatpush.msra.mxu0 0.0
    %2256 = vmatpush.msra.mxu0 %v2156
    %2257 = vmatpush.msra.mxu0 %v2153
    %2258 = vmatpush.msra.mxu0 %v2150
    %2259 = vmatpush.msra.mxu0 %v2147
    %2260 = vmatmul.f32.gmra.mxu0 %v2242
    %v2261 = vpop.f32.mrf.mxu0
    %v2262 = vadd.f32 %v2235, %v2261
    %2263 = vmatmul.f32.gmra.mxu0 %v2242
    %v2264 = vpop.f32.mrf.mxu0
    %v2265 = vadd.f32 %v2235, %v2264
    %2266 = vdwg.mxu0
    %2267 = vmatpush.msra.mxu0 0.0
    %2268 = vmatpush.msra.mxu0 0.0
    %2269 = vmatpush.msra.mxu0 0.0
    %2270 = vmatpush.msra.mxu0 0.0
    %2271 = vmatpush.msra.mxu0 0.0
    %2272 = vmatpush.msra.mxu0 0.0
    %2273 = vmatpush.msra.mxu0 0.0
    %2274 = vmatpush.msra.mxu0 0.0
    %2275 = vmatpush.msra.mxu0 0.0
    %2276 = vmatpush.msra.mxu0 0.0
    %2277 = vmatpush.msra.mxu0 0.0
    %2278 = vmatpush.msra.mxu0 0.0
    %2279 = vmatpush.msra.mxu0 %v2157
    %2280 = vmatpush.msra.mxu0 %v2154
    %2281 = vmatpush.msra.mxu0 %v2151
    %2282 = vmatpush.msra.mxu0 %v2148
    %2283 = vmatmul.f32.gmra.mxu0 %v2242
    %v2284 = vpop.f32.mrf.mxu0
    %v2285 = vadd.f32 %v2236, %v2284
    %2286 = vmatmul.f32.gmra.mxu0 %v2242
    %v2287 = vpop.f32.mrf.mxu0
    %v2288 = vadd.f32 %v2236, %v2287
    %2289 = vdwg.mxu0
    %2290 = vmatpush.msra.mxu0 0.0
    %2291 = vmatpush.msra.mxu0 0.0
    %2292 = vmatpush.msra.mxu0 0.0
    %2293 = vmatpush.msra.mxu0 0.0
    %2294 = vmatpush.msra.mxu0 0.0
    %2295 = vmatpush.msra.mxu0 0.0
    %2296 = vmatpush.msra.mxu0 0.0
    %2297 = vmatpush.msra.mxu0 0.0
    %2298 = vmatpush.msra.mxu0 0.0
    %2299 = vmatpush.msra.mxu0 0.0
    %2300 = vmatpush.msra.mxu0 0.0
    %2301 = vmatpush.msra.mxu0 0.0
    %2302 = vmatpush.msra.mxu0 %v2158
    %2303 = vmatpush.msra.mxu0 %v2155
    %2304 = vmatpush.msra.mxu0 %v2152
    %2305 = vmatpush.msra.mxu0 %v2149
    %2306 = vmatmul.f32.gmra.mxu0 %v2242
    %v2307 = vpop.f32.mrf.mxu0
    %v2308 = vadd.f32 %v2237, %v2307
    %2309 = vmatmul.f32.gmra.mxu0 %v2242
    %v2310 = vpop.f32.mrf.mxu0
    %v2311 = vadd.f32 %v2237, %v2310
    %2312 = vdwg.mxu0
    %v2314 = vperm.slane %v2208, 0
    %v2315 = vperm.slane %v2208, 1
    %v2316 = vperm.slane %v2208, 2
    %2320 = vmatpush.msra.mxu0 %v2205
    %2321 = vmatpush.msra.mxu0 %v2202
    %2322 = vmatpush.msra.mxu0 %v2199
    %2323 = vmatpush.msra.mxu0 %v2196
    %2324 = vmatpush.msra.mxu0 %v2193
    %2325 = vmatpush.msra.mxu0 %v2190
    %2326 = vmatpush.msra.mxu0 %v2187
    %2327 = vmatpush.msra.mxu0 %v2184
    %2328 = vmatpush.msra.mxu0 %v2181
    %2329 = vmatpush.msra.mxu0 %v2178
    %2330 = vmatpush.msra.mxu0 %v2175
    %2331 = vmatpush.msra.mxu0 %v2172
    %2332 = vmatpush.msra.mxu0 %v2169
    %2333 = vmatpush.msra.mxu0 %v2166
    %2334 = vmatpush.msra.mxu0 %v2163
    %2335 = vmatpush.msra.mxu0 %v2160
    %2336 = vmatmul.f32.gmra.mxu0 %v2145
    %v2337 = vpop.f32.mrf.mxu0
    %v2338 = vadd.f32 %v2314, %v2337
    %2339 = vmatmul.f32.gmra.mxu0 %v2146
    %v2340 = vpop.f32.mrf.mxu0
    %v2341 = vadd.f32 %v2314, %v2340
    %2342 = vdwg.mxu0
    %2343 = vmatpush.msra.mxu0 %v2206
    %2344 = vmatpush.msra.mxu0 %v2203
    %2345 = vmatpush.msra.mxu0 %v2200
    %2346 = vmatpush.msra.mxu0 %v2197
    %2347 = vmatpush.msra.mxu0 %v2194
    %2348 = vmatpush.msra.mxu0 %v2191
    %2349 = vmatpush.msra.mxu0 %v2188
    %2350 = vmatpush.msra.mxu0 %v2185
    %2351 = vmatpush.msra.mxu0 %v2182
    %2352 = vmatpush.msra.mxu0 %v2179
    %2353 = vmatpush.msra.mxu0 %v2176
    %2354 = vmatpush.msra.mxu0 %v2173
    %2355 = vmatpush.msra.mxu0 %v2170
    %2356 = vmatpush.msra.mxu0 %v2167
    %2357 = vmatpush.msra.mxu0 %v2164
    %2358 = vmatpush.msra.mxu0 %v2161
    %2359 = vmatmul.f32.gmra.mxu0 %v2145
    %v2360 = vpop.f32.mrf.mxu0
    %v2361 = vadd.f32 %v2315, %v2360
    %2362 = vmatmul.f32.gmra.mxu0 %v2146
    %v2363 = vpop.f32.mrf.mxu0
    %v2364 = vadd.f32 %v2315, %v2363
    %2365 = vdwg.mxu0
    %2366 = vmatpush.msra.mxu0 %v2207
    %2367 = vmatpush.msra.mxu0 %v2204
    %2368 = vmatpush.msra.mxu0 %v2201
    %2369 = vmatpush.msra.mxu0 %v2198
    %2370 = vmatpush.msra.mxu0 %v2195
    %2371 = vmatpush.msra.mxu0 %v2192
    %2372 = vmatpush.msra.mxu0 %v2189
    %2373 = vmatpush.msra.mxu0 %v2186
    %2374 = vmatpush.msra.mxu0 %v2183
    %2375 = vmatpush.msra.mxu0 %v2180
    %2376 = vmatpush.msra.mxu0 %v2177
    %2377 = vmatpush.msra.mxu0 %v2174
    %2378 = vmatpush.msra.mxu0 %v2171
    %2379 = vmatpush.msra.mxu0 %v2168
    %2380 = vmatpush.msra.mxu0 %v2165
    %2381 = vmatpush.msra.mxu0 %v2162
    %2382 = vmatmul.f32.gmra.mxu0 %v2145
    %v2383 = vpop.f32.mrf.mxu0
    %v2384 = vadd.f32 %v2316, %v2383
    %2385 = vmatmul.f32.gmra.mxu0 %v2146
    %v2386 = vpop.f32.mrf.mxu0
    %v2387 = vadd.f32 %v2316, %v2386
    %2388 = vdwg.mxu0
    %v2389 = vadd.f32 %v2262, %v2338
    %v2390 = vadd.f32 %v2265, %v2341
    %v2391 = vxor.u32 %v2389, 2147483648
    %v2392 = vxor.u32 %v2390, 2147483648
    %v2393 = vmul.f32 %v2391, 1.442695
    %v2394 = vpow.pop %v2393
    %v2395 = vmul.f32 %v2392, 1.442695
    %v2396 = vpow.pop %v2395
    %v2397 = vadd.f32 %v2394, 1.0
    %v2398 = vadd.f32 %v2396, 1.0
    %v2399 = vrcp.pop %v2397
    %v2400 = vmul.f32 %v2397, %v2399
    %v2401 = vsub.f32 1.0, %v2400
    %v2402 = vmul.f32 %v2399, %v2401
    %v2403 = vadd.f32 %v2399, %v2402
    %vm2404 = vweird.f32 %v2397
    %vm2405 = vweird.f32 %v2399
    %vm2406 = vmor %vm2404, %vm2405
    %v2407 = vsel %vm2406, %v2399, %v2403
    %v2408 = vand.u32 2147483647, %v2397
    %vm2409 = vcmp.eq.f32.partialorder %v2408, 8.507059e+37
    %v2410 = vand.u32 %v2397, 2147483648
    %v2411 = vor.u32 1.1754944e-38, %v2410
    %v2412 = vsel %vm2409, %v2411, %v2407
    %v2413 = vmul.f32 1.0, %v2412
    %v2414 = vrcp.pop %v2398
    %v2415 = vmul.f32 %v2398, %v2414
    %v2416 = vsub.f32 1.0, %v2415
    %v2417 = vmul.f32 %v2414, %v2416
    %v2418 = vadd.f32 %v2414, %v2417
    %vm2419 = vweird.f32 %v2398
    %vm2420 = vweird.f32 %v2414
    %vm2421 = vmor %vm2419, %vm2420
    %v2422 = vsel %vm2421, %v2414, %v2418
    %v2423 = vand.u32 2147483647, %v2398
    %vm2424 = vcmp.eq.f32.partialorder %v2423, 8.507059e+37
    %v2425 = vand.u32 %v2398, 2147483648
    %v2426 = vor.u32 1.1754944e-38, %v2425
    %v2427 = vsel %vm2424, %v2426, %v2422
    %v2428 = vmul.f32 1.0, %v2427
    %v2429 = vadd.f32 %v2285, %v2361
    %v2430 = vadd.f32 %v2288, %v2364
    %v2431 = vxor.u32 %v2429, 2147483648
    %v2432 = vxor.u32 %v2430, 2147483648
    %v2433 = vmul.f32 %v2431, 1.442695
    %v2434 = vpow.pop %v2433
    %v2435 = vmul.f32 %v2432, 1.442695
    %v2436 = vpow.pop %v2435
    %v2437 = vadd.f32 %v2434, 1.0
    %v2438 = vadd.f32 %v2436, 1.0
    %v2439 = vrcp.pop %v2437
    %v2440 = vmul.f32 %v2437, %v2439
    %v2441 = vsub.f32 1.0, %v2440
    %v2442 = vmul.f32 %v2439, %v2441
    %v2443 = vadd.f32 %v2439, %v2442
    %vm2444 = vweird.f32 %v2437
    %vm2445 = vweird.f32 %v2439
    %vm2446 = vmor %vm2444, %vm2445
    %v2447 = vsel %vm2446, %v2439, %v2443
    %v2448 = vand.u32 2147483647, %v2437
    %vm2449 = vcmp.eq.f32.partialorder %v2448, 8.507059e+37
    %v2450 = vand.u32 %v2437, 2147483648
    %v2451 = vor.u32 1.1754944e-38, %v2450
    %v2452 = vsel %vm2449, %v2451, %v2447
    %v2453 = vmul.f32 1.0, %v2452
    %v2454 = vrcp.pop %v2438
    %v2455 = vmul.f32 %v2438, %v2454
    %v2456 = vsub.f32 1.0, %v2455
    %v2457 = vmul.f32 %v2454, %v2456
    %v2458 = vadd.f32 %v2454, %v2457
    %vm2459 = vweird.f32 %v2438
    %vm2460 = vweird.f32 %v2454
    %vm2461 = vmor %vm2459, %vm2460
    %v2462 = vsel %vm2461, %v2454, %v2458
    %v2463 = vand.u32 2147483647, %v2438
    %vm2464 = vcmp.eq.f32.partialorder %v2463, 8.507059e+37
    %v2465 = vand.u32 %v2438, 2147483648
    %v2466 = vor.u32 1.1754944e-38, %v2465
    %v2467 = vsel %vm2464, %v2466, %v2462
    %v2468 = vmul.f32 1.0, %v2467
    %v2469 = vmul.f32 %v2413, %v2384
    %v2470 = vmul.f32 %v2428, %v2387
    %v2471 = vadd.f32 %v2308, %v2469
    %v2472 = vadd.f32 %v2311, %v2470
    %v2473 = vtanh.pop %v2471
    %v2474 = vtanh.pop %v2472
    %v2475 = vsub.f32 1.0, %v2453
    %v2476 = vsub.f32 1.0, %v2468
    %v2477 = vmul.f32 %v2475, %v2473
    %v2478 = vmul.f32 %v2476, %v2474
    %v2479 = vmul.f32 %v2453, %v2145
    %v2480 = vmul.f32 %v2468, %v2146
    %v2481 = vadd.f32 %v2477, %v2479
    %v2482 = vadd.f32 %v2478, %v2480
    %v2484 = vperm.slane %v2225, 0
    %2486 = vmatpush.msra.mxu0 %v2224
    %2487 = vmatpush.msra.mxu0 %v2223
    %2488 = vmatpush.msra.mxu0 %v2222
    %2489 = vmatpush.msra.mxu0 %v2221
    %2490 = vmatpush.msra.mxu0 %v2220
    %2491 = vmatpush.msra.mxu0 %v2219
    %2492 = vmatpush.msra.mxu0 %v2218
    %2493 = vmatpush.msra.mxu0 %v2217
    %2494 = vmatpush.msra.mxu0 %v2216
    %2495 = vmatpush.msra.mxu0 %v2215
    %2496 = vmatpush.msra.mxu0 %v2214
    %2497 = vmatpush.msra.mxu0 %v2213
    %2498 = vmatpush.msra.mxu0 %v2212
    %2499 = vmatpush.msra.mxu0 %v2211
    %2500 = vmatpush.msra.mxu0 %v2210
    %2501 = vmatpush.msra.mxu0 %v2209
    %2502 = vmatmul.f32.gmra.mxu0 %v2481
    %v2503 = vpop.f32.mrf.mxu0
    %v2504 = vadd.f32 %v2484, %v2503
    %2505 = vmatmul.f32.gmra.mxu0 %v2482
    %v2506 = vpop.f32.mrf.mxu0
    %v2507 = vadd.f32 %v2484, %v2506
    %2508 = vdwg.mxu0
    %vm2509 = vcmask 64512
    %v2510 = vsel %vm2509, %v2504, -inf
    %2511 = vmax.xlane.f32.xlu0 %v2510
    %v2512 = vpop.xlane.xlu0 %2511
    %v2513 = vsel %vm2509, %v2507, -inf
    %2514 = vmax.xlane.f32.xlu0 %v2513
    %v2515 = vpop.xlane.xlu0 %2514
    %v2516 = vsub.f32 %v2504, %v2512
    %v2517 = vsub.f32 %v2507, %v2515
    %v2518 = vmul.f32 %v2516, 1.442695
    %v2519 = vpow.pop %v2518
    %v2520 = vmul.f32 %v2517, 1.442695
    %v2521 = vpow.pop %v2520
    %v2522 = vsel %vm2509, %v2519, 0.0
    %2523 = vadd.xlane.f32.xlu0 %v2522
    %v2524 = vpop.xlane.xlu0 %2523
    %v2525 = vsel %vm2509, %v2521, 0.0
    %2526 = vadd.xlane.f32.xlu0 %v2525
    %v2527 = vpop.xlane.xlu0 %2526
    %v2528 = vrcp.pop %v2524
    %v2529 = vmul.f32 %v2524, %v2528
    %v2530 = vsub.f32 1.0, %v2529
    %v2531 = vmul.f32 %v2528, %v2530
    %v2532 = vadd.f32 %v2528, %v2531
    %vm2533 = vweird.f32 %v2524
    %vm2534 = vweird.f32 %v2528
    %vm2535 = vmor %vm2533, %vm2534
    %v2536 = vsel %vm2535, %v2528, %v2532
    %v2537 = vand.u32 2147483647, %v2524
    %vm2538 = vcmp.eq.f32.partialorder %v2537, 8.507059e+37
    %v2539 = vand.u32 %v2524, 2147483648
    %v2540 = vor.u32 1.1754944e-38, %v2539
    %v2541 = vsel %vm2538, %v2540, %v2536
    %v2542 = vrcp.pop %v2527
    %v2543 = vmul.f32 %v2527, %v2542
    %v2544 = vsub.f32 1.0, %v2543
    %v2545 = vmul.f32 %v2542, %v2544
    %v2546 = vadd.f32 %v2542, %v2545
    %vm2547 = vweird.f32 %v2527
    %vm2548 = vweird.f32 %v2542
    %vm2549 = vmor %vm2547, %vm2548
    %v2550 = vsel %vm2549, %v2542, %v2546
    %v2551 = vand.u32 2147483647, %v2527
    %vm2552 = vcmp.eq.f32.partialorder %v2551, 8.507059e+37
    %v2553 = vand.u32 %v2527, 2147483648
    %v2554 = vor.u32 1.1754944e-38, %v2553
    %v2555 = vsel %vm2552, %v2554, %v2550
    %v2556 = vmul.f32 %v2519, %v2541
    %v2557 = vmul.f32 %v2521, %v2555
    %2559 = vset.pattern.permute.xlu0 0
    %2560 = vperm.xlu0 %2559, %v2556
    %v2561 = vpop.permute.xlu0 %2560
    %2564 = vset.pattern.permute.xlu0 0
    %2565 = vperm.xlu0 %2564, %v2557
    %v2566 = vpop.permute.xlu0 %2565
    %v2568 = vmul.f32 %v2561, %v80
    %v2569 = vmul.f32 %v2566, %v81
    %2570 = vset.pattern.permute.xlu0 1
    %2571 = vperm.xlu0 %2570, %v2556
    %v2572 = vpop.permute.xlu0 %2571
    %2574 = vset.pattern.permute.xlu0 1
    %2575 = vperm.xlu0 %2574, %v2557
    %v2576 = vpop.permute.xlu0 %2575
    %v2578 = vmul.f32 %v2572, %v92
    %v2579 = vmul.f32 %v2576, %v93
    %v2580 = vadd.f32 %v2568, %v2578
    %v2581 = vadd.f32 %v2569, %v2579
    %2582 = vset.pattern.permute.xlu0 2
    %2583 = vperm.xlu0 %2582, %v2556
    %v2584 = vpop.permute.xlu0 %2583
    %2586 = vset.pattern.permute.xlu0 2
    %2587 = vperm.xlu0 %2586, %v2557
    %v2588 = vpop.permute.xlu0 %2587
    %v2590 = vmul.f32 %v2584, %v104
    %v2591 = vmul.f32 %v2588, %v105
    %v2592 = vadd.f32 %v2580, %v2590
    %v2593 = vadd.f32 %v2581, %v2591
    %2594 = vset.pattern.permute.xlu0 3
    %2595 = vperm.xlu0 %2594, %v2556
    %v2596 = vpop.permute.xlu0 %2595
    %2598 = vset.pattern.permute.xlu0 3
    %2599 = vperm.xlu0 %2598, %v2557
    %v2600 = vpop.permute.xlu0 %2599
    %v2602 = vmul.f32 %v2596, %v116
    %v2603 = vmul.f32 %v2600, %v117
    %v2604 = vadd.f32 %v2592, %v2602
    %v2605 = vadd.f32 %v2593, %v2603
    %2606 = vset.pattern.permute.xlu0 4
    %2607 = vperm.xlu0 %2606, %v2556
    %v2608 = vpop.permute.xlu0 %2607
    %2610 = vset.pattern.permute.xlu0 4
    %2611 = vperm.xlu0 %2610, %v2557
    %v2612 = vpop.permute.xlu0 %2611
    %v2614 = vmul.f32 %v2608, %v128
    %v2615 = vmul.f32 %v2612, %v129
    %v2616 = vadd.f32 %v2604, %v2614
    %v2617 = vadd.f32 %v2605, %v2615
    %2618 = vset.pattern.permute.xlu0 5
    %2619 = vperm.xlu0 %2618, %v2556
    %v2620 = vpop.permute.xlu0 %2619
    %2622 = vset.pattern.permute.xlu0 5
    %2623 = vperm.xlu0 %2622, %v2557
    %v2624 = vpop.permute.xlu0 %2623
    %v2626 = vmul.f32 %v2620, %v140
    %v2627 = vmul.f32 %v2624, %v141
    %v2628 = vadd.f32 %v2616, %v2626
    %v2629 = vadd.f32 %v2617, %v2627
    %2630 = vset.pattern.permute.xlu0 6
    %2631 = vperm.xlu0 %2630, %v2556
    %v2632 = vpop.permute.xlu0 %2631
    %2634 = vset.pattern.permute.xlu0 6
    %2635 = vperm.xlu0 %2634, %v2557
    %v2636 = vpop.permute.xlu0 %2635
    %v2638 = vmul.f32 %v2632, %v152
    %v2639 = vmul.f32 %v2636, %v153
    %v2640 = vadd.f32 %v2628, %v2638
    %v2641 = vadd.f32 %v2629, %v2639
    %2642 = vset.pattern.permute.xlu0 7
    %2643 = vperm.xlu0 %2642, %v2556
    %v2644 = vpop.permute.xlu0 %2643
    %2646 = vset.pattern.permute.xlu0 7
    %2647 = vperm.xlu0 %2646, %v2557
    %v2648 = vpop.permute.xlu0 %2647
    %v2650 = vmul.f32 %v2644, %v164
    %v2651 = vmul.f32 %v2648, %v165
    %v2652 = vadd.f32 %v2640, %v2650
    %v2653 = vadd.f32 %v2641, %v2651
    %v2655 = vperm.slane %v2230, 0
    %v2658 = vsel %vm235, %v2652, 0
    %v2661 = vsel %vm235, %v2653, 0
    %2663 = vmatpush.msra.mxu0 0.0
    %2664 = vmatpush.msra.mxu0 0.0
    %2665 = vmatpush.msra.mxu0 0.0
    %2666 = vmatpush.msra.mxu0 0.0
    %2667 = vmatpush.msra.mxu0 0.0
    %2668 = vmatpush.msra.mxu0 0.0
    %2669 = vmatpush.msra.mxu0 0.0
    %2670 = vmatpush.msra.mxu0 0.0
    %2671 = vmatpush.msra.mxu0 0.0
    %2672 = vmatpush.msra.mxu0 0.0
    %2673 = vmatpush.msra.mxu0 0.0
    %2674 = vmatpush.msra.mxu0 0.0
    %2675 = vmatpush.msra.mxu0 %v2229
    %2676 = vmatpush.msra.mxu0 %v2228
    %2677 = vmatpush.msra.mxu0 %v2227
    %2678 = vmatpush.msra.mxu0 %v2226
    %2679 = vmatmul.f32.gmra.mxu0 %v2658
    %v2680 = vpop.f32.mrf.mxu0
    %v2681 = vadd.f32 %v2655, %v2680
    %2682 = vmatmul.f32.gmra.mxu0 %v2661
    %v2683 = vpop.f32.mrf.mxu0
    %v2684 = vadd.f32 %v2655, %v2683
    %2685 = vdwg.mxu0
    %v2686 = vsel %vm235, %v2681, -inf
    %2687 = vmax.xlane.f32.xlu0 %v2686
    %v2688 = vpop.xlane.xlu0 %2687
    %v2689 = vsel %vm235, %v2684, -inf
    %2690 = vmax.xlane.f32.xlu0 %v2689
    %v2691 = vpop.xlane.xlu0 %2690
    %v2692 = vsub.f32 %v2681, %v2688
    %v2693 = vsub.f32 %v2684, %v2691
    %v2694 = vmul.f32 %v2692, 1.442695
    %v2695 = vpow.pop %v2694
    %v2696 = vmul.f32 %v2693, 1.442695
    %v2697 = vpow.pop %v2696
    %v2698 = vsel %vm235, %v2695, 0.0
    %2699 = vadd.xlane.f32.xlu0 %v2698
    %v2700 = vpop.xlane.xlu0 %2699
    %v2701 = vsel %vm235, %v2697, 0.0
    %2702 = vadd.xlane.f32.xlu0 %v2701
    %v2703 = vpop.xlane.xlu0 %2702
    %v2704 = vrcp.pop %v2700
    %v2705 = vmul.f32 %v2700, %v2704
    %v2706 = vsub.f32 1.0, %v2705
    %v2707 = vmul.f32 %v2704, %v2706
    %v2708 = vadd.f32 %v2704, %v2707
    %vm2709 = vweird.f32 %v2700
    %vm2710 = vweird.f32 %v2704
    %vm2711 = vmor %vm2709, %vm2710
    %v2712 = vsel %vm2711, %v2704, %v2708
    %v2713 = vand.u32 2147483647, %v2700
    %vm2714 = vcmp.eq.f32.partialorder %v2713, 8.507059e+37
    %v2715 = vand.u32 %v2700, 2147483648
    %v2716 = vor.u32 1.1754944e-38, %v2715
    %v2717 = vsel %vm2714, %v2716, %v2712
    %v2718 = vrcp.pop %v2703
    %v2719 = vmul.f32 %v2703, %v2718
    %v2720 = vsub.f32 1.0, %v2719
    %v2721 = vmul.f32 %v2718, %v2720
    %v2722 = vadd.f32 %v2718, %v2721
    %vm2723 = vweird.f32 %v2703
    %vm2724 = vweird.f32 %v2718
    %vm2725 = vmor %vm2723, %vm2724
    %v2726 = vsel %vm2725, %v2718, %v2722
    %v2727 = vand.u32 2147483647, %v2703
    %vm2728 = vcmp.eq.f32.partialorder %v2727, 8.507059e+37
    %v2729 = vand.u32 %v2703, 2147483648
    %v2730 = vor.u32 1.1754944e-38, %v2729
    %v2731 = vsel %vm2728, %v2730, %v2726
    %v2732 = vmul.f32 %v2695, %v2717
    %v2733 = vmul.f32 %v2697, %v2731
    %2734 = vst.msk [vmem:[#allocation7] sm:$0xff] %vm235, %v2732
    %2735 = vst.msk [vmem:[#allocation7 + $0x8] sm:$0xff] %vm235, %v2733
    // Predicated region
    $region62: #{_forward_impl.1} parent=1 // pred_check
      _
    $region63: #{_forward_impl.1} parent=1 // pred_check_branch
      %2737 = sbr.rel (0) target = $region65
    $region64: #{_forward_impl.1} parent=1 // pred_region
      %2739 = vsyncadd [#allocation6], 0
      %s2740 = sshll.u32 [#allocation7], 4
      %s2741 = int_to_ptr.vmem [resolvable:$true] %s2740
      %s2742 = sshll.u32 %s15, 4
      %s2743 = int_to_ptr.hbm [resolvable:$true] %s2742
      %2748 = dma.vmem_to_hbm [thread:$0]  %s2741, 256, %s2743, [#allocation6], 128, 128, 8
    $region65: #{_forward_impl.1} parent=1 // pred_fallthru
      _
    // Predicated region
    $region66: #{_forward_impl.1} parent=1 // pred_check
      _
    $region67: #{_forward_impl.1} parent=1 // pred_check_branch
      %2750 = sbr.rel (0) target = $region69
    $region68: #{_forward_impl.1} parent=1 // pred_region
      %2752 = dma.done [#allocation6], 256
    $region69: #{_forward_impl.1} parent=1 // pred_fallthru
      _
    %2753 = vsyncpa [#allocation5], 1
    %2754 = vsyncpa [#allocation6], 1

</llo_original>
